<compile_context>
chip_gen: v7x
topology: tpu7x:2x2x1
jax: 0.10.0
libtpu: 0.0.40
codegen_flags: <defaults>
</compile_context>

<pallas_src>
import functools

import jax
import jax.numpy as jnp
from jax.experimental import pallas as pl
from jax.experimental.pallas import tpu as pltpu


# ------------------------------ fused kernel ---------------------------------
def _lstm_cell(pre, c_prev, H):
    # PyTorch gate order: i, f, g, o. All gate math in f32 (VPU/EUP).
    i = jax.nn.sigmoid(pre[:, 0 * H:1 * H])
    f = jax.nn.sigmoid(pre[:, 1 * H:2 * H])
    g = jnp.tanh(pre[:, 2 * H:3 * H])
    o = jax.nn.sigmoid(pre[:, 3 * H:4 * H])
    c = f * c_prev + i * g
    h = o * jnp.tanh(c)
    return h, c


def _fused_lstm_classifier_kernel(
    x_ref,            # (B*T, D)  f32, batch-first rows in (b, t) order
    wih1_ref,         # (D, 4H)   bf16
    whh1_ref,         # (H, 4H)   bf16
    b1_ref,           # (1, 4H)   f32  (b_ih + b_hh)
    wih2_ref,         # (H, 4H)   bf16
    whh2_ref,         # (H, 4H)   bf16
    b2_ref,           # (1, 4H)   f32
    fcw_ref,          # (H, CP)   f32  (zero-padded beyond num_classes)
    fcb_ref,          # (1, CP)   f32  (-1e30 beyond num_classes)
    out_ref,          # (B, CP)   f32  softmax probabilities (lane-dense)
    *, B, T, H,
):
    # --- Hoisted layer-1 input projection: one big MXU matmul over all T steps.
    x_bf = x_ref[...].astype(jnp.bfloat16)                               # (B*T, D)
    xp1 = jnp.dot(x_bf, wih1_ref[...],
                  preferred_element_type=jnp.float32) + b1_ref[...]      # (B*T, 4H)
    xp1 = xp1.reshape(B, T, 4 * H)                                       # (b, t) order

    whh1 = whh1_ref[...]
    wih2 = wih2_ref[...]
    whh2 = whh2_ref[...]
    b2 = b2_ref[...]

    h1 = jnp.zeros((B, H), jnp.float32)
    c1 = jnp.zeros((B, H), jnp.float32)
    h2 = jnp.zeros((B, H), jnp.float32)
    c2 = jnp.zeros((B, H), jnp.float32)

    # --- Both LSTM layers in lock-step, fully unrolled over the (small, static)
    # time axis; state lives in registers/VMEM values for the whole recurrence.
    for t in range(T):
        pre1 = xp1[:, t, :] + jnp.dot(h1.astype(jnp.bfloat16), whh1,
                                      preferred_element_type=jnp.float32)
        h1, c1 = _lstm_cell(pre1, c1, H)

        pre2 = (jnp.dot(h1.astype(jnp.bfloat16), wih2,
                        preferred_element_type=jnp.float32)
                + jnp.dot(h2.astype(jnp.bfloat16), whh2,
                          preferred_element_type=jnp.float32)
                + b2)
        h2, c2 = _lstm_cell(pre2, c2, H)

    # --- Fused FC + softmax head on the last hidden state of layer 2.
    logits = jnp.dot(h2, fcw_ref[...],
                     preferred_element_type=jnp.float32) + fcb_ref[...]  # (B, CP)
    m = jnp.max(logits, axis=1, keepdims=True)
    e = jnp.exp(logits - m)                    # padded lanes: exp(-1e30 - m) == 0
    denom = jnp.sum(e, axis=1, keepdims=True)
    out_ref[...] = e * pl.reciprocal(denom, approx=True)   # divide on the EUP


# --------------------------------- wrapper ------------------------------------
@functools.partial(jax.jit, static_argnames=("num_classes",))
def lstm_classifier_forward(params, x_btd, *, num_classes):
    """x_btd: (B, T, D) batch_first input (matches nn.LSTM(batch_first=True))."""
    B, T, D = x_btd.shape
    H = params["whh1"].shape[0]
    CP = params["fc_w_pad"].shape[1]

    # Free, contiguous reshape (no transpose, no extra HBM copy).
    x2d = x_btd.reshape(B * T, D)

    kernel = functools.partial(_fused_lstm_classifier_kernel, B=B, T=T, H=H)
    out_pad = pl.pallas_call(
        kernel,
        out_shape=jax.ShapeDtypeStruct((B, CP), jnp.float32),
        compiler_params=pltpu.CompilerParams(
            vmem_limit_bytes=32 * 1024 * 1024,  # explicit; tiny footprint here
        ),
    )(
        x2d,
        params["wih1"], params["whh1"], params["b1"],
        params["wih2"], params["whh2"], params["b2"],
        params["fc_w_pad"], params["fc_b_pad"],
    )
    return out_pad[:, :num_classes]            # slice padded lanes back to C


# --------------------------------- params -------------------------------------
def init_params(key, input_dim, hidden_dim, num_classes):
    """Mimics nn.LSTM / nn.Linear default init; stores weights pre-transposed.

    Matmul weights are kept in bf16 (f32 accumulation in-kernel); biases, FC
    weights and all state math stay f32. FC weight/bias are lane-padded to a
    multiple of 128 so the head's output store is lane-dense.
    """
    k = 1.0 / jnp.sqrt(hidden_dim)

    def uni(kk, shape):
        return jax.random.uniform(kk, shape, jnp.float32, -k, k)

    ks = jax.random.split(key, 10)
    # layer 1  (gate order i, f, g, o)
    wih1 = uni(ks[0], (4 * hidden_dim, input_dim))
    whh1 = uni(ks[1], (4 * hidden_dim, hidden_dim))
    b1 = uni(ks[2], (4 * hidden_dim,)) + uni(ks[3], (4 * hidden_dim,))
    # layer 2
    wih2 = uni(ks[4], (4 * hidden_dim, hidden_dim))
    whh2 = uni(ks[5], (4 * hidden_dim, hidden_dim))
    b2 = uni(ks[6], (4 * hidden_dim,)) + uni(ks[7], (4 * hidden_dim,))
    # fc head
    fc_w = uni(ks[8], (num_classes, hidden_dim))
    fc_b = uni(ks[9], (num_classes,))

    cp = max(128, ((num_classes + 127) // 128) * 128)
    fc_w_pad = jnp.zeros((hidden_dim, cp), jnp.float32).at[:, :num_classes].set(fc_w.T)
    fc_b_pad = jnp.full((1, cp), -1e30, jnp.float32).at[0, :num_classes].set(fc_b)

    return {
        "wih1": wih1.T.astype(jnp.bfloat16),   # (D, 4H)
        "whh1": whh1.T.astype(jnp.bfloat16),   # (H, 4H)
        "b1": b1.reshape(1, -1),               # (1, 4H) f32
        "wih2": wih2.T.astype(jnp.bfloat16),   # (H, 4H)
        "whh2": whh2.T.astype(jnp.bfloat16),   # (H, 4H)
        "b2": b2.reshape(1, -1),               # (1, 4H) f32
        "fc_w_pad": fc_w_pad,                  # (H, CP) f32
        "fc_b_pad": fc_b_pad,                  # (1, CP) f32
    }


if __name__ == "__main__":
    # Small, tile-aligned shapes consistent with the module's forward semantics:
    # B=8 (full f32 sublane tile), H=128 (each gate slice = one 128-lane slab),
    # D=128, T=8, num_classes=5 (padded to 128 lanes inside the kernel).
    B, T, D, H, C = 8, 8, 128, 128, 5

    key = jax.random.PRNGKey(0)
    key, kx = jax.random.split(key)
    x = jax.random.normal(kx, (B, T, D), dtype=jnp.float32)

    params = init_params(key, D, H, C)

    out = lstm_classifier_forward(params, x, num_classes=C)
    out = jax.block_until_ready(out)

    assert out.shape == (B, C)
    assert bool(jnp.all(jnp.isfinite(out)))
    # Softmax rows sum to ~1 (approx EUP reciprocal -> loose tolerance).
    assert jnp.allclose(jnp.sum(out, axis=1), jnp.ones((B,)), atol=2e-2)
    print("KERNEL_OK")
</pallas_src>

<mosaic_0001>
module attributes {stable_mosaic.version = 11 : i64} {
  func.func @_fused_lstm_classifier_kernel(%arg0: memref<64x128xf32, #tpu.memory_space<vmem>>, %arg1: memref<128x512xbf16, #tpu.memory_space<vmem>>, %arg2: memref<128x512xbf16, #tpu.memory_space<vmem>>, %arg3: memref<1x512xf32, #tpu.memory_space<vmem>>, %arg4: memref<128x512xbf16, #tpu.memory_space<vmem>>, %arg5: memref<128x512xbf16, #tpu.memory_space<vmem>>, %arg6: memref<1x512xf32, #tpu.memory_space<vmem>>, %arg7: memref<128x128xf32, #tpu.memory_space<vmem>>, %arg8: memref<1x128xf32, #tpu.memory_space<vmem>>, %arg9: memref<8x128xf32, #tpu.memory_space<vmem>>) attributes {dimension_semantics = [], scalar_prefetch = 0 : i64, scratch_operands = 0 : i64, tpu.core_type = #tpu.core_type<tc>} {
    %c0 = arith.constant 0 : index
    %c0_0 = arith.constant 0 : index
    %0 = vector.load %arg0[%c0, %c0_0] : memref<64x128xf32, #tpu.memory_space<vmem>>, vector<64x128xf32>
    %1 = arith.truncf %0 : vector<64x128xf32> to vector<64x128xbf16>
    %c0_1 = arith.constant 0 : index
    %c0_2 = arith.constant 0 : index
    %2 = vector.load %arg1[%c0_1, %c0_2] : memref<128x512xbf16, #tpu.memory_space<vmem>>, vector<128x512xbf16>
    %cst = arith.constant dense<0.000000e+00> : vector<64x512xf32>
    %3 = tpu.matmul %1, %2, %cst {dimension_numbers = #tpu.dot_dimension_numbers<[1], [0], [0], [1], [0, 0, 1, 1], [], []>} : vector<64x128xbf16>, vector<128x512xbf16>, vector<64x512xf32> -> vector<64x512xf32>
    %c0_3 = arith.constant 0 : index
    %c0_4 = arith.constant 0 : index
    %4 = vector.load %arg3[%c0_3, %c0_4] : memref<1x512xf32, #tpu.memory_space<vmem>>, vector<1x512xf32>
    %5 = vector.broadcast %4 : vector<1x512xf32> to vector<64x512xf32>
    %6 = arith.addf %3, %5 : vector<64x512xf32>
    %7 = vector.shape_cast %6 : vector<64x512xf32> to vector<8x8x512xf32>
    %c0_5 = arith.constant 0 : index
    %c0_6 = arith.constant 0 : index
    %8 = vector.load %arg2[%c0_5, %c0_6] : memref<128x512xbf16, #tpu.memory_space<vmem>>, vector<128x512xbf16>
    %c0_7 = arith.constant 0 : index
    %c0_8 = arith.constant 0 : index
    %9 = vector.load %arg4[%c0_7, %c0_8] : memref<128x512xbf16, #tpu.memory_space<vmem>>, vector<128x512xbf16>
    %c0_9 = arith.constant 0 : index
    %c0_10 = arith.constant 0 : index
    %10 = vector.load %arg5[%c0_9, %c0_10] : memref<128x512xbf16, #tpu.memory_space<vmem>>, vector<128x512xbf16>
    %c0_11 = arith.constant 0 : index
    %c0_12 = arith.constant 0 : index
    %11 = vector.load %arg6[%c0_11, %c0_12] : memref<1x512xf32, #tpu.memory_space<vmem>>, vector<1x512xf32>
    %cst_13 = arith.constant 0.000000e+00 : f32
    %12 = vector.broadcast %cst_13 : f32 to vector<8x128xf32>
    %cst_14 = arith.constant 0.000000e+00 : f32
    %13 = vector.broadcast %cst_14 : f32 to vector<8x128xf32>
    %cst_15 = arith.constant 0.000000e+00 : f32
    %14 = vector.broadcast %cst_15 : f32 to vector<8x128xf32>
    %cst_16 = arith.constant 0.000000e+00 : f32
    %15 = vector.broadcast %cst_16 : f32 to vector<8x128xf32>
    %16 = vector.extract_strided_slice %7 {offsets = [0, 0, 0], sizes = [8, 1, 512], strides = [1, 1, 1]} : vector<8x8x512xf32> to vector<8x1x512xf32>
    %17 = vector.shape_cast %16 : vector<8x1x512xf32> to vector<8x512xf32>
    %18 = arith.truncf %12 : vector<8x128xf32> to vector<8x128xbf16>
    %cst_17 = arith.constant dense<0.000000e+00> : vector<8x512xf32>
    %19 = tpu.matmul %18, %8, %cst_17 {dimension_numbers = #tpu.dot_dimension_numbers<[1], [0], [0], [1], [0, 0, 1, 1], [], []>} : vector<8x128xbf16>, vector<128x512xbf16>, vector<8x512xf32> -> vector<8x512xf32>
    %20 = arith.addf %17, %19 : vector<8x512xf32>
    %21 = vector.extract_strided_slice %20 {offsets = [0, 0], sizes = [8, 128], strides = [1, 1]} : vector<8x512xf32> to vector<8x128xf32>
    %22 = arith.negf %21 : vector<8x128xf32>
    %23 = math.exp %22 : vector<8x128xf32>
    %cst_18 = arith.constant 1.000000e+00 : f32
    %24 = vector.broadcast %cst_18 : f32 to vector<8x128xf32>
    %25 = arith.addf %24, %23 : vector<8x128xf32>
    %26 = arith.divf %24, %25 : vector<8x128xf32>
    %27 = vector.extract_strided_slice %20 {offsets = [0, 128], sizes = [8, 128], strides = [1, 1]} : vector<8x512xf32> to vector<8x128xf32>
    %28 = arith.negf %27 : vector<8x128xf32>
    %29 = math.exp %28 : vector<8x128xf32>
    %cst_19 = arith.constant 1.000000e+00 : f32
    %30 = vector.broadcast %cst_19 : f32 to vector<8x128xf32>
    %31 = arith.addf %30, %29 : vector<8x128xf32>
    %32 = arith.divf %30, %31 : vector<8x128xf32>
    %33 = vector.extract_strided_slice %20 {offsets = [0, 256], sizes = [8, 128], strides = [1, 1]} : vector<8x512xf32> to vector<8x128xf32>
    %34 = math.tanh %33 : vector<8x128xf32>
    %35 = vector.extract_strided_slice %20 {offsets = [0, 384], sizes = [8, 128], strides = [1, 1]} : vector<8x512xf32> to vector<8x128xf32>
    %36 = arith.negf %35 : vector<8x128xf32>
    %37 = math.exp %36 : vector<8x128xf32>
    %cst_20 = arith.constant 1.000000e+00 : f32
    %38 = vector.broadcast %cst_20 : f32 to vector<8x128xf32>
    %39 = arith.addf %38, %37 : vector<8x128xf32>
    %40 = arith.divf %38, %39 : vector<8x128xf32>
    %41 = arith.mulf %32, %13 : vector<8x128xf32>
    %42 = arith.mulf %26, %34 : vector<8x128xf32>
    %43 = arith.addf %41, %42 : vector<8x128xf32>
    %44 = math.tanh %43 : vector<8x128xf32>
    %45 = arith.mulf %40, %44 : vector<8x128xf32>
    %46 = arith.truncf %45 : vector<8x128xf32> to vector<8x128xbf16>
    %cst_21 = arith.constant dense<0.000000e+00> : vector<8x512xf32>
    %47 = tpu.matmul %46, %9, %cst_21 {dimension_numbers = #tpu.dot_dimension_numbers<[1], [0], [0], [1], [0, 0, 1, 1], [], []>} : vector<8x128xbf16>, vector<128x512xbf16>, vector<8x512xf32> -> vector<8x512xf32>
    %48 = arith.truncf %14 : vector<8x128xf32> to vector<8x128xbf16>
    %cst_22 = arith.constant dense<0.000000e+00> : vector<8x512xf32>
    %49 = tpu.matmul %48, %10, %cst_22 {dimension_numbers = #tpu.dot_dimension_numbers<[1], [0], [0], [1], [0, 0, 1, 1], [], []>} : vector<8x128xbf16>, vector<128x512xbf16>, vector<8x512xf32> -> vector<8x512xf32>
    %50 = arith.addf %47, %49 : vector<8x512xf32>
    %51 = vector.broadcast %11 : vector<1x512xf32> to vector<8x512xf32>
    %52 = arith.addf %50, %51 : vector<8x512xf32>
    %53 = vector.extract_strided_slice %52 {offsets = [0, 0], sizes = [8, 128], strides = [1, 1]} : vector<8x512xf32> to vector<8x128xf32>
    %54 = arith.negf %53 : vector<8x128xf32>
    %55 = math.exp %54 : vector<8x128xf32>
    %cst_23 = arith.constant 1.000000e+00 : f32
    %56 = vector.broadcast %cst_23 : f32 to vector<8x128xf32>
    %57 = arith.addf %56, %55 : vector<8x128xf32>
    %58 = arith.divf %56, %57 : vector<8x128xf32>
    %59 = vector.extract_strided_slice %52 {offsets = [0, 128], sizes = [8, 128], strides = [1, 1]} : vector<8x512xf32> to vector<8x128xf32>
    %60 = arith.negf %59 : vector<8x128xf32>
    %61 = math.exp %60 : vector<8x128xf32>
    %cst_24 = arith.constant 1.000000e+00 : f32
    %62 = vector.broadcast %cst_24 : f32 to vector<8x128xf32>
    %63 = arith.addf %62, %61 : vector<8x128xf32>
    %64 = arith.divf %62, %63 : vector<8x128xf32>
    %65 = vector.extract_strided_slice %52 {offsets = [0, 256], sizes = [8, 128], strides = [1, 1]} : vector<8x512xf32> to vector<8x128xf32>
    %66 = math.tanh %65 : vector<8x128xf32>
    %67 = vector.extract_strided_slice %52 {offsets = [0, 384], sizes = [8, 128], strides = [1, 1]} : vector<8x512xf32> to vector<8x128xf32>
    %68 = arith.negf %67 : vector<8x128xf32>
    %69 = math.exp %68 : vector<8x128xf32>
    %cst_25 = arith.constant 1.000000e+00 : f32
    %70 = vector.broadcast %cst_25 : f32 to vector<8x128xf32>
    %71 = arith.addf %70, %69 : vector<8x128xf32>
    %72 = arith.divf %70, %71 : vector<8x128xf32>
    %73 = arith.mulf %64, %15 : vector<8x128xf32>
    %74 = arith.mulf %58, %66 : vector<8x128xf32>
    %75 = arith.addf %73, %74 : vector<8x128xf32>
    %76 = math.tanh %75 : vector<8x128xf32>
    %77 = arith.mulf %72, %76 : vector<8x128xf32>
    %78 = vector.extract_strided_slice %7 {offsets = [0, 1, 0], sizes = [8, 1, 512], strides = [1, 1, 1]} : vector<8x8x512xf32> to vector<8x1x512xf32>
    %79 = vector.shape_cast %78 : vector<8x1x512xf32> to vector<8x512xf32>
    %80 = arith.truncf %45 : vector<8x128xf32> to vector<8x128xbf16>
    %cst_26 = arith.constant dense<0.000000e+00> : vector<8x512xf32>
    %81 = tpu.matmul %80, %8, %cst_26 {dimension_numbers = #tpu.dot_dimension_numbers<[1], [0], [0], [1], [0, 0, 1, 1], [], []>} : vector<8x128xbf16>, vector<128x512xbf16>, vector<8x512xf32> -> vector<8x512xf32>
    %82 = arith.addf %79, %81 : vector<8x512xf32>
    %83 = vector.extract_strided_slice %82 {offsets = [0, 0], sizes = [8, 128], strides = [1, 1]} : vector<8x512xf32> to vector<8x128xf32>
    %84 = arith.negf %83 : vector<8x128xf32>
    %85 = math.exp %84 : vector<8x128xf32>
    %cst_27 = arith.constant 1.000000e+00 : f32
    %86 = vector.broadcast %cst_27 : f32 to vector<8x128xf32>
    %87 = arith.addf %86, %85 : vector<8x128xf32>
    %88 = arith.divf %86, %87 : vector<8x128xf32>
    %89 = vector.extract_strided_slice %82 {offsets = [0, 128], sizes = [8, 128], strides = [1, 1]} : vector<8x512xf32> to vector<8x128xf32>
    %90 = arith.negf %89 : vector<8x128xf32>
    %91 = math.exp %90 : vector<8x128xf32>
    %cst_28 = arith.constant 1.000000e+00 : f32
    %92 = vector.broadcast %cst_28 : f32 to vector<8x128xf32>
    %93 = arith.addf %92, %91 : vector<8x128xf32>
    %94 = arith.divf %92, %93 : vector<8x128xf32>
    %95 = vector.extract_strided_slice %82 {offsets = [0, 256], sizes = [8, 128], strides = [1, 1]} : vector<8x512xf32> to vector<8x128xf32>
    %96 = math.tanh %95 : vector<8x128xf32>
    %97 = vector.extract_strided_slice %82 {offsets = [0, 384], sizes = [8, 128], strides = [1, 1]} : vector<8x512xf32> to vector<8x128xf32>
    %98 = arith.negf %97 : vector<8x128xf32>
    %99 = math.exp %98 : vector<8x128xf32>
    %cst_29 = arith.constant 1.000000e+00 : f32
    %100 = vector.broadcast %cst_29 : f32 to vector<8x128xf32>
    %101 = arith.addf %100, %99 : vector<8x128xf32>
    %102 = arith.divf %100, %101 : vector<8x128xf32>
    %103 = arith.mulf %94, %43 : vector<8x128xf32>
    %104 = arith.mulf %88, %96 : vector<8x128xf32>
    %105 = arith.addf %103, %104 : vector<8x128xf32>
    %106 = math.tanh %105 : vector<8x128xf32>
    %107 = arith.mulf %102, %106 : vector<8x128xf32>
    %108 = arith.truncf %107 : vector<8x128xf32> to vector<8x128xbf16>
    %cst_30 = arith.constant dense<0.000000e+00> : vector<8x512xf32>
    %109 = tpu.matmul %108, %9, %cst_30 {dimension_numbers = #tpu.dot_dimension_numbers<[1], [0], [0], [1], [0, 0, 1, 1], [], []>} : vector<8x128xbf16>, vector<128x512xbf16>, vector<8x512xf32> -> vector<8x512xf32>
    %110 = arith.truncf %77 : vector<8x128xf32> to vector<8x128xbf16>
    %cst_31 = arith.constant dense<0.000000e+00> : vector<8x512xf32>
    %111 = tpu.matmul %110, %10, %cst_31 {dimension_numbers = #tpu.dot_dimension_numbers<[1], [0], [0], [1], [0, 0, 1, 1], [], []>} : vector<8x128xbf16>, vector<128x512xbf16>, vector<8x512xf32> -> vector<8x512xf32>
    %112 = arith.addf %109, %111 : vector<8x512xf32>
    %113 = vector.broadcast %11 : vector<1x512xf32> to vector<8x512xf32>
    %114 = arith.addf %112, %113 : vector<8x512xf32>
    %115 = vector.extract_strided_slice %114 {offsets = [0, 0], sizes = [8, 128], strides = [1, 1]} : vector<8x512xf32> to vector<8x128xf32>
    %116 = arith.negf %115 : vector<8x128xf32>
    %117 = math.exp %116 : vector<8x128xf32>
    %cst_32 = arith.constant 1.000000e+00 : f32
    %118 = vector.broadcast %cst_32 : f32 to vector<8x128xf32>
    %119 = arith.addf %118, %117 : vector<8x128xf32>
    %120 = arith.divf %118, %119 : vector<8x128xf32>
    %121 = vector.extract_strided_slice %114 {offsets = [0, 128], sizes = [8, 128], strides = [1, 1]} : vector<8x512xf32> to vector<8x128xf32>
    %122 = arith.negf %121 : vector<8x128xf32>
    %123 = math.exp %122 : vector<8x128xf32>
    %cst_33 = arith.constant 1.000000e+00 : f32
    %124 = vector.broadcast %cst_33 : f32 to vector<8x128xf32>
    %125 = arith.addf %124, %123 : vector<8x128xf32>
    %126 = arith.divf %124, %125 : vector<8x128xf32>
    %127 = vector.extract_strided_slice %114 {offsets = [0, 256], sizes = [8, 128], strides = [1, 1]} : vector<8x512xf32> to vector<8x128xf32>
    %128 = math.tanh %127 : vector<8x128xf32>
    %129 = vector.extract_strided_slice %114 {offsets = [0, 384], sizes = [8, 128], strides = [1, 1]} : vector<8x512xf32> to vector<8x128xf32>
    %130 = arith.negf %129 : vector<8x128xf32>
    %131 = math.exp %130 : vector<8x128xf32>
    %cst_34 = arith.constant 1.000000e+00 : f32
    %132 = vector.broadcast %cst_34 : f32 to vector<8x128xf32>
    %133 = arith.addf %132, %131 : vector<8x128xf32>
    %134 = arith.divf %132, %133 : vector<8x128xf32>
    %135 = arith.mulf %126, %75 : vector<8x128xf32>
    %136 = arith.mulf %120, %128 : vector<8x128xf32>
    %137 = arith.addf %135, %136 : vector<8x128xf32>
    %138 = math.tanh %137 : vector<8x128xf32>
    %139 = arith.mulf %134, %138 : vector<8x128xf32>
    %140 = vector.extract_strided_slice %7 {offsets = [0, 2, 0], sizes = [8, 1, 512], strides = [1, 1, 1]} : vector<8x8x512xf32> to vector<8x1x512xf32>
    %141 = vector.shape_cast %140 : vector<8x1x512xf32> to vector<8x512xf32>
    %142 = arith.truncf %107 : vector<8x128xf32> to vector<8x128xbf16>
    %cst_35 = arith.constant dense<0.000000e+00> : vector<8x512xf32>
    %143 = tpu.matmul %142, %8, %cst_35 {dimension_numbers = #tpu.dot_dimension_numbers<[1], [0], [0], [1], [0, 0, 1, 1], [], []>} : vector<8x128xbf16>, vector<128x512xbf16>, vector<8x512xf32> -> vector<8x512xf32>
    %144 = arith.addf %141, %143 : vector<8x512xf32>
    %145 = vector.extract_strided_slice %144 {offsets = [0, 0], sizes = [8, 128], strides = [1, 1]} : vector<8x512xf32> to vector<8x128xf32>
    %146 = arith.negf %145 : vector<8x128xf32>
    %147 = math.exp %146 : vector<8x128xf32>
    %cst_36 = arith.constant 1.000000e+00 : f32
    %148 = vector.broadcast %cst_36 : f32 to vector<8x128xf32>
    %149 = arith.addf %148, %147 : vector<8x128xf32>
    %150 = arith.divf %148, %149 : vector<8x128xf32>
    %151 = vector.extract_strided_slice %144 {offsets = [0, 128], sizes = [8, 128], strides = [1, 1]} : vector<8x512xf32> to vector<8x128xf32>
    %152 = arith.negf %151 : vector<8x128xf32>
    %153 = math.exp %152 : vector<8x128xf32>
    %cst_37 = arith.constant 1.000000e+00 : f32
    %154 = vector.broadcast %cst_37 : f32 to vector<8x128xf32>
    %155 = arith.addf %154, %153 : vector<8x128xf32>
    %156 = arith.divf %154, %155 : vector<8x128xf32>
    %157 = vector.extract_strided_slice %144 {offsets = [0, 256], sizes = [8, 128], strides = [1, 1]} : vector<8x512xf32> to vector<8x128xf32>
    %158 = math.tanh %157 : vector<8x128xf32>
    %159 = vector.extract_strided_slice %144 {offsets = [0, 384], sizes = [8, 128], strides = [1, 1]} : vector<8x512xf32> to vector<8x128xf32>
    %160 = arith.negf %159 : vector<8x128xf32>
    %161 = math.exp %160 : vector<8x128xf32>
    %cst_38 = arith.constant 1.000000e+00 : f32
    %162 = vector.broadcast %cst_38 : f32 to vector<8x128xf32>
    %163 = arith.addf %162, %161 : vector<8x128xf32>
    %164 = arith.divf %162, %163 : vector<8x128xf32>
    %165 = arith.mulf %156, %105 : vector<8x128xf32>
    %166 = arith.mulf %150, %158 : vector<8x128xf32>
    %167 = arith.addf %165, %166 : vector<8x128xf32>
    %168 = math.tanh %167 : vector<8x128xf32>
    %169 = arith.mulf %164, %168 : vector<8x128xf32>
    %170 = arith.truncf %169 : vector<8x128xf32> to vector<8x128xbf16>
    %cst_39 = arith.constant dense<0.000000e+00> : vector<8x512xf32>
    %171 = tpu.matmul %170, %9, %cst_39 {dimension_numbers = #tpu.dot_dimension_numbers<[1], [0], [0], [1], [0, 0, 1, 1], [], []>} : vector<8x128xbf16>, vector<128x512xbf16>, vector<8x512xf32> -> vector<8x512xf32>
    %172 = arith.truncf %139 : vector<8x128xf32> to vector<8x128xbf16>
    %cst_40 = arith.constant dense<0.000000e+00> : vector<8x512xf32>
    %173 = tpu.matmul %172, %10, %cst_40 {dimension_numbers = #tpu.dot_dimension_numbers<[1], [0], [0], [1], [0, 0, 1, 1], [], []>} : vector<8x128xbf16>, vector<128x512xbf16>, vector<8x512xf32> -> vector<8x512xf32>
    %174 = arith.addf %171, %173 : vector<8x512xf32>
    %175 = vector.broadcast %11 : vector<1x512xf32> to vector<8x512xf32>
    %176 = arith.addf %174, %175 : vector<8x512xf32>
    %177 = vector.extract_strided_slice %176 {offsets = [0, 0], sizes = [8, 128], strides = [1, 1]} : vector<8x512xf32> to vector<8x128xf32>
    %178 = arith.negf %177 : vector<8x128xf32>
    %179 = math.exp %178 : vector<8x128xf32>
    %cst_41 = arith.constant 1.000000e+00 : f32
    %180 = vector.broadcast %cst_41 : f32 to vector<8x128xf32>
    %181 = arith.addf %180, %179 : vector<8x128xf32>
    %182 = arith.divf %180, %181 : vector<8x128xf32>
    %183 = vector.extract_strided_slice %176 {offsets = [0, 128], sizes = [8, 128], strides = [1, 1]} : vector<8x512xf32> to vector<8x128xf32>
    %184 = arith.negf %183 : vector<8x128xf32>
    %185 = math.exp %184 : vector<8x128xf32>
    %cst_42 = arith.constant 1.000000e+00 : f32
    %186 = vector.broadcast %cst_42 : f32 to vector<8x128xf32>
    %187 = arith.addf %186, %185 : vector<8x128xf32>
    %188 = arith.divf %186, %187 : vector<8x128xf32>
    %189 = vector.extract_strided_slice %176 {offsets = [0, 256], sizes = [8, 128], strides = [1, 1]} : vector<8x512xf32> to vector<8x128xf32>
    %190 = math.tanh %189 : vector<8x128xf32>
    %191 = vector.extract_strided_slice %176 {offsets = [0, 384], sizes = [8, 128], strides = [1, 1]} : vector<8x512xf32> to vector<8x128xf32>
    %192 = arith.negf %191 : vector<8x128xf32>
    %193 = math.exp %192 : vector<8x128xf32>
    %cst_43 = arith.constant 1.000000e+00 : f32
    %194 = vector.broadcast %cst_43 : f32 to vector<8x128xf32>
    %195 = arith.addf %194, %193 : vector<8x128xf32>
    %196 = arith.divf %194, %195 : vector<8x128xf32>
    %197 = arith.mulf %188, %137 : vector<8x128xf32>
    %198 = arith.mulf %182, %190 : vector<8x128xf32>
    %199 = arith.addf %197, %198 : vector<8x128xf32>
    %200 = math.tanh %199 : vector<8x128xf32>
    %201 = arith.mulf %196, %200 : vector<8x128xf32>
    %202 = vector.extract_strided_slice %7 {offsets = [0, 3, 0], sizes = [8, 1, 512], strides = [1, 1, 1]} : vector<8x8x512xf32> to vector<8x1x512xf32>
    %203 = vector.shape_cast %202 : vector<8x1x512xf32> to vector<8x512xf32>
    %204 = arith.truncf %169 : vector<8x128xf32> to vector<8x128xbf16>
    %cst_44 = arith.constant dense<0.000000e+00> : vector<8x512xf32>
    %205 = tpu.matmul %204, %8, %cst_44 {dimension_numbers = #tpu.dot_dimension_numbers<[1], [0], [0], [1], [0, 0, 1, 1], [], []>} : vector<8x128xbf16>, vector<128x512xbf16>, vector<8x512xf32> -> vector<8x512xf32>
    %206 = arith.addf %203, %205 : vector<8x512xf32>
    %207 = vector.extract_strided_slice %206 {offsets = [0, 0], sizes = [8, 128], strides = [1, 1]} : vector<8x512xf32> to vector<8x128xf32>
    %208 = arith.negf %207 : vector<8x128xf32>
    %209 = math.exp %208 : vector<8x128xf32>
    %cst_45 = arith.constant 1.000000e+00 : f32
    %210 = vector.broadcast %cst_45 : f32 to vector<8x128xf32>
    %211 = arith.addf %210, %209 : vector<8x128xf32>
    %212 = arith.divf %210, %211 : vector<8x128xf32>
    %213 = vector.extract_strided_slice %206 {offsets = [0, 128], sizes = [8, 128], strides = [1, 1]} : vector<8x512xf32> to vector<8x128xf32>
    %214 = arith.negf %213 : vector<8x128xf32>
    %215 = math.exp %214 : vector<8x128xf32>
    %cst_46 = arith.constant 1.000000e+00 : f32
    %216 = vector.broadcast %cst_46 : f32 to vector<8x128xf32>
    %217 = arith.addf %216, %215 : vector<8x128xf32>
    %218 = arith.divf %216, %217 : vector<8x128xf32>
    %219 = vector.extract_strided_slice %206 {offsets = [0, 256], sizes = [8, 128], strides = [1, 1]} : vector<8x512xf32> to vector<8x128xf32>
    %220 = math.tanh %219 : vector<8x128xf32>
    %221 = vector.extract_strided_slice %206 {offsets = [0, 384], sizes = [8, 128], strides = [1, 1]} : vector<8x512xf32> to vector<8x128xf32>
    %222 = arith.negf %221 : vector<8x128xf32>
    %223 = math.exp %222 : vector<8x128xf32>
    %cst_47 = arith.constant 1.000000e+00 : f32
    %224 = vector.broadcast %cst_47 : f32 to vector<8x128xf32>
    %225 = arith.addf %224, %223 : vector<8x128xf32>
    %226 = arith.divf %224, %225 : vector<8x128xf32>
    %227 = arith.mulf %218, %167 : vector<8x128xf32>
    %228 = arith.mulf %212, %220 : vector<8x128xf32>
    %229 = arith.addf %227, %228 : vector<8x128xf32>
    %230 = math.tanh %229 : vector<8x128xf32>
    %231 = arith.mulf %226, %230 : vector<8x128xf32>
    %232 = arith.truncf %231 : vector<8x128xf32> to vector<8x128xbf16>
    %cst_48 = arith.constant dense<0.000000e+00> : vector<8x512xf32>
    %233 = tpu.matmul %232, %9, %cst_48 {dimension_numbers = #tpu.dot_dimension_numbers<[1], [0], [0], [1], [0, 0, 1, 1], [], []>} : vector<8x128xbf16>, vector<128x512xbf16>, vector<8x512xf32> -> vector<8x512xf32>
    %234 = arith.truncf %201 : vector<8x128xf32> to vector<8x128xbf16>
    %cst_49 = arith.constant dense<0.000000e+00> : vector<8x512xf32>
    %235 = tpu.matmul %234, %10, %cst_49 {dimension_numbers = #tpu.dot_dimension_numbers<[1], [0], [0], [1], [0, 0, 1, 1], [], []>} : vector<8x128xbf16>, vector<128x512xbf16>, vector<8x512xf32> -> vector<8x512xf32>
    %236 = arith.addf %233, %235 : vector<8x512xf32>
    %237 = vector.broadcast %11 : vector<1x512xf32> to vector<8x512xf32>
    %238 = arith.addf %236, %237 : vector<8x512xf32>
    %239 = vector.extract_strided_slice %238 {offsets = [0, 0], sizes = [8, 128], strides = [1, 1]} : vector<8x512xf32> to vector<8x128xf32>
    %240 = arith.negf %239 : vector<8x128xf32>
    %241 = math.exp %240 : vector<8x128xf32>
    %cst_50 = arith.constant 1.000000e+00 : f32
    %242 = vector.broadcast %cst_50 : f32 to vector<8x128xf32>
    %243 = arith.addf %242, %241 : vector<8x128xf32>
    %244 = arith.divf %242, %243 : vector<8x128xf32>
    %245 = vector.extract_strided_slice %238 {offsets = [0, 128], sizes = [8, 128], strides = [1, 1]} : vector<8x512xf32> to vector<8x128xf32>
    %246 = arith.negf %245 : vector<8x128xf32>
    %247 = math.exp %246 : vector<8x128xf32>
    %cst_51 = arith.constant 1.000000e+00 : f32
    %248 = vector.broadcast %cst_51 : f32 to vector<8x128xf32>
    %249 = arith.addf %248, %247 : vector<8x128xf32>
    %250 = arith.divf %248, %249 : vector<8x128xf32>
    %251 = vector.extract_strided_slice %238 {offsets = [0, 256], sizes = [8, 128], strides = [1, 1]} : vector<8x512xf32> to vector<8x128xf32>
    %252 = math.tanh %251 : vector<8x128xf32>
    %253 = vector.extract_strided_slice %238 {offsets = [0, 384], sizes = [8, 128], strides = [1, 1]} : vector<8x512xf32> to vector<8x128xf32>
    %254 = arith.negf %253 : vector<8x128xf32>
    %255 = math.exp %254 : vector<8x128xf32>
    %cst_52 = arith.constant 1.000000e+00 : f32
    %256 = vector.broadcast %cst_52 : f32 to vector<8x128xf32>
    %257 = arith.addf %256, %255 : vector<8x128xf32>
    %258 = arith.divf %256, %257 : vector<8x128xf32>
    %259 = arith.mulf %250, %199 : vector<8x128xf32>
    %260 = arith.mulf %244, %252 : vector<8x128xf32>
    %261 = arith.addf %259, %260 : vector<8x128xf32>
    %262 = math.tanh %261 : vector<8x128xf32>
    %263 = arith.mulf %258, %262 : vector<8x128xf32>
    %264 = vector.extract_strided_slice %7 {offsets = [0, 4, 0], sizes = [8, 1, 512], strides = [1, 1, 1]} : vector<8x8x512xf32> to vector<8x1x512xf32>
    %265 = vector.shape_cast %264 : vector<8x1x512xf32> to vector<8x512xf32>
    %266 = arith.truncf %231 : vector<8x128xf32> to vector<8x128xbf16>
    %cst_53 = arith.constant dense<0.000000e+00> : vector<8x512xf32>
    %267 = tpu.matmul %266, %8, %cst_53 {dimension_numbers = #tpu.dot_dimension_numbers<[1], [0], [0], [1], [0, 0, 1, 1], [], []>} : vector<8x128xbf16>, vector<128x512xbf16>, vector<8x512xf32> -> vector<8x512xf32>
    %268 = arith.addf %265, %267 : vector<8x512xf32>
    %269 = vector.extract_strided_slice %268 {offsets = [0, 0], sizes = [8, 128], strides = [1, 1]} : vector<8x512xf32> to vector<8x128xf32>
    %270 = arith.negf %269 : vector<8x128xf32>
    %271 = math.exp %270 : vector<8x128xf32>
    %cst_54 = arith.constant 1.000000e+00 : f32
    %272 = vector.broadcast %cst_54 : f32 to vector<8x128xf32>
    %273 = arith.addf %272, %271 : vector<8x128xf32>
    %274 = arith.divf %272, %273 : vector<8x128xf32>
    %275 = vector.extract_strided_slice %268 {offsets = [0, 128], sizes = [8, 128], strides = [1, 1]} : vector<8x512xf32> to vector<8x128xf32>
    %276 = arith.negf %275 : vector<8x128xf32>
    %277 = math.exp %276 : vector<8x128xf32>
    %cst_55 = arith.constant 1.000000e+00 : f32
    %278 = vector.broadcast %cst_55 : f32 to vector<8x128xf32>
    %279 = arith.addf %278, %277 : vector<8x128xf32>
    %280 = arith.divf %278, %279 : vector<8x128xf32>
    %281 = vector.extract_strided_slice %268 {offsets = [0, 256], sizes = [8, 128], strides = [1, 1]} : vector<8x512xf32> to vector<8x128xf32>
    %282 = math.tanh %281 : vector<8x128xf32>
    %283 = vector.extract_strided_slice %268 {offsets = [0, 384], sizes = [8, 128], strides = [1, 1]} : vector<8x512xf32> to vector<8x128xf32>
    %284 = arith.negf %283 : vector<8x128xf32>
    %285 = math.exp %284 : vector<8x128xf32>
    %cst_56 = arith.constant 1.000000e+00 : f32
    %286 = vector.broadcast %cst_56 : f32 to vector<8x128xf32>
    %287 = arith.addf %286, %285 : vector<8x128xf32>
    %288 = arith.divf %286, %287 : vector<8x128xf32>
    %289 = arith.mulf %280, %229 : vector<8x128xf32>
    %290 = arith.mulf %274, %282 : vector<8x128xf32>
    %291 = arith.addf %289, %290 : vector<8x128xf32>
    %292 = math.tanh %291 : vector<8x128xf32>
    %293 = arith.mulf %288, %292 : vector<8x128xf32>
    %294 = arith.truncf %293 : vector<8x128xf32> to vector<8x128xbf16>
    %cst_57 = arith.constant dense<0.000000e+00> : vector<8x512xf32>
    %295 = tpu.matmul %294, %9, %cst_57 {dimension_numbers = #tpu.dot_dimension_numbers<[1], [0], [0], [1], [0, 0, 1, 1], [], []>} : vector<8x128xbf16>, vector<128x512xbf16>, vector<8x512xf32> -> vector<8x512xf32>
    %296 = arith.truncf %263 : vector<8x128xf32> to vector<8x128xbf16>
    %cst_58 = arith.constant dense<0.000000e+00> : vector<8x512xf32>
    %297 = tpu.matmul %296, %10, %cst_58 {dimension_numbers = #tpu.dot_dimension_numbers<[1], [0], [0], [1], [0, 0, 1, 1], [], []>} : vector<8x128xbf16>, vector<128x512xbf16>, vector<8x512xf32> -> vector<8x512xf32>
    %298 = arith.addf %295, %297 : vector<8x512xf32>
    %299 = vector.broadcast %11 : vector<1x512xf32> to vector<8x512xf32>
    %300 = arith.addf %298, %299 : vector<8x512xf32>
    %301 = vector.extract_strided_slice %300 {offsets = [0, 0], sizes = [8, 128], strides = [1, 1]} : vector<8x512xf32> to vector<8x128xf32>
    %302 = arith.negf %301 : vector<8x128xf32>
    %303 = math.exp %302 : vector<8x128xf32>
    %cst_59 = arith.constant 1.000000e+00 : f32
    %304 = vector.broadcast %cst_59 : f32 to vector<8x128xf32>
    %305 = arith.addf %304, %303 : vector<8x128xf32>
    %306 = arith.divf %304, %305 : vector<8x128xf32>
    %307 = vector.extract_strided_slice %300 {offsets = [0, 128], sizes = [8, 128], strides = [1, 1]} : vector<8x512xf32> to vector<8x128xf32>
    %308 = arith.negf %307 : vector<8x128xf32>
    %309 = math.exp %308 : vector<8x128xf32>
    %cst_60 = arith.constant 1.000000e+00 : f32
    %310 = vector.broadcast %cst_60 : f32 to vector<8x128xf32>
    %311 = arith.addf %310, %309 : vector<8x128xf32>
    %312 = arith.divf %310, %311 : vector<8x128xf32>
    %313 = vector.extract_strided_slice %300 {offsets = [0, 256], sizes = [8, 128], strides = [1, 1]} : vector<8x512xf32> to vector<8x128xf32>
    %314 = math.tanh %313 : vector<8x128xf32>
    %315 = vector.extract_strided_slice %300 {offsets = [0, 384], sizes = [8, 128], strides = [1, 1]} : vector<8x512xf32> to vector<8x128xf32>
    %316 = arith.negf %315 : vector<8x128xf32>
    %317 = math.exp %316 : vector<8x128xf32>
    %cst_61 = arith.constant 1.000000e+00 : f32
    %318 = vector.broadcast %cst_61 : f32 to vector<8x128xf32>
    %319 = arith.addf %318, %317 : vector<8x128xf32>
    %320 = arith.divf %318, %319 : vector<8x128xf32>
    %321 = arith.mulf %312, %261 : vector<8x128xf32>
    %322 = arith.mulf %306, %314 : vector<8x128xf32>
    %323 = arith.addf %321, %322 : vector<8x128xf32>
    %324 = math.tanh %323 : vector<8x128xf32>
    %325 = arith.mulf %320, %324 : vector<8x128xf32>
    %326 = vector.extract_strided_slice %7 {offsets = [0, 5, 0], sizes = [8, 1, 512], strides = [1, 1, 1]} : vector<8x8x512xf32> to vector<8x1x512xf32>
    %327 = vector.shape_cast %326 : vector<8x1x512xf32> to vector<8x512xf32>
    %328 = arith.truncf %293 : vector<8x128xf32> to vector<8x128xbf16>
    %cst_62 = arith.constant dense<0.000000e+00> : vector<8x512xf32>
    %329 = tpu.matmul %328, %8, %cst_62 {dimension_numbers = #tpu.dot_dimension_numbers<[1], [0], [0], [1], [0, 0, 1, 1], [], []>} : vector<8x128xbf16>, vector<128x512xbf16>, vector<8x512xf32> -> vector<8x512xf32>
    %330 = arith.addf %327, %329 : vector<8x512xf32>
    %331 = vector.extract_strided_slice %330 {offsets = [0, 0], sizes = [8, 128], strides = [1, 1]} : vector<8x512xf32> to vector<8x128xf32>
    %332 = arith.negf %331 : vector<8x128xf32>
    %333 = math.exp %332 : vector<8x128xf32>
    %cst_63 = arith.constant 1.000000e+00 : f32
    %334 = vector.broadcast %cst_63 : f32 to vector<8x128xf32>
    %335 = arith.addf %334, %333 : vector<8x128xf32>
    %336 = arith.divf %334, %335 : vector<8x128xf32>
    %337 = vector.extract_strided_slice %330 {offsets = [0, 128], sizes = [8, 128], strides = [1, 1]} : vector<8x512xf32> to vector<8x128xf32>
    %338 = arith.negf %337 : vector<8x128xf32>
    %339 = math.exp %338 : vector<8x128xf32>
    %cst_64 = arith.constant 1.000000e+00 : f32
    %340 = vector.broadcast %cst_64 : f32 to vector<8x128xf32>
    %341 = arith.addf %340, %339 : vector<8x128xf32>
    %342 = arith.divf %340, %341 : vector<8x128xf32>
    %343 = vector.extract_strided_slice %330 {offsets = [0, 256], sizes = [8, 128], strides = [1, 1]} : vector<8x512xf32> to vector<8x128xf32>
    %344 = math.tanh %343 : vector<8x128xf32>
    %345 = vector.extract_strided_slice %330 {offsets = [0, 384], sizes = [8, 128], strides = [1, 1]} : vector<8x512xf32> to vector<8x128xf32>
    %346 = arith.negf %345 : vector<8x128xf32>
    %347 = math.exp %346 : vector<8x128xf32>
    %cst_65 = arith.constant 1.000000e+00 : f32
    %348 = vector.broadcast %cst_65 : f32 to vector<8x128xf32>
    %349 = arith.addf %348, %347 : vector<8x128xf32>
    %350 = arith.divf %348, %349 : vector<8x128xf32>
    %351 = arith.mulf %342, %291 : vector<8x128xf32>
    %352 = arith.mulf %336, %344 : vector<8x128xf32>
    %353 = arith.addf %351, %352 : vector<8x128xf32>
    %354 = math.tanh %353 : vector<8x128xf32>
    %355 = arith.mulf %350, %354 : vector<8x128xf32>
    %356 = arith.truncf %355 : vector<8x128xf32> to vector<8x128xbf16>
    %cst_66 = arith.constant dense<0.000000e+00> : vector<8x512xf32>
    %357 = tpu.matmul %356, %9, %cst_66 {dimension_numbers = #tpu.dot_dimension_numbers<[1], [0], [0], [1], [0, 0, 1, 1], [], []>} : vector<8x128xbf16>, vector<128x512xbf16>, vector<8x512xf32> -> vector<8x512xf32>
    %358 = arith.truncf %325 : vector<8x128xf32> to vector<8x128xbf16>
    %cst_67 = arith.constant dense<0.000000e+00> : vector<8x512xf32>
    %359 = tpu.matmul %358, %10, %cst_67 {dimension_numbers = #tpu.dot_dimension_numbers<[1], [0], [0], [1], [0, 0, 1, 1], [], []>} : vector<8x128xbf16>, vector<128x512xbf16>, vector<8x512xf32> -> vector<8x512xf32>
    %360 = arith.addf %357, %359 : vector<8x512xf32>
    %361 = vector.broadcast %11 : vector<1x512xf32> to vector<8x512xf32>
    %362 = arith.addf %360, %361 : vector<8x512xf32>
    %363 = vector.extract_strided_slice %362 {offsets = [0, 0], sizes = [8, 128], strides = [1, 1]} : vector<8x512xf32> to vector<8x128xf32>
    %364 = arith.negf %363 : vector<8x128xf32>
    %365 = math.exp %364 : vector<8x128xf32>
    %cst_68 = arith.constant 1.000000e+00 : f32
    %366 = vector.broadcast %cst_68 : f32 to vector<8x128xf32>
    %367 = arith.addf %366, %365 : vector<8x128xf32>
    %368 = arith.divf %366, %367 : vector<8x128xf32>
    %369 = vector.extract_strided_slice %362 {offsets = [0, 128], sizes = [8, 128], strides = [1, 1]} : vector<8x512xf32> to vector<8x128xf32>
    %370 = arith.negf %369 : vector<8x128xf32>
    %371 = math.exp %370 : vector<8x128xf32>
    %cst_69 = arith.constant 1.000000e+00 : f32
    %372 = vector.broadcast %cst_69 : f32 to vector<8x128xf32>
    %373 = arith.addf %372, %371 : vector<8x128xf32>
    %374 = arith.divf %372, %373 : vector<8x128xf32>
    %375 = vector.extract_strided_slice %362 {offsets = [0, 256], sizes = [8, 128], strides = [1, 1]} : vector<8x512xf32> to vector<8x128xf32>
    %376 = math.tanh %375 : vector<8x128xf32>
    %377 = vector.extract_strided_slice %362 {offsets = [0, 384], sizes = [8, 128], strides = [1, 1]} : vector<8x512xf32> to vector<8x128xf32>
    %378 = arith.negf %377 : vector<8x128xf32>
    %379 = math.exp %378 : vector<8x128xf32>
    %cst_70 = arith.constant 1.000000e+00 : f32
    %380 = vector.broadcast %cst_70 : f32 to vector<8x128xf32>
    %381 = arith.addf %380, %379 : vector<8x128xf32>
    %382 = arith.divf %380, %381 : vector<8x128xf32>
    %383 = arith.mulf %374, %323 : vector<8x128xf32>
    %384 = arith.mulf %368, %376 : vector<8x128xf32>
    %385 = arith.addf %383, %384 : vector<8x128xf32>
    %386 = math.tanh %385 : vector<8x128xf32>
    %387 = arith.mulf %382, %386 : vector<8x128xf32>
    %388 = vector.extract_strided_slice %7 {offsets = [0, 6, 0], sizes = [8, 1, 512], strides = [1, 1, 1]} : vector<8x8x512xf32> to vector<8x1x512xf32>
    %389 = vector.shape_cast %388 : vector<8x1x512xf32> to vector<8x512xf32>
    %390 = arith.truncf %355 : vector<8x128xf32> to vector<8x128xbf16>
    %cst_71 = arith.constant dense<0.000000e+00> : vector<8x512xf32>
    %391 = tpu.matmul %390, %8, %cst_71 {dimension_numbers = #tpu.dot_dimension_numbers<[1], [0], [0], [1], [0, 0, 1, 1], [], []>} : vector<8x128xbf16>, vector<128x512xbf16>, vector<8x512xf32> -> vector<8x512xf32>
    %392 = arith.addf %389, %391 : vector<8x512xf32>
    %393 = vector.extract_strided_slice %392 {offsets = [0, 0], sizes = [8, 128], strides = [1, 1]} : vector<8x512xf32> to vector<8x128xf32>
    %394 = arith.negf %393 : vector<8x128xf32>
    %395 = math.exp %394 : vector<8x128xf32>
    %cst_72 = arith.constant 1.000000e+00 : f32
    %396 = vector.broadcast %cst_72 : f32 to vector<8x128xf32>
    %397 = arith.addf %396, %395 : vector<8x128xf32>
    %398 = arith.divf %396, %397 : vector<8x128xf32>
    %399 = vector.extract_strided_slice %392 {offsets = [0, 128], sizes = [8, 128], strides = [1, 1]} : vector<8x512xf32> to vector<8x128xf32>
    %400 = arith.negf %399 : vector<8x128xf32>
    %401 = math.exp %400 : vector<8x128xf32>
    %cst_73 = arith.constant 1.000000e+00 : f32
    %402 = vector.broadcast %cst_73 : f32 to vector<8x128xf32>
    %403 = arith.addf %402, %401 : vector<8x128xf32>
    %404 = arith.divf %402, %403 : vector<8x128xf32>
    %405 = vector.extract_strided_slice %392 {offsets = [0, 256], sizes = [8, 128], strides = [1, 1]} : vector<8x512xf32> to vector<8x128xf32>
    %406 = math.tanh %405 : vector<8x128xf32>
    %407 = vector.extract_strided_slice %392 {offsets = [0, 384], sizes = [8, 128], strides = [1, 1]} : vector<8x512xf32> to vector<8x128xf32>
    %408 = arith.negf %407 : vector<8x128xf32>
    %409 = math.exp %408 : vector<8x128xf32>
    %cst_74 = arith.constant 1.000000e+00 : f32
    %410 = vector.broadcast %cst_74 : f32 to vector<8x128xf32>
    %411 = arith.addf %410, %409 : vector<8x128xf32>
    %412 = arith.divf %410, %411 : vector<8x128xf32>
    %413 = arith.mulf %404, %353 : vector<8x128xf32>
    %414 = arith.mulf %398, %406 : vector<8x128xf32>
    %415 = arith.addf %413, %414 : vector<8x128xf32>
    %416 = math.tanh %415 : vector<8x128xf32>
    %417 = arith.mulf %412, %416 : vector<8x128xf32>
    %418 = arith.truncf %417 : vector<8x128xf32> to vector<8x128xbf16>
    %cst_75 = arith.constant dense<0.000000e+00> : vector<8x512xf32>
    %419 = tpu.matmul %418, %9, %cst_75 {dimension_numbers = #tpu.dot_dimension_numbers<[1], [0], [0], [1], [0, 0, 1, 1], [], []>} : vector<8x128xbf16>, vector<128x512xbf16>, vector<8x512xf32> -> vector<8x512xf32>
    %420 = arith.truncf %387 : vector<8x128xf32> to vector<8x128xbf16>
    %cst_76 = arith.constant dense<0.000000e+00> : vector<8x512xf32>
    %421 = tpu.matmul %420, %10, %cst_76 {dimension_numbers = #tpu.dot_dimension_numbers<[1], [0], [0], [1], [0, 0, 1, 1], [], []>} : vector<8x128xbf16>, vector<128x512xbf16>, vector<8x512xf32> -> vector<8x512xf32>
    %422 = arith.addf %419, %421 : vector<8x512xf32>
    %423 = vector.broadcast %11 : vector<1x512xf32> to vector<8x512xf32>
    %424 = arith.addf %422, %423 : vector<8x512xf32>
    %425 = vector.extract_strided_slice %424 {offsets = [0, 0], sizes = [8, 128], strides = [1, 1]} : vector<8x512xf32> to vector<8x128xf32>
    %426 = arith.negf %425 : vector<8x128xf32>
    %427 = math.exp %426 : vector<8x128xf32>
    %cst_77 = arith.constant 1.000000e+00 : f32
    %428 = vector.broadcast %cst_77 : f32 to vector<8x128xf32>
    %429 = arith.addf %428, %427 : vector<8x128xf32>
    %430 = arith.divf %428, %429 : vector<8x128xf32>
    %431 = vector.extract_strided_slice %424 {offsets = [0, 128], sizes = [8, 128], strides = [1, 1]} : vector<8x512xf32> to vector<8x128xf32>
    %432 = arith.negf %431 : vector<8x128xf32>
    %433 = math.exp %432 : vector<8x128xf32>
    %cst_78 = arith.constant 1.000000e+00 : f32
    %434 = vector.broadcast %cst_78 : f32 to vector<8x128xf32>
    %435 = arith.addf %434, %433 : vector<8x128xf32>
    %436 = arith.divf %434, %435 : vector<8x128xf32>
    %437 = vector.extract_strided_slice %424 {offsets = [0, 256], sizes = [8, 128], strides = [1, 1]} : vector<8x512xf32> to vector<8x128xf32>
    %438 = math.tanh %437 : vector<8x128xf32>
    %439 = vector.extract_strided_slice %424 {offsets = [0, 384], sizes = [8, 128], strides = [1, 1]} : vector<8x512xf32> to vector<8x128xf32>
    %440 = arith.negf %439 : vector<8x128xf32>
    %441 = math.exp %440 : vector<8x128xf32>
    %cst_79 = arith.constant 1.000000e+00 : f32
    %442 = vector.broadcast %cst_79 : f32 to vector<8x128xf32>
    %443 = arith.addf %442, %441 : vector<8x128xf32>
    %444 = arith.divf %442, %443 : vector<8x128xf32>
    %445 = arith.mulf %436, %385 : vector<8x128xf32>
    %446 = arith.mulf %430, %438 : vector<8x128xf32>
    %447 = arith.addf %445, %446 : vector<8x128xf32>
    %448 = math.tanh %447 : vector<8x128xf32>
    %449 = arith.mulf %444, %448 : vector<8x128xf32>
    %450 = vector.extract_strided_slice %7 {offsets = [0, 7, 0], sizes = [8, 1, 512], strides = [1, 1, 1]} : vector<8x8x512xf32> to vector<8x1x512xf32>
    %451 = vector.shape_cast %450 : vector<8x1x512xf32> to vector<8x512xf32>
    %452 = arith.truncf %417 : vector<8x128xf32> to vector<8x128xbf16>
    %cst_80 = arith.constant dense<0.000000e+00> : vector<8x512xf32>
    %453 = tpu.matmul %452, %8, %cst_80 {dimension_numbers = #tpu.dot_dimension_numbers<[1], [0], [0], [1], [0, 0, 1, 1], [], []>} : vector<8x128xbf16>, vector<128x512xbf16>, vector<8x512xf32> -> vector<8x512xf32>
    %454 = arith.addf %451, %453 : vector<8x512xf32>
    %455 = vector.extract_strided_slice %454 {offsets = [0, 0], sizes = [8, 128], strides = [1, 1]} : vector<8x512xf32> to vector<8x128xf32>
    %456 = arith.negf %455 : vector<8x128xf32>
    %457 = math.exp %456 : vector<8x128xf32>
    %cst_81 = arith.constant 1.000000e+00 : f32
    %458 = vector.broadcast %cst_81 : f32 to vector<8x128xf32>
    %459 = arith.addf %458, %457 : vector<8x128xf32>
    %460 = arith.divf %458, %459 : vector<8x128xf32>
    %461 = vector.extract_strided_slice %454 {offsets = [0, 128], sizes = [8, 128], strides = [1, 1]} : vector<8x512xf32> to vector<8x128xf32>
    %462 = arith.negf %461 : vector<8x128xf32>
    %463 = math.exp %462 : vector<8x128xf32>
    %cst_82 = arith.constant 1.000000e+00 : f32
    %464 = vector.broadcast %cst_82 : f32 to vector<8x128xf32>
    %465 = arith.addf %464, %463 : vector<8x128xf32>
    %466 = arith.divf %464, %465 : vector<8x128xf32>
    %467 = vector.extract_strided_slice %454 {offsets = [0, 256], sizes = [8, 128], strides = [1, 1]} : vector<8x512xf32> to vector<8x128xf32>
    %468 = math.tanh %467 : vector<8x128xf32>
    %469 = vector.extract_strided_slice %454 {offsets = [0, 384], sizes = [8, 128], strides = [1, 1]} : vector<8x512xf32> to vector<8x128xf32>
    %470 = arith.negf %469 : vector<8x128xf32>
    %471 = math.exp %470 : vector<8x128xf32>
    %cst_83 = arith.constant 1.000000e+00 : f32
    %472 = vector.broadcast %cst_83 : f32 to vector<8x128xf32>
    %473 = arith.addf %472, %471 : vector<8x128xf32>
    %474 = arith.divf %472, %473 : vector<8x128xf32>
    %475 = arith.mulf %466, %415 : vector<8x128xf32>
    %476 = arith.mulf %460, %468 : vector<8x128xf32>
    %477 = arith.addf %475, %476 : vector<8x128xf32>
    %478 = math.tanh %477 : vector<8x128xf32>
    %479 = arith.mulf %474, %478 : vector<8x128xf32>
    %480 = arith.truncf %479 : vector<8x128xf32> to vector<8x128xbf16>
    %cst_84 = arith.constant dense<0.000000e+00> : vector<8x512xf32>
    %481 = tpu.matmul %480, %9, %cst_84 {dimension_numbers = #tpu.dot_dimension_numbers<[1], [0], [0], [1], [0, 0, 1, 1], [], []>} : vector<8x128xbf16>, vector<128x512xbf16>, vector<8x512xf32> -> vector<8x512xf32>
    %482 = arith.truncf %449 : vector<8x128xf32> to vector<8x128xbf16>
    %cst_85 = arith.constant dense<0.000000e+00> : vector<8x512xf32>
    %483 = tpu.matmul %482, %10, %cst_85 {dimension_numbers = #tpu.dot_dimension_numbers<[1], [0], [0], [1], [0, 0, 1, 1], [], []>} : vector<8x128xbf16>, vector<128x512xbf16>, vector<8x512xf32> -> vector<8x512xf32>
    %484 = arith.addf %481, %483 : vector<8x512xf32>
    %485 = vector.broadcast %11 : vector<1x512xf32> to vector<8x512xf32>
    %486 = arith.addf %484, %485 : vector<8x512xf32>
    %487 = vector.extract_strided_slice %486 {offsets = [0, 0], sizes = [8, 128], strides = [1, 1]} : vector<8x512xf32> to vector<8x128xf32>
    %488 = arith.negf %487 : vector<8x128xf32>
    %489 = math.exp %488 : vector<8x128xf32>
    %cst_86 = arith.constant 1.000000e+00 : f32
    %490 = vector.broadcast %cst_86 : f32 to vector<8x128xf32>
    %491 = arith.addf %490, %489 : vector<8x128xf32>
    %492 = arith.divf %490, %491 : vector<8x128xf32>
    %493 = vector.extract_strided_slice %486 {offsets = [0, 128], sizes = [8, 128], strides = [1, 1]} : vector<8x512xf32> to vector<8x128xf32>
    %494 = arith.negf %493 : vector<8x128xf32>
    %495 = math.exp %494 : vector<8x128xf32>
    %cst_87 = arith.constant 1.000000e+00 : f32
    %496 = vector.broadcast %cst_87 : f32 to vector<8x128xf32>
    %497 = arith.addf %496, %495 : vector<8x128xf32>
    %498 = arith.divf %496, %497 : vector<8x128xf32>
    %499 = vector.extract_strided_slice %486 {offsets = [0, 256], sizes = [8, 128], strides = [1, 1]} : vector<8x512xf32> to vector<8x128xf32>
    %500 = math.tanh %499 : vector<8x128xf32>
    %501 = vector.extract_strided_slice %486 {offsets = [0, 384], sizes = [8, 128], strides = [1, 1]} : vector<8x512xf32> to vector<8x128xf32>
    %502 = arith.negf %501 : vector<8x128xf32>
    %503 = math.exp %502 : vector<8x128xf32>
    %cst_88 = arith.constant 1.000000e+00 : f32
    %504 = vector.broadcast %cst_88 : f32 to vector<8x128xf32>
    %505 = arith.addf %504, %503 : vector<8x128xf32>
    %506 = arith.divf %504, %505 : vector<8x128xf32>
    %507 = arith.mulf %498, %447 : vector<8x128xf32>
    %508 = arith.mulf %492, %500 : vector<8x128xf32>
    %509 = arith.addf %507, %508 : vector<8x128xf32>
    %510 = math.tanh %509 : vector<8x128xf32>
    %511 = arith.mulf %506, %510 : vector<8x128xf32>
    %c0_89 = arith.constant 0 : index
    %c0_90 = arith.constant 0 : index
    %512 = vector.load %arg7[%c0_89, %c0_90] : memref<128x128xf32, #tpu.memory_space<vmem>>, vector<128x128xf32>
    %cst_91 = arith.constant dense<0.000000e+00> : vector<8x128xf32>
    %513 = tpu.matmul %511, %512, %cst_91 {dimension_numbers = #tpu.dot_dimension_numbers<[1], [0], [0], [1], [0, 0, 1, 1], [], []>} : vector<8x128xf32>, vector<128x128xf32>, vector<8x128xf32> -> vector<8x128xf32>
    %c0_92 = arith.constant 0 : index
    %c0_93 = arith.constant 0 : index
    %514 = vector.load %arg8[%c0_92, %c0_93] : memref<1x128xf32, #tpu.memory_space<vmem>>, vector<1x128xf32>
    %515 = vector.broadcast %514 : vector<1x128xf32> to vector<8x128xf32>
    %516 = arith.addf %513, %515 : vector<8x128xf32>
    %cst_94 = arith.constant dense<0xFF800000> : vector<8xf32>
    %517 = vector.multi_reduction <maximumf>, %516, %cst_94 [1] : vector<8x128xf32> to vector<8xf32>
    %518 = vector.shape_cast %517 : vector<8xf32> to vector<8x1xf32>
    %519 = vector.broadcast %518 : vector<8x1xf32> to vector<8x128xf32>
    %520 = arith.subf %516, %519 : vector<8x128xf32>
    %521 = math.exp %520 : vector<8x128xf32>
    %cst_95 = arith.constant dense<0.000000e+00> : vector<8xf32>
    %522 = vector.multi_reduction <add>, %521, %cst_95 [1] : vector<8x128xf32> to vector<8xf32>
    %523 = vector.shape_cast %522 : vector<8xf32> to vector<8x1xf32>
    %524 = tpu.reciprocal %523 {approx = true} : vector<8x1xf32> -> vector<8x1xf32>
    %525 = vector.broadcast %524 : vector<8x1xf32> to vector<8x128xf32>
    %526 = arith.mulf %521, %525 : vector<8x128xf32>
    %c0_96 = arith.constant 0 : index
    %c0_97 = arith.constant 0 : index
    %527 = vector.load %arg9[%c0_96, %c0_97] : memref<8x128xf32, #tpu.memory_space<vmem>>, vector<8x128xf32>
    tpu.vector_store %arg9[%c0_96, %c0_97], %526 {strides = array<i32>} : memref<8x128xf32, #tpu.memory_space<vmem>>, vector<8x128xf32>,
    return
  }
}

</mosaic_0001>

<llo_original>
// kernel: lstm_classifier_forward.1
$region0: #{lstm_classifier_forward.1}
  #allocation0 [shape = 'u32[]', space=smem, size = 0x4, offset = 0x4, fixed_abs, tag = 'smem constant byte address 0x4 - core index']
  #allocation1 [shape = 'u32[144,128]{1,0:T(1,128)}', space=vmem, size = 0x12000, scoped, tag = 'internal scratch']
  %s0 = inlined_call_operand.hbm [shape: f32[64,128], index: 0, kind: input, shape index: {}]
  %s1 = inlined_call_operand.hbm [shape: bf16[128,512], index: 1, kind: input, shape index: {}]
  %s2 = inlined_call_operand.hbm [shape: bf16[128,512], index: 2, kind: input, shape index: {}]
  %s3 = inlined_call_operand.hbm [shape: f32[1,512], index: 3, kind: input, shape index: {}]
  %s4 = inlined_call_operand.hbm [shape: bf16[128,512], index: 4, kind: input, shape index: {}]
  %s5 = inlined_call_operand.hbm [shape: bf16[128,512], index: 5, kind: input, shape index: {}]
  %s6 = inlined_call_operand.vmem [shape: f32[1,512], index: 6, kind: input, shape index: {}]
  %s7 = inlined_call_operand.hbm [shape: f32[128,128], index: 7, kind: input, shape index: {}]
  %s8 = inlined_call_operand.vmem [shape: f32[1,128], index: 8, kind: input, shape index: {}]
  %s9 = inlined_call_operand.hbm [shape: f32[8,128], index: 9, kind: output, shape index: {}]
  %s10 = sld [smem:[#allocation0]]
  $region74: #{lstm_classifier_forward.1} parent=0
    _
  %s12 = ssub.s32 1, %s10
  %s13 = scalar_select 0, %s12, %s10
  $region1: #{lstm_classifier_forward.1} parent=0
    #allocation2 [shape = 'u8[32768]{0}', space=vmem, size = 0x8000, scoped, tag = 'input window, operand 0, single buffered']
    #allocation3 [shape = 's32[1]{0}', space=sflag, size = 0x4, scoped, tag = 'scoped memory for lstm_classifier_forward.1']
    #allocation4 [shape = 's32[1]{0}', space=sflag, size = 0x4, scoped, tag = 'scoped memory for lstm_classifier_forward.1']
    #allocation5 [shape = 'u8[131072]{0}', space=vmem, size = 0x20000, scoped, tag = 'input window, operand 1, single buffered']
    #allocation6 [shape = 's32[1]{0}', space=sflag, size = 0x4, scoped, tag = 'scoped memory for lstm_classifier_forward.1']
    #allocation7 [shape = 'u8[131072]{0}', space=vmem, size = 0x20000, scoped, tag = 'input window, operand 2, single buffered']
    #allocation8 [shape = 'u8[2048]{0}', space=vmem, size = 0x800, scoped, tag = 'input window, operand 3, single buffered']
    #allocation9 [shape = 's32[1]{0}', space=sflag, size = 0x4, scoped, tag = 'scoped memory for lstm_classifier_forward.1']
    #allocation10 [shape = 'u8[131072]{0}', space=vmem, size = 0x20000, scoped, tag = 'input window, operand 4, single buffered']
    #allocation11 [shape = 'u8[131072]{0}', space=vmem, size = 0x20000, scoped, tag = 'input window, operand 5, single buffered']
    #allocation12 [shape = 's32[1]{0}', space=sflag, size = 0x4, scoped, tag = 'scoped memory for lstm_classifier_forward.1']
    #allocation13 [shape = 'u8[65536]{0}', space=vmem, size = 0x10000, scoped, tag = 'input window, operand 7, single buffered']
    #allocation14 [shape = 'u8[4096]{0}', space=vmem, size = 0x1000, scoped, tag = 'output window, operand 0, single buffered']
    %14 = vsyncpa [#allocation3], 0
    %15 = vsyncpa [#allocation6], 0
    %16 = vsyncpa [#allocation9], 0
    %17 = vsyncpa [#allocation12], 0
    %18 = vsyncpa [#allocation4], 0
    // Predicated region
    $region2: #{lstm_classifier_forward.1} parent=1 // pred_check
      _
    $region3: #{lstm_classifier_forward.1} parent=1 // pred_check_branch
      %20 = sbr.rel (0) target = $region5
    $region4: #{lstm_classifier_forward.1} parent=1 // pred_region
      %s22 = ssub.s32 1024, 1024
      %23 = vsyncadd [#allocation3], %s22
      %s24 = sshll.u32 [#allocation2], 4
      %s25 = int_to_ptr.vmem [resolvable:$true] %s24
      %30 = dma.hbm_to_vmem [thread:$0]  %s0, 1024, %s25, [#allocation3], 128, 128, 8
    $region5: #{lstm_classifier_forward.1} parent=1 // pred_fallthru
      _
    // Predicated region
    $region6: #{lstm_classifier_forward.1} parent=1 // pred_check
      _
    $region7: #{lstm_classifier_forward.1} parent=1 // pred_check_branch
      %32 = sbr.rel (0) target = $region9
    $region8: #{lstm_classifier_forward.1} parent=1 // pred_region
      %s34 = ssub.s32 4096, 4096
      %35 = vsyncadd [#allocation6], %s34
      %s36 = sshll.u32 [#allocation5], 4
      %s37 = int_to_ptr.vmem [resolvable:$true] %s36
      %42 = dma.hbm_to_vmem [thread:$0]  %s1, 4096, %s37, [#allocation6], 256, 256, 16
    $region9: #{lstm_classifier_forward.1} parent=1 // pred_fallthru
      _
    // Predicated region
    $region10: #{lstm_classifier_forward.1} parent=1 // pred_check
      _
    $region11: #{lstm_classifier_forward.1} parent=1 // pred_check_branch
      %44 = sbr.rel (0) target = $region13
    $region12: #{lstm_classifier_forward.1} parent=1 // pred_region
      %s46 = ssub.s32 4096, 4096
      %47 = vsyncadd [#allocation6], %s46
      %s48 = sshll.u32 [#allocation7], 4
      %s49 = int_to_ptr.vmem [resolvable:$true] %s48
      %54 = dma.hbm_to_vmem [thread:$0]  %s2, 4096, %s49, [#allocation6], 256, 256, 16
    $region13: #{lstm_classifier_forward.1} parent=1 // pred_fallthru
      _
    // Predicated region
    $region14: #{lstm_classifier_forward.1} parent=1 // pred_check
      _
    $region15: #{lstm_classifier_forward.1} parent=1 // pred_check_branch
      %56 = sbr.rel (0) target = $region17
    $region16: #{lstm_classifier_forward.1} parent=1 // pred_region
      %s58 = ssub.s32 64, 64
      %59 = vsyncadd [#allocation9], %s58
      %s61 = sshll.u32 [#allocation8], 4
      %s62 = int_to_ptr.vmem [resolvable:$true] %s61
      %64 = dma.hbm_to_vmem [thread:$0]  %s3, 64, %s62, [#allocation9]
    $region17: #{lstm_classifier_forward.1} parent=1 // pred_fallthru
      _
    // Predicated region
    $region18: #{lstm_classifier_forward.1} parent=1 // pred_check
      _
    $region19: #{lstm_classifier_forward.1} parent=1 // pred_check_branch
      %66 = sbr.rel (0) target = $region21
    $region20: #{lstm_classifier_forward.1} parent=1 // pred_region
      %s68 = ssub.s32 4096, 4096
      %69 = vsyncadd [#allocation9], %s68
      %s70 = sshll.u32 [#allocation10], 4
      %s71 = int_to_ptr.vmem [resolvable:$true] %s70
      %76 = dma.hbm_to_vmem [thread:$0]  %s4, 4096, %s71, [#allocation9], 256, 256, 16
    $region21: #{lstm_classifier_forward.1} parent=1 // pred_fallthru
      _
    // Predicated region
    $region22: #{lstm_classifier_forward.1} parent=1 // pred_check
      _
    $region23: #{lstm_classifier_forward.1} parent=1 // pred_check_branch
      %78 = sbr.rel (0) target = $region25
    $region24: #{lstm_classifier_forward.1} parent=1 // pred_region
      %s80 = ssub.s32 4096, 4096
      %81 = vsyncadd [#allocation12], %s80
      %s82 = sshll.u32 [#allocation11], 4
      %s83 = int_to_ptr.vmem [resolvable:$true] %s82
      %88 = dma.hbm_to_vmem [thread:$0]  %s5, 4096, %s83, [#allocation12], 256, 256, 16
    $region25: #{lstm_classifier_forward.1} parent=1 // pred_fallthru
      _
    // Predicated region
    $region26: #{lstm_classifier_forward.1} parent=1 // pred_check
      _
    $region27: #{lstm_classifier_forward.1} parent=1 // pred_check_branch
      %90 = sbr.rel (0) target = $region29
    $region28: #{lstm_classifier_forward.1} parent=1 // pred_region
      _
    $region29: #{lstm_classifier_forward.1} parent=1 // pred_fallthru
      _
    // Predicated region
    $region30: #{lstm_classifier_forward.1} parent=1 // pred_check
      _
    $region31: #{lstm_classifier_forward.1} parent=1 // pred_check_branch
      %92 = sbr.rel (0) target = $region33
    $region32: #{lstm_classifier_forward.1} parent=1 // pred_region
      %s94 = ssub.s32 2048, 2048
      %95 = vsyncadd [#allocation12], %s94
      %s96 = sshll.u32 [#allocation13], 4
      %s97 = int_to_ptr.vmem [resolvable:$true] %s96
      %102 = dma.hbm_to_vmem [thread:$0]  %s7, 2048, %s97, [#allocation12], 128, 128, 8
    $region33: #{lstm_classifier_forward.1} parent=1 // pred_fallthru
      _
    // Predicated region
    $region34: #{lstm_classifier_forward.1} parent=1 // pred_check
      _
    $region35: #{lstm_classifier_forward.1} parent=1 // pred_check_branch
      %104 = sbr.rel (0) target = $region37
    $region36: #{lstm_classifier_forward.1} parent=1 // pred_region
      _
    $region37: #{lstm_classifier_forward.1} parent=1 // pred_fallthru
      _
    // Predicated region
    $region38: #{lstm_classifier_forward.1} parent=1 // pred_check
      _
    $region39: #{lstm_classifier_forward.1} parent=1 // pred_check_branch
      %106 = sbr.rel (0) target = $region41
    $region40: #{lstm_classifier_forward.1} parent=1 // pred_region
      %107 = dma.done [#allocation3], 1024
    $region41: #{lstm_classifier_forward.1} parent=1 // pred_fallthru
      _
    // Predicated region
    $region42: #{lstm_classifier_forward.1} parent=1 // pred_check
      _
    $region43: #{lstm_classifier_forward.1} parent=1 // pred_check_branch
      %109 = sbr.rel (0) target = $region45
    $region44: #{lstm_classifier_forward.1} parent=1 // pred_region
      %110 = dma.done [#allocation6], 4096
    $region45: #{lstm_classifier_forward.1} parent=1 // pred_fallthru
      _
    // Predicated region
    $region46: #{lstm_classifier_forward.1} parent=1 // pred_check
      _
    $region47: #{lstm_classifier_forward.1} parent=1 // pred_check_branch
      %112 = sbr.rel (0) target = $region49
    $region48: #{lstm_classifier_forward.1} parent=1 // pred_region
      %113 = dma.done [#allocation6], 4096
    $region49: #{lstm_classifier_forward.1} parent=1 // pred_fallthru
      _
    // Predicated region
    $region50: #{lstm_classifier_forward.1} parent=1 // pred_check
      _
    $region51: #{lstm_classifier_forward.1} parent=1 // pred_check_branch
      %115 = sbr.rel (0) target = $region53
    $region52: #{lstm_classifier_forward.1} parent=1 // pred_region
      %116 = dma.done [#allocation9], 64
    $region53: #{lstm_classifier_forward.1} parent=1 // pred_fallthru
      _
    // Predicated region
    $region54: #{lstm_classifier_forward.1} parent=1 // pred_check
      _
    $region55: #{lstm_classifier_forward.1} parent=1 // pred_check_branch
      %118 = sbr.rel (0) target = $region57
    $region56: #{lstm_classifier_forward.1} parent=1 // pred_region
      %119 = dma.done [#allocation9], 4096
    $region57: #{lstm_classifier_forward.1} parent=1 // pred_fallthru
      _
    // Predicated region
    $region58: #{lstm_classifier_forward.1} parent=1 // pred_check
      _
    $region59: #{lstm_classifier_forward.1} parent=1 // pred_check_branch
      %121 = sbr.rel (0) target = $region61
    $region60: #{lstm_classifier_forward.1} parent=1 // pred_region
      %122 = dma.done [#allocation12], 4096
    $region61: #{lstm_classifier_forward.1} parent=1 // pred_fallthru
      _
    // Predicated region
    $region62: #{lstm_classifier_forward.1} parent=1 // pred_check
      _
    $region63: #{lstm_classifier_forward.1} parent=1 // pred_check_branch
      %124 = sbr.rel (0) target = $region65
    $region64: #{lstm_classifier_forward.1} parent=1 // pred_region
      %125 = dma.done [#allocation12], 2048
    $region65: #{lstm_classifier_forward.1} parent=1 // pred_fallthru
      _
    %v127 = vld [vmem:[#allocation2] sm:$0xff]
    %v128 = vld [vmem:[#allocation2 + $0x8] sm:$0xff]
    %v129 = vld [vmem:[#allocation2 + $0x10] sm:$0xff]
    %v130 = vld [vmem:[#allocation2 + $0x18] sm:$0xff]
    %v131 = vld [vmem:[#allocation2 + $0x20] sm:$0xff]
    %v132 = vld [vmem:[#allocation2 + $0x28] sm:$0xff]
    %v133 = vld [vmem:[#allocation2 + $0x30] sm:$0xff]
    %v134 = vld [vmem:[#allocation2 + $0x38] sm:$0xff]
    %v135 = vpack.c.bf16 %v128, %v127
    %v136 = vpack.c.bf16 %v130, %v129
    %v137 = vpack.c.bf16 %v132, %v131
    %v138 = vpack.c.bf16 %v134, %v133
    %v139 = vld [vmem:[#allocation5] sm:$0xff]
    %v140 = vld [vmem:[#allocation5 + $0x8] sm:$0xff]
    %v141 = vld [vmem:[#allocation5 + $0x10] sm:$0xff]
    %v142 = vld [vmem:[#allocation5 + $0x18] sm:$0xff]
    %v143 = vld [vmem:[#allocation5 + $0x20] sm:$0xff]
    %v144 = vld [vmem:[#allocation5 + $0x28] sm:$0xff]
    %v145 = vld [vmem:[#allocation5 + $0x30] sm:$0xff]
    %v146 = vld [vmem:[#allocation5 + $0x38] sm:$0xff]
    %v147 = vld [vmem:[#allocation5 + $0x40] sm:$0xff]
    %v148 = vld [vmem:[#allocation5 + $0x48] sm:$0xff]
    %v149 = vld [vmem:[#allocation5 + $0x50] sm:$0xff]
    %v150 = vld [vmem:[#allocation5 + $0x58] sm:$0xff]
    %v151 = vld [vmem:[#allocation5 + $0x60] sm:$0xff]
    %v152 = vld [vmem:[#allocation5 + $0x68] sm:$0xff]
    %v153 = vld [vmem:[#allocation5 + $0x70] sm:$0xff]
    %v154 = vld [vmem:[#allocation5 + $0x78] sm:$0xff]
    %v155 = vld [vmem:[#allocation5 + $0x80] sm:$0xff]
    %v156 = vld [vmem:[#allocation5 + $0x88] sm:$0xff]
    %v157 = vld [vmem:[#allocation5 + $0x90] sm:$0xff]
    %v158 = vld [vmem:[#allocation5 + $0x98] sm:$0xff]
    %v159 = vld [vmem:[#allocation5 + $0xa0] sm:$0xff]
    %v160 = vld [vmem:[#allocation5 + $0xa8] sm:$0xff]
    %v161 = vld [vmem:[#allocation5 + $0xb0] sm:$0xff]
    %v162 = vld [vmem:[#allocation5 + $0xb8] sm:$0xff]
    %v163 = vld [vmem:[#allocation5 + $0xc0] sm:$0xff]
    %v164 = vld [vmem:[#allocation5 + $0xc8] sm:$0xff]
    %v165 = vld [vmem:[#allocation5 + $0xd0] sm:$0xff]
    %v166 = vld [vmem:[#allocation5 + $0xd8] sm:$0xff]
    %v167 = vld [vmem:[#allocation5 + $0xe0] sm:$0xff]
    %v168 = vld [vmem:[#allocation5 + $0xe8] sm:$0xff]
    %v169 = vld [vmem:[#allocation5 + $0xf0] sm:$0xff]
    %v170 = vld [vmem:[#allocation5 + $0xf8] sm:$0xff]
    %v171 = vld [vmem:[#allocation8] sm:$0xf]
    %v173 = vlaneseq
    %v174 = vshrl.u32 %v173, 7
    %v175 = vsub.s32 0, %v174
    %v176 = vrot.slane %v171, %v175
    %v177 = vlaneseq
    %v178 = vshrl.u32 %v177, 7
    %v179 = vsub.s32 1, %v178
    %v180 = vrot.slane %v171, %v179
    %v181 = vlaneseq
    %v182 = vshrl.u32 %v181, 7
    %v183 = vsub.s32 2, %v182
    %v184 = vrot.slane %v171, %v183
    %v185 = vlaneseq
    %v186 = vshrl.u32 %v185, 7
    %v187 = vsub.s32 3, %v186
    %v188 = vrot.slane %v171, %v187
    %v225 = vunpack.c.l.b16 %v139
    %v226 = vunpack.c.h.b16 %v139
    %v227 = vunpack.c.l.b16 %v140
    %v228 = vunpack.c.h.b16 %v140
    %v229 = vunpack.c.l.b16 %v141
    %v230 = vunpack.c.h.b16 %v141
    %v231 = vunpack.c.l.b16 %v142
    %v232 = vunpack.c.h.b16 %v142
    %v233 = vunpack.c.l.b16 %v143
    %v234 = vunpack.c.h.b16 %v143
    %v235 = vunpack.c.l.b16 %v144
    %v236 = vunpack.c.h.b16 %v144
    %v237 = vunpack.c.l.b16 %v145
    %v238 = vunpack.c.h.b16 %v145
    %v239 = vunpack.c.l.b16 %v146
    %v240 = vunpack.c.h.b16 %v146
    %v241 = vunpack.c.l.b16 %v147
    %v242 = vunpack.c.h.b16 %v147
    %v243 = vunpack.c.l.b16 %v148
    %v244 = vunpack.c.h.b16 %v148
    %v245 = vunpack.c.l.b16 %v149
    %v246 = vunpack.c.h.b16 %v149
    %v247 = vunpack.c.l.b16 %v150
    %v248 = vunpack.c.h.b16 %v150
    %v249 = vunpack.c.l.b16 %v151
    %v250 = vunpack.c.h.b16 %v151
    %v251 = vunpack.c.l.b16 %v152
    %v252 = vunpack.c.h.b16 %v152
    %v253 = vunpack.c.l.b16 %v153
    %v254 = vunpack.c.h.b16 %v153
    %v255 = vunpack.c.l.b16 %v154
    %v256 = vunpack.c.h.b16 %v154
    %v257 = vunpack.c.l.b16 %v155
    %v258 = vunpack.c.h.b16 %v155
    %v259 = vunpack.c.l.b16 %v156
    %v260 = vunpack.c.h.b16 %v156
    %v261 = vunpack.c.l.b16 %v157
    %v262 = vunpack.c.h.b16 %v157
    %v263 = vunpack.c.l.b16 %v158
    %v264 = vunpack.c.h.b16 %v158
    %v265 = vunpack.c.l.b16 %v159
    %v266 = vunpack.c.h.b16 %v159
    %v267 = vunpack.c.l.b16 %v160
    %v268 = vunpack.c.h.b16 %v160
    %v269 = vunpack.c.l.b16 %v161
    %v270 = vunpack.c.h.b16 %v161
    %v271 = vunpack.c.l.b16 %v162
    %v272 = vunpack.c.h.b16 %v162
    %v273 = vunpack.c.l.b16 %v163
    %v274 = vunpack.c.h.b16 %v163
    %v275 = vunpack.c.l.b16 %v164
    %v276 = vunpack.c.h.b16 %v164
    %v277 = vunpack.c.l.b16 %v165
    %v278 = vunpack.c.h.b16 %v165
    %v279 = vunpack.c.l.b16 %v166
    %v280 = vunpack.c.h.b16 %v166
    %v281 = vunpack.c.l.b16 %v167
    %v282 = vunpack.c.h.b16 %v167
    %v283 = vunpack.c.l.b16 %v168
    %v284 = vunpack.c.h.b16 %v168
    %v285 = vunpack.c.l.b16 %v169
    %v286 = vunpack.c.h.b16 %v169
    %v287 = vunpack.c.l.b16 %v170
    %v288 = vunpack.c.h.b16 %v170
    %v289 = vpack.c.b16 %v229, %v225
    %v290 = vpack.c.b16 %v230, %v226
    %v291 = vpack.c.b16 %v231, %v227
    %v292 = vpack.c.b16 %v232, %v228
    %v293 = vpack.c.b16 %v237, %v233
    %v294 = vpack.c.b16 %v238, %v234
    %v295 = vpack.c.b16 %v239, %v235
    %v296 = vpack.c.b16 %v240, %v236
    %v297 = vpack.c.b16 %v245, %v241
    %v298 = vpack.c.b16 %v246, %v242
    %v299 = vpack.c.b16 %v247, %v243
    %v300 = vpack.c.b16 %v248, %v244
    %v301 = vpack.c.b16 %v253, %v249
    %v302 = vpack.c.b16 %v254, %v250
    %v303 = vpack.c.b16 %v255, %v251
    %v304 = vpack.c.b16 %v256, %v252
    %v305 = vpack.c.b16 %v261, %v257
    %v306 = vpack.c.b16 %v262, %v258
    %v307 = vpack.c.b16 %v263, %v259
    %v308 = vpack.c.b16 %v264, %v260
    %v309 = vpack.c.b16 %v269, %v265
    %v310 = vpack.c.b16 %v270, %v266
    %v311 = vpack.c.b16 %v271, %v267
    %v312 = vpack.c.b16 %v272, %v268
    %v313 = vpack.c.b16 %v277, %v273
    %v314 = vpack.c.b16 %v278, %v274
    %v315 = vpack.c.b16 %v279, %v275
    %v316 = vpack.c.b16 %v280, %v276
    %v317 = vpack.c.b16 %v285, %v281
    %v318 = vpack.c.b16 %v286, %v282
    %v319 = vpack.c.b16 %v287, %v283
    %v320 = vpack.c.b16 %v288, %v284
    %353 = vmatprep.subr.bf16.mxu0 %v290
    %354 = vmatpush1.bf16.msra.mxu0 %v289
    %355 = vmatprep.subr.bf16.mxu0 %v294
    %356 = vmatpush1.bf16.msra.mxu0 %v293
    %357 = vmatprep.subr.bf16.mxu0 %v298
    %358 = vmatpush1.bf16.msra.mxu0 %v297
    %359 = vmatprep.subr.bf16.mxu0 %v302
    %360 = vmatpush1.bf16.msra.mxu0 %v301
    %361 = vmatprep.subr.bf16.mxu0 %v306
    %362 = vmatpush1.bf16.msra.mxu0 %v305
    %363 = vmatprep.subr.bf16.mxu0 %v310
    %364 = vmatpush1.bf16.msra.mxu0 %v309
    %365 = vmatprep.subr.bf16.mxu0 %v314
    %366 = vmatpush1.bf16.msra.mxu0 %v313
    %367 = vmatprep.subr.bf16.mxu0 %v318
    %368 = vmatpush1.bf16.msra.mxu0 %v317
    %369 = vmatprep.subr.bf16.mxu0 0
    %370 = vmatpush1.bf16.msra.mxu0 0
    %371 = vmatprep.subr.bf16.mxu0 0
    %372 = vmatpush1.bf16.msra.mxu0 0
    %373 = vmatprep.subr.bf16.mxu0 0
    %374 = vmatpush1.bf16.msra.mxu0 0
    %375 = vmatprep.subr.bf16.mxu0 0
    %376 = vmatpush1.bf16.msra.mxu0 0
    %377 = vmatprep.subr.bf16.mxu0 0
    %378 = vmatpush1.bf16.msra.mxu0 0
    %379 = vmatprep.subr.bf16.mxu0 0
    %380 = vmatpush1.bf16.msra.mxu0 0
    %381 = vmatprep.subr.bf16.mxu0 0
    %382 = vmatpush1.bf16.msra.mxu0 0
    %383 = vmatprep.subr.bf16.mxu0 0
    %384 = vmatpush1.bf16.msra.mxu0 0
    %385 = vmatprep.mubr.bf16.mxu0 0
    %386 = vmatmul.mubr.bf16.gmra.mrb[0].mxu0 %v135
    %v387 = vpop.f32.mrb[0].mxu0
    %v388 = vadd.f32 %v176, %v387
    %v389 = vpop.f32.mrb[0].mxu0
    %v390 = vadd.f32 %v180, %v389
    %v391 = vpop.f32.mrb[0].mxu0
    %v392 = vadd.f32 %v176, %v391
    %v393 = vpop.f32.mrb[0].mxu0
    %v394 = vadd.f32 %v180, %v393
    %395 = vmatprep.mubr.bf16.mxu0 0
    %396 = vmatmul.mubr.bf16.gmra.mrb[0].mxu0 %v136
    %v397 = vpop.f32.mrb[0].mxu0
    %v398 = vadd.f32 %v176, %v397
    %v399 = vpop.f32.mrb[0].mxu0
    %v400 = vadd.f32 %v180, %v399
    %v401 = vpop.f32.mrb[0].mxu0
    %v402 = vadd.f32 %v176, %v401
    %v403 = vpop.f32.mrb[0].mxu0
    %v404 = vadd.f32 %v180, %v403
    %405 = vmatprep.mubr.bf16.mxu0 0
    %406 = vmatmul.mubr.bf16.gmra.mrb[0].mxu0 %v137
    %v407 = vpop.f32.mrb[0].mxu0
    %v408 = vadd.f32 %v176, %v407
    %v409 = vpop.f32.mrb[0].mxu0
    %v410 = vadd.f32 %v180, %v409
    %v411 = vpop.f32.mrb[0].mxu0
    %v412 = vadd.f32 %v176, %v411
    %v413 = vpop.f32.mrb[0].mxu0
    %v414 = vadd.f32 %v180, %v413
    %415 = vmatprep.mubr.bf16.mxu0 0
    %416 = vmatmul.mubr.bf16.gmra.mrb[0].mxu0 %v138
    %v417 = vpop.f32.mrb[0].mxu0
    %v418 = vadd.f32 %v176, %v417
    %v419 = vpop.f32.mrb[0].mxu0
    %v420 = vadd.f32 %v180, %v419
    %v421 = vpop.f32.mrb[0].mxu0
    %v422 = vadd.f32 %v176, %v421
    %v423 = vpop.f32.mrb[0].mxu0
    %v424 = vadd.f32 %v180, %v423
    %425 = vdwg.mxu0
    %426 = vmatprep.subr.bf16.mxu0 %v292
    %427 = vmatpush1.bf16.msra.mxu0 %v291
    %428 = vmatprep.subr.bf16.mxu0 %v296
    %429 = vmatpush1.bf16.msra.mxu0 %v295
    %430 = vmatprep.subr.bf16.mxu0 %v300
    %431 = vmatpush1.bf16.msra.mxu0 %v299
    %432 = vmatprep.subr.bf16.mxu0 %v304
    %433 = vmatpush1.bf16.msra.mxu0 %v303
    %434 = vmatprep.subr.bf16.mxu0 %v308
    %435 = vmatpush1.bf16.msra.mxu0 %v307
    %436 = vmatprep.subr.bf16.mxu0 %v312
    %437 = vmatpush1.bf16.msra.mxu0 %v311
    %438 = vmatprep.subr.bf16.mxu0 %v316
    %439 = vmatpush1.bf16.msra.mxu0 %v315
    %440 = vmatprep.subr.bf16.mxu0 %v320
    %441 = vmatpush1.bf16.msra.mxu0 %v319
    %442 = vmatprep.subr.bf16.mxu0 0
    %443 = vmatpush1.bf16.msra.mxu0 0
    %444 = vmatprep.subr.bf16.mxu0 0
    %445 = vmatpush1.bf16.msra.mxu0 0
    %446 = vmatprep.subr.bf16.mxu0 0
    %447 = vmatpush1.bf16.msra.mxu0 0
    %448 = vmatprep.subr.bf16.mxu0 0
    %449 = vmatpush1.bf16.msra.mxu0 0
    %450 = vmatprep.subr.bf16.mxu0 0
    %451 = vmatpush1.bf16.msra.mxu0 0
    %452 = vmatprep.subr.bf16.mxu0 0
    %453 = vmatpush1.bf16.msra.mxu0 0
    %454 = vmatprep.subr.bf16.mxu0 0
    %455 = vmatpush1.bf16.msra.mxu0 0
    %456 = vmatprep.subr.bf16.mxu0 0
    %457 = vmatpush1.bf16.msra.mxu0 0
    %458 = vmatprep.mubr.bf16.mxu0 0
    %459 = vmatmul.mubr.bf16.gmra.mrb[0].mxu0 %v135
    %v460 = vpop.f32.mrb[0].mxu0
    %v461 = vadd.f32 %v184, %v460
    %v462 = vpop.f32.mrb[0].mxu0
    %v463 = vadd.f32 %v188, %v462
    %v464 = vpop.f32.mrb[0].mxu0
    %v465 = vadd.f32 %v184, %v464
    %v466 = vpop.f32.mrb[0].mxu0
    %v467 = vadd.f32 %v188, %v466
    %468 = vmatprep.mubr.bf16.mxu0 0
    %469 = vmatmul.mubr.bf16.gmra.mrb[0].mxu0 %v136
    %v470 = vpop.f32.mrb[0].mxu0
    %v471 = vadd.f32 %v184, %v470
    %v472 = vpop.f32.mrb[0].mxu0
    %v473 = vadd.f32 %v188, %v472
    %v474 = vpop.f32.mrb[0].mxu0
    %v475 = vadd.f32 %v184, %v474
    %v476 = vpop.f32.mrb[0].mxu0
    %v477 = vadd.f32 %v188, %v476
    %478 = vmatprep.mubr.bf16.mxu0 0
    %479 = vmatmul.mubr.bf16.gmra.mrb[0].mxu0 %v137
    %v480 = vpop.f32.mrb[0].mxu0
    %v481 = vadd.f32 %v184, %v480
    %v482 = vpop.f32.mrb[0].mxu0
    %v483 = vadd.f32 %v188, %v482
    %v484 = vpop.f32.mrb[0].mxu0
    %v485 = vadd.f32 %v184, %v484
    %v486 = vpop.f32.mrb[0].mxu0
    %v487 = vadd.f32 %v188, %v486
    %488 = vmatprep.mubr.bf16.mxu0 0
    %489 = vmatmul.mubr.bf16.gmra.mrb[0].mxu0 %v138
    %v490 = vpop.f32.mrb[0].mxu0
    %v491 = vadd.f32 %v184, %v490
    %v492 = vpop.f32.mrb[0].mxu0
    %v493 = vadd.f32 %v188, %v492
    %v494 = vpop.f32.mrb[0].mxu0
    %v495 = vadd.f32 %v184, %v494
    %v496 = vpop.f32.mrb[0].mxu0
    %v497 = vadd.f32 %v188, %v496
    %498 = vdwg.mxu0
    %v499 = vld [vmem:[#allocation7] sm:$0xff]
    %v500 = vld [vmem:[#allocation7 + $0x8] sm:$0xff]
    %v501 = vld [vmem:[#allocation7 + $0x10] sm:$0xff]
    %v502 = vld [vmem:[#allocation7 + $0x18] sm:$0xff]
    %v503 = vld [vmem:[#allocation7 + $0x20] sm:$0xff]
    %v504 = vld [vmem:[#allocation7 + $0x28] sm:$0xff]
    %v505 = vld [vmem:[#allocation7 + $0x30] sm:$0xff]
    %v506 = vld [vmem:[#allocation7 + $0x38] sm:$0xff]
    %v507 = vld [vmem:[#allocation7 + $0x40] sm:$0xff]
    %v508 = vld [vmem:[#allocation7 + $0x48] sm:$0xff]
    %v509 = vld [vmem:[#allocation7 + $0x50] sm:$0xff]
    %v510 = vld [vmem:[#allocation7 + $0x58] sm:$0xff]
    %v511 = vld [vmem:[#allocation7 + $0x60] sm:$0xff]
    %v512 = vld [vmem:[#allocation7 + $0x68] sm:$0xff]
    %v513 = vld [vmem:[#allocation7 + $0x70] sm:$0xff]
    %v514 = vld [vmem:[#allocation7 + $0x78] sm:$0xff]
    %v515 = vld [vmem:[#allocation7 + $0x80] sm:$0xff]
    %v516 = vld [vmem:[#allocation7 + $0x88] sm:$0xff]
    %v517 = vld [vmem:[#allocation7 + $0x90] sm:$0xff]
    %v518 = vld [vmem:[#allocation7 + $0x98] sm:$0xff]
    %v519 = vld [vmem:[#allocation7 + $0xa0] sm:$0xff]
    %v520 = vld [vmem:[#allocation7 + $0xa8] sm:$0xff]
    %v521 = vld [vmem:[#allocation7 + $0xb0] sm:$0xff]
    %v522 = vld [vmem:[#allocation7 + $0xb8] sm:$0xff]
    %v523 = vld [vmem:[#allocation7 + $0xc0] sm:$0xff]
    %v524 = vld [vmem:[#allocation7 + $0xc8] sm:$0xff]
    %v525 = vld [vmem:[#allocation7 + $0xd0] sm:$0xff]
    %v526 = vld [vmem:[#allocation7 + $0xd8] sm:$0xff]
    %v527 = vld [vmem:[#allocation7 + $0xe0] sm:$0xff]
    %v528 = vld [vmem:[#allocation7 + $0xe8] sm:$0xff]
    %v529 = vld [vmem:[#allocation7 + $0xf0] sm:$0xff]
    %v530 = vld [vmem:[#allocation7 + $0xf8] sm:$0xff]
    %v531 = vld [vmem:[#allocation10] sm:$0xff]
    %v532 = vld [vmem:[#allocation10 + $0x8] sm:$0xff]
    %v533 = vld [vmem:[#allocation10 + $0x10] sm:$0xff]
    %v534 = vld [vmem:[#allocation10 + $0x18] sm:$0xff]
    %v535 = vld [vmem:[#allocation10 + $0x20] sm:$0xff]
    %v536 = vld [vmem:[#allocation10 + $0x28] sm:$0xff]
    %v537 = vld [vmem:[#allocation10 + $0x30] sm:$0xff]
    %v538 = vld [vmem:[#allocation10 + $0x38] sm:$0xff]
    %v539 = vld [vmem:[#allocation10 + $0x40] sm:$0xff]
    %v540 = vld [vmem:[#allocation10 + $0x48] sm:$0xff]
    %v541 = vld [vmem:[#allocation10 + $0x50] sm:$0xff]
    %v542 = vld [vmem:[#allocation10 + $0x58] sm:$0xff]
    %v543 = vld [vmem:[#allocation10 + $0x60] sm:$0xff]
    %v544 = vld [vmem:[#allocation10 + $0x68] sm:$0xff]
    %v545 = vld [vmem:[#allocation10 + $0x70] sm:$0xff]
    %v546 = vld [vmem:[#allocation10 + $0x78] sm:$0xff]
    %v547 = vld [vmem:[#allocation10 + $0x80] sm:$0xff]
    %v548 = vld [vmem:[#allocation10 + $0x88] sm:$0xff]
    %v549 = vld [vmem:[#allocation10 + $0x90] sm:$0xff]
    %v550 = vld [vmem:[#allocation10 + $0x98] sm:$0xff]
    %v551 = vld [vmem:[#allocation10 + $0xa0] sm:$0xff]
    %v552 = vld [vmem:[#allocation10 + $0xa8] sm:$0xff]
    %v553 = vld [vmem:[#allocation10 + $0xb0] sm:$0xff]
    %v554 = vld [vmem:[#allocation10 + $0xb8] sm:$0xff]
    %v555 = vld [vmem:[#allocation10 + $0xc0] sm:$0xff]
    %v556 = vld [vmem:[#allocation10 + $0xc8] sm:$0xff]
    %v557 = vld [vmem:[#allocation10 + $0xd0] sm:$0xff]
    %v558 = vld [vmem:[#allocation10 + $0xd8] sm:$0xff]
    %v559 = vld [vmem:[#allocation10 + $0xe0] sm:$0xff]
    %v560 = vld [vmem:[#allocation10 + $0xe8] sm:$0xff]
    %v561 = vld [vmem:[#allocation10 + $0xf0] sm:$0xff]
    %v562 = vld [vmem:[#allocation10 + $0xf8] sm:$0xff]
    %v563 = vld [vmem:[#allocation11] sm:$0xff]
    %v564 = vld [vmem:[#allocation11 + $0x8] sm:$0xff]
    %v565 = vld [vmem:[#allocation11 + $0x10] sm:$0xff]
    %v566 = vld [vmem:[#allocation11 + $0x18] sm:$0xff]
    %v567 = vld [vmem:[#allocation11 + $0x20] sm:$0xff]
    %v568 = vld [vmem:[#allocation11 + $0x28] sm:$0xff]
    %v569 = vld [vmem:[#allocation11 + $0x30] sm:$0xff]
    %v570 = vld [vmem:[#allocation11 + $0x38] sm:$0xff]
    %v571 = vld [vmem:[#allocation11 + $0x40] sm:$0xff]
    %v572 = vld [vmem:[#allocation11 + $0x48] sm:$0xff]
    %v573 = vld [vmem:[#allocation11 + $0x50] sm:$0xff]
    %v574 = vld [vmem:[#allocation11 + $0x58] sm:$0xff]
    %v575 = vld [vmem:[#allocation11 + $0x60] sm:$0xff]
    %v576 = vld [vmem:[#allocation11 + $0x68] sm:$0xff]
    %v577 = vld [vmem:[#allocation11 + $0x70] sm:$0xff]
    %v578 = vld [vmem:[#allocation11 + $0x78] sm:$0xff]
    %v579 = vld [vmem:[#allocation11 + $0x80] sm:$0xff]
    %v580 = vld [vmem:[#allocation11 + $0x88] sm:$0xff]
    %v581 = vld [vmem:[#allocation11 + $0x90] sm:$0xff]
    %v582 = vld [vmem:[#allocation11 + $0x98] sm:$0xff]
    %v583 = vld [vmem:[#allocation11 + $0xa0] sm:$0xff]
    %v584 = vld [vmem:[#allocation11 + $0xa8] sm:$0xff]
    %v585 = vld [vmem:[#allocation11 + $0xb0] sm:$0xff]
    %v586 = vld [vmem:[#allocation11 + $0xb8] sm:$0xff]
    %v587 = vld [vmem:[#allocation11 + $0xc0] sm:$0xff]
    %v588 = vld [vmem:[#allocation11 + $0xc8] sm:$0xff]
    %v589 = vld [vmem:[#allocation11 + $0xd0] sm:$0xff]
    %v590 = vld [vmem:[#allocation11 + $0xd8] sm:$0xff]
    %v591 = vld [vmem:[#allocation11 + $0xe0] sm:$0xff]
    %v592 = vld [vmem:[#allocation11 + $0xe8] sm:$0xff]
    %v593 = vld [vmem:[#allocation11 + $0xf0] sm:$0xff]
    %v594 = vld [vmem:[#allocation11 + $0xf8] sm:$0xff]
    %v595 = vld [vmem:[%s6] sm:$0xf]
    %v628 = vunpack.c.l.b16 %v499
    %v629 = vunpack.c.h.b16 %v499
    %v630 = vunpack.c.l.b16 %v500
    %v631 = vunpack.c.h.b16 %v500
    %v632 = vunpack.c.l.b16 %v501
    %v633 = vunpack.c.h.b16 %v501
    %v634 = vunpack.c.l.b16 %v502
    %v635 = vunpack.c.h.b16 %v502
    %v636 = vunpack.c.l.b16 %v503
    %v637 = vunpack.c.h.b16 %v503
    %v638 = vunpack.c.l.b16 %v504
    %v639 = vunpack.c.h.b16 %v504
    %v640 = vunpack.c.l.b16 %v505
    %v641 = vunpack.c.h.b16 %v505
    %v642 = vunpack.c.l.b16 %v506
    %v643 = vunpack.c.h.b16 %v506
    %v644 = vunpack.c.l.b16 %v507
    %v645 = vunpack.c.h.b16 %v507
    %v646 = vunpack.c.l.b16 %v508
    %v647 = vunpack.c.h.b16 %v508
    %v648 = vunpack.c.l.b16 %v509
    %v649 = vunpack.c.h.b16 %v509
    %v650 = vunpack.c.l.b16 %v510
    %v651 = vunpack.c.h.b16 %v510
    %v652 = vunpack.c.l.b16 %v511
    %v653 = vunpack.c.h.b16 %v511
    %v654 = vunpack.c.l.b16 %v512
    %v655 = vunpack.c.h.b16 %v512
    %v656 = vunpack.c.l.b16 %v513
    %v657 = vunpack.c.h.b16 %v513
    %v658 = vunpack.c.l.b16 %v514
    %v659 = vunpack.c.h.b16 %v514
    %v660 = vunpack.c.l.b16 %v515
    %v661 = vunpack.c.h.b16 %v515
    %v662 = vunpack.c.l.b16 %v516
    %v663 = vunpack.c.h.b16 %v516
    %v664 = vunpack.c.l.b16 %v517
    %v665 = vunpack.c.h.b16 %v517
    %v666 = vunpack.c.l.b16 %v518
    %v667 = vunpack.c.h.b16 %v518
    %v668 = vunpack.c.l.b16 %v519
    %v669 = vunpack.c.h.b16 %v519
    %v670 = vunpack.c.l.b16 %v520
    %v671 = vunpack.c.h.b16 %v520
    %v672 = vunpack.c.l.b16 %v521
    %v673 = vunpack.c.h.b16 %v521
    %v674 = vunpack.c.l.b16 %v522
    %v675 = vunpack.c.h.b16 %v522
    %v676 = vunpack.c.l.b16 %v523
    %v677 = vunpack.c.h.b16 %v523
    %v678 = vunpack.c.l.b16 %v524
    %v679 = vunpack.c.h.b16 %v524
    %v680 = vunpack.c.l.b16 %v525
    %v681 = vunpack.c.h.b16 %v525
    %v682 = vunpack.c.l.b16 %v526
    %v683 = vunpack.c.h.b16 %v526
    %v684 = vunpack.c.l.b16 %v527
    %v685 = vunpack.c.h.b16 %v527
    %v686 = vunpack.c.l.b16 %v528
    %v687 = vunpack.c.h.b16 %v528
    %v688 = vunpack.c.l.b16 %v529
    %v689 = vunpack.c.h.b16 %v529
    %v690 = vunpack.c.l.b16 %v530
    %v691 = vunpack.c.h.b16 %v530
    %v692 = vpack.c.b16 %v632, %v628
    %v693 = vpack.c.b16 %v633, %v629
    %v694 = vpack.c.b16 %v634, %v630
    %v695 = vpack.c.b16 %v635, %v631
    %v696 = vpack.c.b16 %v640, %v636
    %v697 = vpack.c.b16 %v641, %v637
    %v698 = vpack.c.b16 %v642, %v638
    %v699 = vpack.c.b16 %v643, %v639
    %v700 = vpack.c.b16 %v648, %v644
    %v701 = vpack.c.b16 %v649, %v645
    %v702 = vpack.c.b16 %v650, %v646
    %v703 = vpack.c.b16 %v651, %v647
    %v704 = vpack.c.b16 %v656, %v652
    %v705 = vpack.c.b16 %v657, %v653
    %v706 = vpack.c.b16 %v658, %v654
    %v707 = vpack.c.b16 %v659, %v655
    %v708 = vpack.c.b16 %v664, %v660
    %v709 = vpack.c.b16 %v665, %v661
    %v710 = vpack.c.b16 %v666, %v662
    %v711 = vpack.c.b16 %v667, %v663
    %v712 = vpack.c.b16 %v672, %v668
    %v713 = vpack.c.b16 %v673, %v669
    %v714 = vpack.c.b16 %v674, %v670
    %v715 = vpack.c.b16 %v675, %v671
    %v716 = vpack.c.b16 %v680, %v676
    %v717 = vpack.c.b16 %v681, %v677
    %v718 = vpack.c.b16 %v682, %v678
    %v719 = vpack.c.b16 %v683, %v679
    %v720 = vpack.c.b16 %v688, %v684
    %v721 = vpack.c.b16 %v689, %v685
    %v722 = vpack.c.b16 %v690, %v686
    %v723 = vpack.c.b16 %v691, %v687
    %756 = vmatprep.subr.bf16.mxu0 %v693
    %757 = vmatpush1.bf16.msra.mxu0 %v692
    %758 = vmatprep.subr.bf16.mxu0 %v697
    %759 = vmatpush1.bf16.msra.mxu0 %v696
    %760 = vmatprep.subr.bf16.mxu0 %v701
    %761 = vmatpush1.bf16.msra.mxu0 %v700
    %762 = vmatprep.subr.bf16.mxu0 %v705
    %763 = vmatpush1.bf16.msra.mxu0 %v704
    %764 = vmatprep.subr.bf16.mxu0 %v709
    %765 = vmatpush1.bf16.msra.mxu0 %v708
    %766 = vmatprep.subr.bf16.mxu0 %v713
    %767 = vmatpush1.bf16.msra.mxu0 %v712
    %768 = vmatprep.subr.bf16.mxu0 %v717
    %769 = vmatpush1.bf16.msra.mxu0 %v716
    %770 = vmatprep.subr.bf16.mxu0 %v721
    %771 = vmatpush1.bf16.msra.mxu0 %v720
    %772 = vmatprep.subr.bf16.mxu0 0
    %773 = vmatpush1.bf16.msra.mxu0 0
    %774 = vmatprep.subr.bf16.mxu0 0
    %775 = vmatpush1.bf16.msra.mxu0 0
    %776 = vmatprep.subr.bf16.mxu0 0
    %777 = vmatpush1.bf16.msra.mxu0 0
    %778 = vmatprep.subr.bf16.mxu0 0
    %779 = vmatpush1.bf16.msra.mxu0 0
    %780 = vmatprep.subr.bf16.mxu0 0
    %781 = vmatpush1.bf16.msra.mxu0 0
    %782 = vmatprep.subr.bf16.mxu0 0
    %783 = vmatpush1.bf16.msra.mxu0 0
    %784 = vmatprep.subr.bf16.mxu0 0
    %785 = vmatpush1.bf16.msra.mxu0 0
    %786 = vmatprep.subr.bf16.mxu0 0
    %787 = vmatpush1.bf16.msra.mxu0 0
    %788 = vmatprep.mubr.bf16.mxu0 0
    %789 = vmatmul.mubr.bf16.gmra.mrb[0].mxu0 0
    %v790 = vpop.f32.mrb[0].mxu0
    %v791 = vadd.f32 0.0, %v790
    %v792 = vpop.f32.mrb[0].mxu0
    %v793 = vadd.f32 0.0, %v792
    %v794 = vpop.f32.mrb[0].mxu0
    %v795 = vpop.f32.mrb[0].mxu0
    %796 = vdwg.mxu0
    %797 = vmatprep.subr.bf16.mxu0 %v695
    %798 = vmatpush1.bf16.msra.mxu0 %v694
    %799 = vmatprep.subr.bf16.mxu0 %v699
    %800 = vmatpush1.bf16.msra.mxu0 %v698
    %801 = vmatprep.subr.bf16.mxu0 %v703
    %802 = vmatpush1.bf16.msra.mxu0 %v702
    %803 = vmatprep.subr.bf16.mxu0 %v707
    %804 = vmatpush1.bf16.msra.mxu0 %v706
    %805 = vmatprep.subr.bf16.mxu0 %v711
    %806 = vmatpush1.bf16.msra.mxu0 %v710
    %807 = vmatprep.subr.bf16.mxu0 %v715
    %808 = vmatpush1.bf16.msra.mxu0 %v714
    %809 = vmatprep.subr.bf16.mxu0 %v719
    %810 = vmatpush1.bf16.msra.mxu0 %v718
    %811 = vmatprep.subr.bf16.mxu0 %v723
    %812 = vmatpush1.bf16.msra.mxu0 %v722
    %813 = vmatprep.subr.bf16.mxu0 0
    %814 = vmatpush1.bf16.msra.mxu0 0
    %815 = vmatprep.subr.bf16.mxu0 0
    %816 = vmatpush1.bf16.msra.mxu0 0
    %817 = vmatprep.subr.bf16.mxu0 0
    %818 = vmatpush1.bf16.msra.mxu0 0
    %819 = vmatprep.subr.bf16.mxu0 0
    %820 = vmatpush1.bf16.msra.mxu0 0
    %821 = vmatprep.subr.bf16.mxu0 0
    %822 = vmatpush1.bf16.msra.mxu0 0
    %823 = vmatprep.subr.bf16.mxu0 0
    %824 = vmatpush1.bf16.msra.mxu0 0
    %825 = vmatprep.subr.bf16.mxu0 0
    %826 = vmatpush1.bf16.msra.mxu0 0
    %827 = vmatprep.subr.bf16.mxu0 0
    %828 = vmatpush1.bf16.msra.mxu0 0
    %829 = vmatprep.mubr.bf16.mxu0 0
    %830 = vmatmul.mubr.bf16.gmra.mrb[0].mxu0 0
    %v831 = vpop.f32.mrb[0].mxu0
    %v832 = vadd.f32 0.0, %v831
    %v833 = vpop.f32.mrb[0].mxu0
    %v834 = vadd.f32 0.0, %v833
    %v835 = vpop.f32.mrb[0].mxu0
    %v836 = vpop.f32.mrb[0].mxu0
    %837 = vdwg.mxu0
    %v842 = vrot.slane %v791, 1
    %v843 = vrot.slane %v793, 1
    %v844 = vrot.slane %v832, 1
    %v845 = vrot.slane %v834, 1
    %v846 = vrot.slane %v791, 2
    %v847 = vrot.slane %v793, 2
    %v848 = vrot.slane %v832, 2
    %v849 = vrot.slane %v834, 2
    %v850 = vrot.slane %v791, 3
    %v851 = vrot.slane %v793, 3
    %v852 = vrot.slane %v832, 3
    %v853 = vrot.slane %v834, 3
    %v854 = vrot.slane %v791, 4
    %v855 = vrot.slane %v793, 4
    %v856 = vrot.slane %v832, 4
    %v857 = vrot.slane %v834, 4
    %v858 = vrot.slane %v791, 5
    %v859 = vrot.slane %v793, 5
    %v860 = vrot.slane %v832, 5
    %v861 = vrot.slane %v834, 5
    %v862 = vrot.slane %v791, 6
    %v863 = vrot.slane %v793, 6
    %v864 = vrot.slane %v832, 6
    %v865 = vrot.slane %v834, 6
    %v866 = vrot.slane %v791, 7
    %v867 = vrot.slane %v793, 7
    %v868 = vrot.slane %v832, 7
    %v869 = vrot.slane %v834, 7
    %v902 = vadd.f32 %v388, %v791
    %v903 = vadd.f32 %v390, %v793
    %v904 = vadd.f32 %v461, %v832
    %v905 = vadd.f32 %v463, %v834
    %v906 = vadd.f32 %v392, %v842
    %v907 = vadd.f32 %v394, %v843
    %v908 = vadd.f32 %v465, %v844
    %v909 = vadd.f32 %v467, %v845
    %v910 = vadd.f32 %v398, %v846
    %v911 = vadd.f32 %v400, %v847
    %v912 = vadd.f32 %v471, %v848
    %v913 = vadd.f32 %v473, %v849
    %v914 = vadd.f32 %v402, %v850
    %v915 = vadd.f32 %v404, %v851
    %v916 = vadd.f32 %v475, %v852
    %v917 = vadd.f32 %v477, %v853
    %v918 = vadd.f32 %v408, %v854
    %v919 = vadd.f32 %v410, %v855
    %v920 = vadd.f32 %v481, %v856
    %v921 = vadd.f32 %v483, %v857
    %v922 = vadd.f32 %v412, %v858
    %v923 = vadd.f32 %v414, %v859
    %v924 = vadd.f32 %v485, %v860
    %v925 = vadd.f32 %v487, %v861
    %v926 = vadd.f32 %v418, %v862
    %v927 = vadd.f32 %v420, %v863
    %v928 = vadd.f32 %v491, %v864
    %v929 = vadd.f32 %v493, %v865
    %v930 = vadd.f32 %v422, %v866
    %v931 = vadd.f32 %v424, %v867
    %v932 = vadd.f32 %v495, %v868
    %v933 = vadd.f32 %v497, %v869
    %v934 = vxor.u32 %v902, 2147483648
    %v935 = vxor.u32 %v906, 2147483648
    %v936 = vxor.u32 %v910, 2147483648
    %v937 = vxor.u32 %v914, 2147483648
    %v938 = vxor.u32 %v918, 2147483648
    %v939 = vxor.u32 %v922, 2147483648
    %v940 = vxor.u32 %v926, 2147483648
    %v941 = vxor.u32 %v930, 2147483648
    %v942 = vmul.f32 %v934, 1.442695
    %v943 = vpow.pop %v942
    %v944 = vmul.f32 %v935, 1.442695
    %v945 = vpow.pop %v944
    %v946 = vmul.f32 %v936, 1.442695
    %v947 = vpow.pop %v946
    %v948 = vmul.f32 %v937, 1.442695
    %v949 = vpow.pop %v948
    %v950 = vmul.f32 %v938, 1.442695
    %v951 = vpow.pop %v950
    %v952 = vmul.f32 %v939, 1.442695
    %v953 = vpow.pop %v952
    %v954 = vmul.f32 %v940, 1.442695
    %v955 = vpow.pop %v954
    %v956 = vmul.f32 %v941, 1.442695
    %v957 = vpow.pop %v956
    %v958 = vadd.f32 %v943, 1.0
    %v959 = vadd.f32 %v945, 1.0
    %v960 = vadd.f32 %v947, 1.0
    %v961 = vadd.f32 %v949, 1.0
    %v962 = vadd.f32 %v951, 1.0
    %v963 = vadd.f32 %v953, 1.0
    %v964 = vadd.f32 %v955, 1.0
    %v965 = vadd.f32 %v957, 1.0
    %v966 = vrcp.pop %v958
    %v967 = vmul.f32 1.0, %v966
    %v968 = vrcp.pop %v959
    %v969 = vmul.f32 1.0, %v968
    %v970 = vrcp.pop %v960
    %v971 = vmul.f32 1.0, %v970
    %v972 = vrcp.pop %v961
    %v973 = vmul.f32 1.0, %v972
    %v974 = vrcp.pop %v962
    %v975 = vmul.f32 1.0, %v974
    %v976 = vrcp.pop %v963
    %v977 = vmul.f32 1.0, %v976
    %v978 = vrcp.pop %v964
    %v979 = vmul.f32 1.0, %v978
    %v980 = vrcp.pop %v965
    %v981 = vmul.f32 1.0, %v980
    %v982 = vxor.u32 %v903, 2147483648
    %v983 = vxor.u32 %v907, 2147483648
    %v984 = vxor.u32 %v911, 2147483648
    %v985 = vxor.u32 %v915, 2147483648
    %v986 = vxor.u32 %v919, 2147483648
    %v987 = vxor.u32 %v923, 2147483648
    %v988 = vxor.u32 %v927, 2147483648
    %v989 = vxor.u32 %v931, 2147483648
    %v990 = vmul.f32 %v982, 1.442695
    %v991 = vpow.pop %v990
    %v992 = vmul.f32 %v983, 1.442695
    %v993 = vpow.pop %v992
    %v994 = vmul.f32 %v984, 1.442695
    %v995 = vpow.pop %v994
    %v996 = vmul.f32 %v985, 1.442695
    %v997 = vpow.pop %v996
    %v998 = vmul.f32 %v986, 1.442695
    %v999 = vpow.pop %v998
    %v1000 = vmul.f32 %v987, 1.442695
    %v1001 = vpow.pop %v1000
    %v1002 = vmul.f32 %v988, 1.442695
    %v1003 = vpow.pop %v1002
    %v1004 = vmul.f32 %v989, 1.442695
    %v1005 = vpow.pop %v1004
    %v1006 = vadd.f32 %v991, 1.0
    %v1007 = vadd.f32 %v993, 1.0
    %v1008 = vadd.f32 %v995, 1.0
    %v1009 = vadd.f32 %v997, 1.0
    %v1010 = vadd.f32 %v999, 1.0
    %v1011 = vadd.f32 %v1001, 1.0
    %v1012 = vadd.f32 %v1003, 1.0
    %v1013 = vadd.f32 %v1005, 1.0
    %v1014 = vrcp.pop %v1006
    %v1015 = vmul.f32 1.0, %v1014
    %v1016 = vrcp.pop %v1007
    %v1017 = vmul.f32 1.0, %v1016
    %v1018 = vrcp.pop %v1008
    %v1019 = vmul.f32 1.0, %v1018
    %v1020 = vrcp.pop %v1009
    %v1021 = vmul.f32 1.0, %v1020
    %v1022 = vrcp.pop %v1010
    %v1023 = vmul.f32 1.0, %v1022
    %v1024 = vrcp.pop %v1011
    %v1025 = vmul.f32 1.0, %v1024
    %v1026 = vrcp.pop %v1012
    %v1027 = vmul.f32 1.0, %v1026
    %v1028 = vrcp.pop %v1013
    %v1029 = vmul.f32 1.0, %v1028
    %v1030 = vtanh.pop %v904
    %v1031 = vtanh.pop %v908
    %v1032 = vtanh.pop %v912
    %v1033 = vtanh.pop %v916
    %v1034 = vtanh.pop %v920
    %v1035 = vtanh.pop %v924
    %v1036 = vtanh.pop %v928
    %v1037 = vtanh.pop %v932
    %v1038 = vxor.u32 %v905, 2147483648
    %v1039 = vxor.u32 %v909, 2147483648
    %v1040 = vxor.u32 %v913, 2147483648
    %v1041 = vxor.u32 %v917, 2147483648
    %v1042 = vxor.u32 %v921, 2147483648
    %v1043 = vxor.u32 %v925, 2147483648
    %v1044 = vxor.u32 %v929, 2147483648
    %v1045 = vxor.u32 %v933, 2147483648
    %v1046 = vmul.f32 %v1038, 1.442695
    %v1047 = vpow.pop %v1046
    %v1048 = vmul.f32 %v1039, 1.442695
    %v1049 = vpow.pop %v1048
    %v1050 = vmul.f32 %v1040, 1.442695
    %v1051 = vpow.pop %v1050
    %v1052 = vmul.f32 %v1041, 1.442695
    %v1053 = vpow.pop %v1052
    %v1054 = vmul.f32 %v1042, 1.442695
    %v1055 = vpow.pop %v1054
    %v1056 = vmul.f32 %v1043, 1.442695
    %v1057 = vpow.pop %v1056
    %v1058 = vmul.f32 %v1044, 1.442695
    %v1059 = vpow.pop %v1058
    %v1060 = vmul.f32 %v1045, 1.442695
    %v1061 = vpow.pop %v1060
    %v1062 = vadd.f32 %v1047, 1.0
    %v1063 = vadd.f32 %v1049, 1.0
    %v1064 = vadd.f32 %v1051, 1.0
    %v1065 = vadd.f32 %v1053, 1.0
    %v1066 = vadd.f32 %v1055, 1.0
    %v1067 = vadd.f32 %v1057, 1.0
    %v1068 = vadd.f32 %v1059, 1.0
    %v1069 = vadd.f32 %v1061, 1.0
    %v1070 = vrcp.pop %v1062
    %v1071 = vmul.f32 1.0, %v1070
    %v1072 = vrcp.pop %v1063
    %v1073 = vmul.f32 1.0, %v1072
    %v1074 = vrcp.pop %v1064
    %v1075 = vmul.f32 1.0, %v1074
    %v1076 = vrcp.pop %v1065
    %v1077 = vmul.f32 1.0, %v1076
    %v1078 = vrcp.pop %v1066
    %v1079 = vmul.f32 1.0, %v1078
    %v1080 = vrcp.pop %v1067
    %v1081 = vmul.f32 1.0, %v1080
    %v1082 = vrcp.pop %v1068
    %v1083 = vmul.f32 1.0, %v1082
    %v1084 = vrcp.pop %v1069
    %v1085 = vmul.f32 1.0, %v1084
    %v1086 = vmul.f32 %v1015, 0.0
    %v1087 = vmul.f32 %v1017, 0.0
    %v1088 = vmul.f32 %v1019, 0.0
    %v1089 = vmul.f32 %v1021, 0.0
    %v1090 = vmul.f32 %v1023, 0.0
    %v1091 = vmul.f32 %v1025, 0.0
    %v1092 = vmul.f32 %v1027, 0.0
    %v1093 = vmul.f32 %v1029, 0.0
    %v1094 = vmul.f32 %v967, %v1030
    %v1095 = vmul.f32 %v969, %v1031
    %v1096 = vmul.f32 %v971, %v1032
    %v1097 = vmul.f32 %v973, %v1033
    %v1098 = vmul.f32 %v975, %v1034
    %v1099 = vmul.f32 %v977, %v1035
    %v1100 = vmul.f32 %v979, %v1036
    %v1101 = vmul.f32 %v981, %v1037
    %v1102 = vadd.f32 %v1086, %v1094
    %v1103 = vadd.f32 %v1087, %v1095
    %v1104 = vadd.f32 %v1088, %v1096
    %v1105 = vadd.f32 %v1089, %v1097
    %v1106 = vadd.f32 %v1090, %v1098
    %v1107 = vadd.f32 %v1091, %v1099
    %v1108 = vadd.f32 %v1092, %v1100
    %v1109 = vadd.f32 %v1093, %v1101
    %v1110 = vtanh.pop %v1102
    %v1111 = vtanh.pop %v1103
    %v1112 = vtanh.pop %v1104
    %v1113 = vtanh.pop %v1105
    %v1114 = vtanh.pop %v1106
    %v1115 = vtanh.pop %v1107
    %v1116 = vtanh.pop %v1108
    %v1117 = vtanh.pop %v1109
    %v1118 = vmul.f32 %v1071, %v1110
    %v1119 = vmul.f32 %v1073, %v1111
    %v1120 = vmul.f32 %v1075, %v1112
    %v1121 = vmul.f32 %v1077, %v1113
    %v1122 = vmul.f32 %v1079, %v1114
    %v1123 = vmul.f32 %v1081, %v1115
    %v1124 = vmul.f32 %v1083, %v1116
    %v1125 = vmul.f32 %v1085, %v1117
    %v1126 = vpack.c.bf16 %v1118, %v1118
    %v1127 = vpack.c.bf16 %v1119, %v1119
    %v1128 = vpack.c.bf16 %v1120, %v1120
    %v1129 = vpack.c.bf16 %v1121, %v1121
    %v1130 = vpack.c.bf16 %v1122, %v1122
    %v1131 = vpack.c.bf16 %v1123, %v1123
    %v1132 = vpack.c.bf16 %v1124, %v1124
    %v1133 = vpack.c.bf16 %v1125, %v1125
    %v1166 = vunpack.c.l.b16 %v563
    %v1167 = vunpack.c.h.b16 %v563
    %v1168 = vunpack.c.l.b16 %v564
    %v1169 = vunpack.c.h.b16 %v564
    %v1170 = vunpack.c.l.b16 %v565
    %v1171 = vunpack.c.h.b16 %v565
    %v1172 = vunpack.c.l.b16 %v566
    %v1173 = vunpack.c.h.b16 %v566
    %v1174 = vunpack.c.l.b16 %v567
    %v1175 = vunpack.c.h.b16 %v567
    %v1176 = vunpack.c.l.b16 %v568
    %v1177 = vunpack.c.h.b16 %v568
    %v1178 = vunpack.c.l.b16 %v569
    %v1179 = vunpack.c.h.b16 %v569
    %v1180 = vunpack.c.l.b16 %v570
    %v1181 = vunpack.c.h.b16 %v570
    %v1182 = vunpack.c.l.b16 %v571
    %v1183 = vunpack.c.h.b16 %v571
    %v1184 = vunpack.c.l.b16 %v572
    %v1185 = vunpack.c.h.b16 %v572
    %v1186 = vunpack.c.l.b16 %v573
    %v1187 = vunpack.c.h.b16 %v573
    %v1188 = vunpack.c.l.b16 %v574
    %v1189 = vunpack.c.h.b16 %v574
    %v1190 = vunpack.c.l.b16 %v575
    %v1191 = vunpack.c.h.b16 %v575
    %v1192 = vunpack.c.l.b16 %v576
    %v1193 = vunpack.c.h.b16 %v576
    %v1194 = vunpack.c.l.b16 %v577
    %v1195 = vunpack.c.h.b16 %v577
    %v1196 = vunpack.c.l.b16 %v578
    %v1197 = vunpack.c.h.b16 %v578
    %v1198 = vunpack.c.l.b16 %v579
    %v1199 = vunpack.c.h.b16 %v579
    %v1200 = vunpack.c.l.b16 %v580
    %v1201 = vunpack.c.h.b16 %v580
    %v1202 = vunpack.c.l.b16 %v581
    %v1203 = vunpack.c.h.b16 %v581
    %v1204 = vunpack.c.l.b16 %v582
    %v1205 = vunpack.c.h.b16 %v582
    %v1206 = vunpack.c.l.b16 %v583
    %v1207 = vunpack.c.h.b16 %v583
    %v1208 = vunpack.c.l.b16 %v584
    %v1209 = vunpack.c.h.b16 %v584
    %v1210 = vunpack.c.l.b16 %v585
    %v1211 = vunpack.c.h.b16 %v585
    %v1212 = vunpack.c.l.b16 %v586
    %v1213 = vunpack.c.h.b16 %v586
    %v1214 = vunpack.c.l.b16 %v587
    %v1215 = vunpack.c.h.b16 %v587
    %v1216 = vunpack.c.l.b16 %v588
    %v1217 = vunpack.c.h.b16 %v588
    %v1218 = vunpack.c.l.b16 %v589
    %v1219 = vunpack.c.h.b16 %v589
    %v1220 = vunpack.c.l.b16 %v590
    %v1221 = vunpack.c.h.b16 %v590
    %v1222 = vunpack.c.l.b16 %v591
    %v1223 = vunpack.c.h.b16 %v591
    %v1224 = vunpack.c.l.b16 %v592
    %v1225 = vunpack.c.h.b16 %v592
    %v1226 = vunpack.c.l.b16 %v593
    %v1227 = vunpack.c.h.b16 %v593
    %v1228 = vunpack.c.l.b16 %v594
    %v1229 = vunpack.c.h.b16 %v594
    %v1230 = vpack.c.b16 %v1170, %v1166
    %v1231 = vpack.c.b16 %v1171, %v1167
    %v1232 = vpack.c.b16 %v1172, %v1168
    %v1233 = vpack.c.b16 %v1173, %v1169
    %v1234 = vpack.c.b16 %v1178, %v1174
    %v1235 = vpack.c.b16 %v1179, %v1175
    %v1236 = vpack.c.b16 %v1180, %v1176
    %v1237 = vpack.c.b16 %v1181, %v1177
    %v1238 = vpack.c.b16 %v1186, %v1182
    %v1239 = vpack.c.b16 %v1187, %v1183
    %v1240 = vpack.c.b16 %v1188, %v1184
    %v1241 = vpack.c.b16 %v1189, %v1185
    %v1242 = vpack.c.b16 %v1194, %v1190
    %v1243 = vpack.c.b16 %v1195, %v1191
    %v1244 = vpack.c.b16 %v1196, %v1192
    %v1245 = vpack.c.b16 %v1197, %v1193
    %v1246 = vpack.c.b16 %v1202, %v1198
    %v1247 = vpack.c.b16 %v1203, %v1199
    %v1248 = vpack.c.b16 %v1204, %v1200
    %v1249 = vpack.c.b16 %v1205, %v1201
    %v1250 = vpack.c.b16 %v1210, %v1206
    %v1251 = vpack.c.b16 %v1211, %v1207
    %v1252 = vpack.c.b16 %v1212, %v1208
    %v1253 = vpack.c.b16 %v1213, %v1209
    %v1254 = vpack.c.b16 %v1218, %v1214
    %v1255 = vpack.c.b16 %v1219, %v1215
    %v1256 = vpack.c.b16 %v1220, %v1216
    %v1257 = vpack.c.b16 %v1221, %v1217
    %v1258 = vpack.c.b16 %v1226, %v1222
    %v1259 = vpack.c.b16 %v1227, %v1223
    %v1260 = vpack.c.b16 %v1228, %v1224
    %v1261 = vpack.c.b16 %v1229, %v1225
    %1294 = vmatprep.subr.bf16.mxu0 %v1231
    %1295 = vmatpush1.bf16.msra.mxu0 %v1230
    %1296 = vmatprep.subr.bf16.mxu0 %v1235
    %1297 = vmatpush1.bf16.msra.mxu0 %v1234
    %1298 = vmatprep.subr.bf16.mxu0 %v1239
    %1299 = vmatpush1.bf16.msra.mxu0 %v1238
    %1300 = vmatprep.subr.bf16.mxu0 %v1243
    %1301 = vmatpush1.bf16.msra.mxu0 %v1242
    %1302 = vmatprep.subr.bf16.mxu0 %v1247
    %1303 = vmatpush1.bf16.msra.mxu0 %v1246
    %1304 = vmatprep.subr.bf16.mxu0 %v1251
    %1305 = vmatpush1.bf16.msra.mxu0 %v1250
    %1306 = vmatprep.subr.bf16.mxu0 %v1255
    %1307 = vmatpush1.bf16.msra.mxu0 %v1254
    %1308 = vmatprep.subr.bf16.mxu0 %v1259
    %1309 = vmatpush1.bf16.msra.mxu0 %v1258
    %1310 = vmatprep.subr.bf16.mxu0 0
    %1311 = vmatpush1.bf16.msra.mxu0 0
    %1312 = vmatprep.subr.bf16.mxu0 0
    %1313 = vmatpush1.bf16.msra.mxu0 0
    %1314 = vmatprep.subr.bf16.mxu0 0
    %1315 = vmatpush1.bf16.msra.mxu0 0
    %1316 = vmatprep.subr.bf16.mxu0 0
    %1317 = vmatpush1.bf16.msra.mxu0 0
    %1318 = vmatprep.subr.bf16.mxu0 0
    %1319 = vmatpush1.bf16.msra.mxu0 0
    %1320 = vmatprep.subr.bf16.mxu0 0
    %1321 = vmatpush1.bf16.msra.mxu0 0
    %1322 = vmatprep.subr.bf16.mxu0 0
    %1323 = vmatpush1.bf16.msra.mxu0 0
    %1324 = vmatprep.subr.bf16.mxu0 0
    %1325 = vmatpush1.bf16.msra.mxu0 0
    %1326 = vmatprep.mubr.bf16.mxu0 0
    %1327 = vmatmul.mubr.bf16.gmra.mrb[0].mxu0 0
    %v1328 = vpop.f32.mrb[0].mxu0
    %v1329 = vadd.f32 0.0, %v1328
    %v1330 = vpop.f32.mrb[0].mxu0
    %v1331 = vadd.f32 0.0, %v1330
    %v1332 = vpop.f32.mrb[0].mxu0
    %v1333 = vpop.f32.mrb[0].mxu0
    %1334 = vdwg.mxu0
    %1335 = vmatprep.subr.bf16.mxu0 %v1233
    %1336 = vmatpush1.bf16.msra.mxu0 %v1232
    %1337 = vmatprep.subr.bf16.mxu0 %v1237
    %1338 = vmatpush1.bf16.msra.mxu0 %v1236
    %1339 = vmatprep.subr.bf16.mxu0 %v1241
    %1340 = vmatpush1.bf16.msra.mxu0 %v1240
    %1341 = vmatprep.subr.bf16.mxu0 %v1245
    %1342 = vmatpush1.bf16.msra.mxu0 %v1244
    %1343 = vmatprep.subr.bf16.mxu0 %v1249
    %1344 = vmatpush1.bf16.msra.mxu0 %v1248
    %1345 = vmatprep.subr.bf16.mxu0 %v1253
    %1346 = vmatpush1.bf16.msra.mxu0 %v1252
    %1347 = vmatprep.subr.bf16.mxu0 %v1257
    %1348 = vmatpush1.bf16.msra.mxu0 %v1256
    %1349 = vmatprep.subr.bf16.mxu0 %v1261
    %1350 = vmatpush1.bf16.msra.mxu0 %v1260
    %1351 = vmatprep.subr.bf16.mxu0 0
    %1352 = vmatpush1.bf16.msra.mxu0 0
    %1353 = vmatprep.subr.bf16.mxu0 0
    %1354 = vmatpush1.bf16.msra.mxu0 0
    %1355 = vmatprep.subr.bf16.mxu0 0
    %1356 = vmatpush1.bf16.msra.mxu0 0
    %1357 = vmatprep.subr.bf16.mxu0 0
    %1358 = vmatpush1.bf16.msra.mxu0 0
    %1359 = vmatprep.subr.bf16.mxu0 0
    %1360 = vmatpush1.bf16.msra.mxu0 0
    %1361 = vmatprep.subr.bf16.mxu0 0
    %1362 = vmatpush1.bf16.msra.mxu0 0
    %1363 = vmatprep.subr.bf16.mxu0 0
    %1364 = vmatpush1.bf16.msra.mxu0 0
    %1365 = vmatprep.subr.bf16.mxu0 0
    %1366 = vmatpush1.bf16.msra.mxu0 0
    %1367 = vmatprep.mubr.bf16.mxu0 0
    %1368 = vmatmul.mubr.bf16.gmra.mrb[0].mxu0 0
    %v1369 = vpop.f32.mrb[0].mxu0
    %v1370 = vadd.f32 0.0, %v1369
    %v1371 = vpop.f32.mrb[0].mxu0
    %v1372 = vadd.f32 0.0, %v1371
    %v1373 = vpop.f32.mrb[0].mxu0
    %v1374 = vpop.f32.mrb[0].mxu0
    %1375 = vdwg.mxu0
    %v1384 = vunpack.c.l.b16 %v1126
    %v1385 = vunpack.c.l.b16 %v1127
    %v1386 = vunpack.c.l.b16 %v1128
    %v1387 = vunpack.c.l.b16 %v1129
    %v1388 = vunpack.c.l.b16 %v1130
    %v1389 = vunpack.c.l.b16 %v1131
    %v1390 = vunpack.c.l.b16 %v1132
    %v1391 = vunpack.c.l.b16 %v1133
    %v1392 = vrot.slane %v1385, 7
    %vm1393 = vcmask 1041409
    %v1394 = vsel %vm1393, %v1392, %v1384
    %v1395 = vrot.slane %v1386, 6
    %vm1396 = vcmask 1042434
    %v1397 = vsel %vm1396, %v1395, %v1394
    %v1398 = vrot.slane %v1387, 5
    %vm1399 = vcmask 1043459
    %v1400 = vsel %vm1399, %v1398, %v1397
    %v1401 = vrot.slane %v1388, 4
    %vm1402 = vcmask 1044484
    %v1403 = vsel %vm1402, %v1401, %v1400
    %v1404 = vrot.slane %v1389, 3
    %vm1405 = vcmask 1045509
    %v1406 = vsel %vm1405, %v1404, %v1403
    %v1407 = vrot.slane %v1390, 2
    %vm1408 = vcmask 1046534
    %v1409 = vsel %vm1408, %v1407, %v1406
    %v1410 = vrot.slane %v1391, 1
    %vm1411 = vcmask 1047559
    %v1412 = vsel %vm1411, %v1410, %v1409
    %v1413 = vpack.c.b16 %v1412, %v1412
    %v1447 = vunpack.c.l.b16 %v531
    %v1448 = vunpack.c.h.b16 %v531
    %v1449 = vunpack.c.l.b16 %v532
    %v1450 = vunpack.c.h.b16 %v532
    %v1451 = vunpack.c.l.b16 %v533
    %v1452 = vunpack.c.h.b16 %v533
    %v1453 = vunpack.c.l.b16 %v534
    %v1454 = vunpack.c.h.b16 %v534
    %v1455 = vunpack.c.l.b16 %v535
    %v1456 = vunpack.c.h.b16 %v535
    %v1457 = vunpack.c.l.b16 %v536
    %v1458 = vunpack.c.h.b16 %v536
    %v1459 = vunpack.c.l.b16 %v537
    %v1460 = vunpack.c.h.b16 %v537
    %v1461 = vunpack.c.l.b16 %v538
    %v1462 = vunpack.c.h.b16 %v538
    %v1463 = vunpack.c.l.b16 %v539
    %v1464 = vunpack.c.h.b16 %v539
    %v1465 = vunpack.c.l.b16 %v540
    %v1466 = vunpack.c.h.b16 %v540
    %v1467 = vunpack.c.l.b16 %v541
    %v1468 = vunpack.c.h.b16 %v541
    %v1469 = vunpack.c.l.b16 %v542
    %v1470 = vunpack.c.h.b16 %v542
    %v1471 = vunpack.c.l.b16 %v543
    %v1472 = vunpack.c.h.b16 %v543
    %v1473 = vunpack.c.l.b16 %v544
    %v1474 = vunpack.c.h.b16 %v544
    %v1475 = vunpack.c.l.b16 %v545
    %v1476 = vunpack.c.h.b16 %v545
    %v1477 = vunpack.c.l.b16 %v546
    %v1478 = vunpack.c.h.b16 %v546
    %v1479 = vunpack.c.l.b16 %v547
    %v1480 = vunpack.c.h.b16 %v547
    %v1481 = vunpack.c.l.b16 %v548
    %v1482 = vunpack.c.h.b16 %v548
    %v1483 = vunpack.c.l.b16 %v549
    %v1484 = vunpack.c.h.b16 %v549
    %v1485 = vunpack.c.l.b16 %v550
    %v1486 = vunpack.c.h.b16 %v550
    %v1487 = vunpack.c.l.b16 %v551
    %v1488 = vunpack.c.h.b16 %v551
    %v1489 = vunpack.c.l.b16 %v552
    %v1490 = vunpack.c.h.b16 %v552
    %v1491 = vunpack.c.l.b16 %v553
    %v1492 = vunpack.c.h.b16 %v553
    %v1493 = vunpack.c.l.b16 %v554
    %v1494 = vunpack.c.h.b16 %v554
    %v1495 = vunpack.c.l.b16 %v555
    %v1496 = vunpack.c.h.b16 %v555
    %v1497 = vunpack.c.l.b16 %v556
    %v1498 = vunpack.c.h.b16 %v556
    %v1499 = vunpack.c.l.b16 %v557
    %v1500 = vunpack.c.h.b16 %v557
    %v1501 = vunpack.c.l.b16 %v558
    %v1502 = vunpack.c.h.b16 %v558
    %v1503 = vunpack.c.l.b16 %v559
    %v1504 = vunpack.c.h.b16 %v559
    %v1505 = vunpack.c.l.b16 %v560
    %v1506 = vunpack.c.h.b16 %v560
    %v1507 = vunpack.c.l.b16 %v561
    %v1508 = vunpack.c.h.b16 %v561
    %v1509 = vunpack.c.l.b16 %v562
    %v1510 = vunpack.c.h.b16 %v562
    %v1511 = vpack.c.b16 %v1451, %v1447
    %v1512 = vpack.c.b16 %v1452, %v1448
    %v1513 = vpack.c.b16 %v1453, %v1449
    %v1514 = vpack.c.b16 %v1454, %v1450
    %v1515 = vpack.c.b16 %v1459, %v1455
    %v1516 = vpack.c.b16 %v1460, %v1456
    %v1517 = vpack.c.b16 %v1461, %v1457
    %v1518 = vpack.c.b16 %v1462, %v1458
    %v1519 = vpack.c.b16 %v1467, %v1463
    %v1520 = vpack.c.b16 %v1468, %v1464
    %v1521 = vpack.c.b16 %v1469, %v1465
    %v1522 = vpack.c.b16 %v1470, %v1466
    %v1523 = vpack.c.b16 %v1475, %v1471
    %v1524 = vpack.c.b16 %v1476, %v1472
    %v1525 = vpack.c.b16 %v1477, %v1473
    %v1526 = vpack.c.b16 %v1478, %v1474
    %v1527 = vpack.c.b16 %v1483, %v1479
    %v1528 = vpack.c.b16 %v1484, %v1480
    %v1529 = vpack.c.b16 %v1485, %v1481
    %v1530 = vpack.c.b16 %v1486, %v1482
    %v1531 = vpack.c.b16 %v1491, %v1487
    %v1532 = vpack.c.b16 %v1492, %v1488
    %v1533 = vpack.c.b16 %v1493, %v1489
    %v1534 = vpack.c.b16 %v1494, %v1490
    %v1535 = vpack.c.b16 %v1499, %v1495
    %v1536 = vpack.c.b16 %v1500, %v1496
    %v1537 = vpack.c.b16 %v1501, %v1497
    %v1538 = vpack.c.b16 %v1502, %v1498
    %v1539 = vpack.c.b16 %v1507, %v1503
    %v1540 = vpack.c.b16 %v1508, %v1504
    %v1541 = vpack.c.b16 %v1509, %v1505
    %v1542 = vpack.c.b16 %v1510, %v1506
    %1575 = vmatprep.subr.bf16.mxu0 %v1512
    %1576 = vmatpush1.bf16.msra.mxu0 %v1511
    %1577 = vmatprep.subr.bf16.mxu0 %v1516
    %1578 = vmatpush1.bf16.msra.mxu0 %v1515
    %1579 = vmatprep.subr.bf16.mxu0 %v1520
    %1580 = vmatpush1.bf16.msra.mxu0 %v1519
    %1581 = vmatprep.subr.bf16.mxu0 %v1524
    %1582 = vmatpush1.bf16.msra.mxu0 %v1523
    %1583 = vmatprep.subr.bf16.mxu0 %v1528
    %1584 = vmatpush1.bf16.msra.mxu0 %v1527
    %1585 = vmatprep.subr.bf16.mxu0 %v1532
    %1586 = vmatpush1.bf16.msra.mxu0 %v1531
    %1587 = vmatprep.subr.bf16.mxu0 %v1536
    %1588 = vmatpush1.bf16.msra.mxu0 %v1535
    %1589 = vmatprep.subr.bf16.mxu0 %v1540
    %1590 = vmatpush1.bf16.msra.mxu0 %v1539
    %1591 = vmatprep.subr.bf16.mxu0 0
    %1592 = vmatpush1.bf16.msra.mxu0 0
    %1593 = vmatprep.subr.bf16.mxu0 0
    %1594 = vmatpush1.bf16.msra.mxu0 0
    %1595 = vmatprep.subr.bf16.mxu0 0
    %1596 = vmatpush1.bf16.msra.mxu0 0
    %1597 = vmatprep.subr.bf16.mxu0 0
    %1598 = vmatpush1.bf16.msra.mxu0 0
    %1599 = vmatprep.subr.bf16.mxu0 0
    %1600 = vmatpush1.bf16.msra.mxu0 0
    %1601 = vmatprep.subr.bf16.mxu0 0
    %1602 = vmatpush1.bf16.msra.mxu0 0
    %1603 = vmatprep.subr.bf16.mxu0 0
    %1604 = vmatpush1.bf16.msra.mxu0 0
    %1605 = vmatprep.subr.bf16.mxu0 0
    %1606 = vmatpush1.bf16.msra.mxu0 0
    %1607 = vmatprep.mubr.bf16.mxu0 0
    %1608 = vmatmul.mubr.bf16.gmra.mrb[0].mxu0 %v1413
    %v1609 = vpop.f32.mrb[0].mxu0
    %v1610 = vadd.f32 %v1329, %v1609
    %v1611 = vpop.f32.mrb[0].mxu0
    %v1612 = vadd.f32 %v1331, %v1611
    %v1613 = vpop.f32.mrb[0].mxu0
    %v1614 = vpop.f32.mrb[0].mxu0
    %1615 = vdwg.mxu0
    %1616 = vmatprep.subr.bf16.mxu0 %v1514
    %1617 = vmatpush1.bf16.msra.mxu0 %v1513
    %1618 = vmatprep.subr.bf16.mxu0 %v1518
    %1619 = vmatpush1.bf16.msra.mxu0 %v1517
    %1620 = vmatprep.subr.bf16.mxu0 %v1522
    %1621 = vmatpush1.bf16.msra.mxu0 %v1521
    %1622 = vmatprep.subr.bf16.mxu0 %v1526
    %1623 = vmatpush1.bf16.msra.mxu0 %v1525
    %1624 = vmatprep.subr.bf16.mxu0 %v1530
    %1625 = vmatpush1.bf16.msra.mxu0 %v1529
    %1626 = vmatprep.subr.bf16.mxu0 %v1534
    %1627 = vmatpush1.bf16.msra.mxu0 %v1533
    %1628 = vmatprep.subr.bf16.mxu0 %v1538
    %1629 = vmatpush1.bf16.msra.mxu0 %v1537
    %1630 = vmatprep.subr.bf16.mxu0 %v1542
    %1631 = vmatpush1.bf16.msra.mxu0 %v1541
    %1632 = vmatprep.subr.bf16.mxu0 0
    %1633 = vmatpush1.bf16.msra.mxu0 0
    %1634 = vmatprep.subr.bf16.mxu0 0
    %1635 = vmatpush1.bf16.msra.mxu0 0
    %1636 = vmatprep.subr.bf16.mxu0 0
    %1637 = vmatpush1.bf16.msra.mxu0 0
    %1638 = vmatprep.subr.bf16.mxu0 0
    %1639 = vmatpush1.bf16.msra.mxu0 0
    %1640 = vmatprep.subr.bf16.mxu0 0
    %1641 = vmatpush1.bf16.msra.mxu0 0
    %1642 = vmatprep.subr.bf16.mxu0 0
    %1643 = vmatpush1.bf16.msra.mxu0 0
    %1644 = vmatprep.subr.bf16.mxu0 0
    %1645 = vmatpush1.bf16.msra.mxu0 0
    %1646 = vmatprep.subr.bf16.mxu0 0
    %1647 = vmatpush1.bf16.msra.mxu0 0
    %1648 = vmatprep.mubr.bf16.mxu0 0
    %1649 = vmatmul.mubr.bf16.gmra.mrb[0].mxu0 %v1413
    %v1650 = vpop.f32.mrb[0].mxu0
    %v1651 = vadd.f32 %v1370, %v1650
    %v1652 = vpop.f32.mrb[0].mxu0
    %v1653 = vadd.f32 %v1372, %v1652
    %v1654 = vpop.f32.mrb[0].mxu0
    %v1655 = vpop.f32.mrb[0].mxu0
    %1656 = vdwg.mxu0
    %v1658 = vlaneseq
    %v1659 = vshrl.u32 %v1658, 7
    %v1660 = vsub.s32 0, %v1659
    %v1661 = vrot.slane %v595, %v1660
    %v1662 = vlaneseq
    %v1663 = vshrl.u32 %v1662, 7
    %v1664 = vsub.s32 1, %v1663
    %v1665 = vrot.slane %v595, %v1664
    %v1666 = vlaneseq
    %v1667 = vshrl.u32 %v1666, 7
    %v1668 = vsub.s32 2, %v1667
    %v1669 = vrot.slane %v595, %v1668
    %v1670 = vlaneseq
    %v1671 = vshrl.u32 %v1670, 7
    %v1672 = vsub.s32 3, %v1671
    %v1673 = vrot.slane %v595, %v1672
    %v1678 = vadd.f32 %v1610, %v1661
    %v1679 = vadd.f32 %v1612, %v1665
    %v1680 = vadd.f32 %v1651, %v1669
    %v1681 = vadd.f32 %v1653, %v1673
    %v1682 = vxor.u32 %v1678, 2147483648
    %v1683 = vmul.f32 %v1682, 1.442695
    %v1684 = vpow.pop %v1683
    %v1685 = vadd.f32 %v1684, 1.0
    %v1686 = vrcp.pop %v1685
    %v1687 = vmul.f32 1.0, %v1686
    %v1688 = vxor.u32 %v1679, 2147483648
    %v1689 = vmul.f32 %v1688, 1.442695
    %v1690 = vpow.pop %v1689
    %v1691 = vadd.f32 %v1690, 1.0
    %v1692 = vrcp.pop %v1691
    %v1693 = vmul.f32 1.0, %v1692
    %v1694 = vtanh.pop %v1680
    %v1695 = vxor.u32 %v1681, 2147483648
    %v1696 = vmul.f32 %v1695, 1.442695
    %v1697 = vpow.pop %v1696
    %v1698 = vadd.f32 %v1697, 1.0
    %v1699 = vrcp.pop %v1698
    %v1700 = vmul.f32 1.0, %v1699
    %v1701 = vmul.f32 %v1693, 0.0
    %v1702 = vmul.f32 %v1687, %v1694
    %v1703 = vadd.f32 %v1701, %v1702
    %v1704 = vtanh.pop %v1703
    %v1705 = vmul.f32 %v1700, %v1704
    %1706 = vmatprep.subr.bf16.mxu0 %v693
    %1707 = vmatpush1.bf16.msra.mxu0 %v692
    %1708 = vmatprep.subr.bf16.mxu0 %v697
    %1709 = vmatpush1.bf16.msra.mxu0 %v696
    %1710 = vmatprep.subr.bf16.mxu0 %v701
    %1711 = vmatpush1.bf16.msra.mxu0 %v700
    %1712 = vmatprep.subr.bf16.mxu0 %v705
    %1713 = vmatpush1.bf16.msra.mxu0 %v704
    %1714 = vmatprep.subr.bf16.mxu0 %v709
    %1715 = vmatpush1.bf16.msra.mxu0 %v708
    %1716 = vmatprep.subr.bf16.mxu0 %v713
    %1717 = vmatpush1.bf16.msra.mxu0 %v712
    %1718 = vmatprep.subr.bf16.mxu0 %v717
    %1719 = vmatpush1.bf16.msra.mxu0 %v716
    %1720 = vmatprep.subr.bf16.mxu0 %v721
    %1721 = vmatpush1.bf16.msra.mxu0 %v720
    %1722 = vmatprep.subr.bf16.mxu0 0
    %1723 = vmatpush1.bf16.msra.mxu0 0
    %1724 = vmatprep.subr.bf16.mxu0 0
    %1725 = vmatpush1.bf16.msra.mxu0 0
    %1726 = vmatprep.subr.bf16.mxu0 0
    %1727 = vmatpush1.bf16.msra.mxu0 0
    %1728 = vmatprep.subr.bf16.mxu0 0
    %1729 = vmatpush1.bf16.msra.mxu0 0
    %1730 = vmatprep.subr.bf16.mxu0 0
    %1731 = vmatpush1.bf16.msra.mxu0 0
    %1732 = vmatprep.subr.bf16.mxu0 0
    %1733 = vmatpush1.bf16.msra.mxu0 0
    %1734 = vmatprep.subr.bf16.mxu0 0
    %1735 = vmatpush1.bf16.msra.mxu0 0
    %1736 = vmatprep.subr.bf16.mxu0 0
    %1737 = vmatpush1.bf16.msra.mxu0 0
    %1738 = vmatprep.mubr.bf16.mxu0 0
    %1739 = vmatmul.mubr.bf16.gmra.mrb[0].mxu0 %v1413
    %v1740 = vpop.f32.mrb[0].mxu0
    %v1741 = vadd.f32 0.0, %v1740
    %v1742 = vpop.f32.mrb[0].mxu0
    %v1743 = vadd.f32 0.0, %v1742
    %v1744 = vpop.f32.mrb[0].mxu0
    %v1745 = vpop.f32.mrb[0].mxu0
    %1746 = vdwg.mxu0
    %1747 = vmatprep.subr.bf16.mxu0 %v695
    %1748 = vmatpush1.bf16.msra.mxu0 %v694
    %1749 = vmatprep.subr.bf16.mxu0 %v699
    %1750 = vmatpush1.bf16.msra.mxu0 %v698
    %1751 = vmatprep.subr.bf16.mxu0 %v703
    %1752 = vmatpush1.bf16.msra.mxu0 %v702
    %1753 = vmatprep.subr.bf16.mxu0 %v707
    %1754 = vmatpush1.bf16.msra.mxu0 %v706
    %1755 = vmatprep.subr.bf16.mxu0 %v711
    %1756 = vmatpush1.bf16.msra.mxu0 %v710
    %1757 = vmatprep.subr.bf16.mxu0 %v715
    %1758 = vmatpush1.bf16.msra.mxu0 %v714
    %1759 = vmatprep.subr.bf16.mxu0 %v719
    %1760 = vmatpush1.bf16.msra.mxu0 %v718
    %1761 = vmatprep.subr.bf16.mxu0 %v723
    %1762 = vmatpush1.bf16.msra.mxu0 %v722
    %1763 = vmatprep.subr.bf16.mxu0 0
    %1764 = vmatpush1.bf16.msra.mxu0 0
    %1765 = vmatprep.subr.bf16.mxu0 0
    %1766 = vmatpush1.bf16.msra.mxu0 0
    %1767 = vmatprep.subr.bf16.mxu0 0
    %1768 = vmatpush1.bf16.msra.mxu0 0
    %1769 = vmatprep.subr.bf16.mxu0 0
    %1770 = vmatpush1.bf16.msra.mxu0 0
    %1771 = vmatprep.subr.bf16.mxu0 0
    %1772 = vmatpush1.bf16.msra.mxu0 0
    %1773 = vmatprep.subr.bf16.mxu0 0
    %1774 = vmatpush1.bf16.msra.mxu0 0
    %1775 = vmatprep.subr.bf16.mxu0 0
    %1776 = vmatpush1.bf16.msra.mxu0 0
    %1777 = vmatprep.subr.bf16.mxu0 0
    %1778 = vmatpush1.bf16.msra.mxu0 0
    %1779 = vmatprep.mubr.bf16.mxu0 0
    %1780 = vmatmul.mubr.bf16.gmra.mrb[0].mxu0 %v1413
    %v1781 = vpop.f32.mrb[0].mxu0
    %v1782 = vadd.f32 0.0, %v1781
    %v1783 = vpop.f32.mrb[0].mxu0
    %v1784 = vadd.f32 0.0, %v1783
    %v1785 = vpop.f32.mrb[0].mxu0
    %v1786 = vpop.f32.mrb[0].mxu0
    %1787 = vdwg.mxu0
    %v1792 = vrot.slane %v1741, 7
    %v1793 = vrot.slane %v1743, 7
    %v1794 = vrot.slane %v1782, 7
    %v1795 = vrot.slane %v1784, 7
    %v1796 = vrot.slane %v1741, 1
    %v1797 = vrot.slane %v1743, 1
    %v1798 = vrot.slane %v1782, 1
    %v1799 = vrot.slane %v1784, 1
    %v1800 = vrot.slane %v1741, 2
    %v1801 = vrot.slane %v1743, 2
    %v1802 = vrot.slane %v1782, 2
    %v1803 = vrot.slane %v1784, 2
    %v1804 = vrot.slane %v1741, 3
    %v1805 = vrot.slane %v1743, 3
    %v1806 = vrot.slane %v1782, 3
    %v1807 = vrot.slane %v1784, 3
    %v1808 = vrot.slane %v1741, 4
    %v1809 = vrot.slane %v1743, 4
    %v1810 = vrot.slane %v1782, 4
    %v1811 = vrot.slane %v1784, 4
    %v1812 = vrot.slane %v1741, 5
    %v1813 = vrot.slane %v1743, 5
    %v1814 = vrot.slane %v1782, 5
    %v1815 = vrot.slane %v1784, 5
    %v1816 = vrot.slane %v1741, 6
    %v1817 = vrot.slane %v1743, 6
    %v1818 = vrot.slane %v1782, 6
    %v1819 = vrot.slane %v1784, 6
    %v1852 = vadd.f32 %v388, %v1792
    %v1853 = vadd.f32 %v390, %v1793
    %v1854 = vadd.f32 %v461, %v1794
    %v1855 = vadd.f32 %v463, %v1795
    %v1856 = vadd.f32 %v392, %v1741
    %v1857 = vadd.f32 %v394, %v1743
    %v1858 = vadd.f32 %v465, %v1782
    %v1859 = vadd.f32 %v467, %v1784
    %v1860 = vadd.f32 %v398, %v1796
    %v1861 = vadd.f32 %v400, %v1797
    %v1862 = vadd.f32 %v471, %v1798
    %v1863 = vadd.f32 %v473, %v1799
    %v1864 = vadd.f32 %v402, %v1800
    %v1865 = vadd.f32 %v404, %v1801
    %v1866 = vadd.f32 %v475, %v1802
    %v1867 = vadd.f32 %v477, %v1803
    %v1868 = vadd.f32 %v408, %v1804
    %v1869 = vadd.f32 %v410, %v1805
    %v1870 = vadd.f32 %v481, %v1806
    %v1871 = vadd.f32 %v483, %v1807
    %v1872 = vadd.f32 %v412, %v1808
    %v1873 = vadd.f32 %v414, %v1809
    %v1874 = vadd.f32 %v485, %v1810
    %v1875 = vadd.f32 %v487, %v1811
    %v1876 = vadd.f32 %v418, %v1812
    %v1877 = vadd.f32 %v420, %v1813
    %v1878 = vadd.f32 %v491, %v1814
    %v1879 = vadd.f32 %v493, %v1815
    %v1880 = vadd.f32 %v422, %v1816
    %v1881 = vadd.f32 %v424, %v1817
    %v1882 = vadd.f32 %v495, %v1818
    %v1883 = vadd.f32 %v497, %v1819
    %v1884 = vxor.u32 %v1852, 2147483648
    %v1885 = vxor.u32 %v1856, 2147483648
    %v1886 = vxor.u32 %v1860, 2147483648
    %v1887 = vxor.u32 %v1864, 2147483648
    %v1888 = vxor.u32 %v1868, 2147483648
    %v1889 = vxor.u32 %v1872, 2147483648
    %v1890 = vxor.u32 %v1876, 2147483648
    %v1891 = vxor.u32 %v1880, 2147483648
    %v1892 = vmul.f32 %v1884, 1.442695
    %v1893 = vpow.pop %v1892
    %v1894 = vmul.f32 %v1885, 1.442695
    %v1895 = vpow.pop %v1894
    %v1896 = vmul.f32 %v1886, 1.442695
    %v1897 = vpow.pop %v1896
    %v1898 = vmul.f32 %v1887, 1.442695
    %v1899 = vpow.pop %v1898
    %v1900 = vmul.f32 %v1888, 1.442695
    %v1901 = vpow.pop %v1900
    %v1902 = vmul.f32 %v1889, 1.442695
    %v1903 = vpow.pop %v1902
    %v1904 = vmul.f32 %v1890, 1.442695
    %v1905 = vpow.pop %v1904
    %v1906 = vmul.f32 %v1891, 1.442695
    %v1907 = vpow.pop %v1906
    %v1908 = vadd.f32 %v1893, 1.0
    %v1909 = vadd.f32 %v1895, 1.0
    %v1910 = vadd.f32 %v1897, 1.0
    %v1911 = vadd.f32 %v1899, 1.0
    %v1912 = vadd.f32 %v1901, 1.0
    %v1913 = vadd.f32 %v1903, 1.0
    %v1914 = vadd.f32 %v1905, 1.0
    %v1915 = vadd.f32 %v1907, 1.0
    %v1916 = vrcp.pop %v1908
    %v1917 = vmul.f32 1.0, %v1916
    %v1918 = vrcp.pop %v1909
    %v1919 = vmul.f32 1.0, %v1918
    %v1920 = vrcp.pop %v1910
    %v1921 = vmul.f32 1.0, %v1920
    %v1922 = vrcp.pop %v1911
    %v1923 = vmul.f32 1.0, %v1922
    %v1924 = vrcp.pop %v1912
    %v1925 = vmul.f32 1.0, %v1924
    %v1926 = vrcp.pop %v1913
    %v1927 = vmul.f32 1.0, %v1926
    %v1928 = vrcp.pop %v1914
    %v1929 = vmul.f32 1.0, %v1928
    %v1930 = vrcp.pop %v1915
    %v1931 = vmul.f32 1.0, %v1930
    %v1932 = vxor.u32 %v1853, 2147483648
    %v1933 = vxor.u32 %v1857, 2147483648
    %v1934 = vxor.u32 %v1861, 2147483648
    %v1935 = vxor.u32 %v1865, 2147483648
    %v1936 = vxor.u32 %v1869, 2147483648
    %v1937 = vxor.u32 %v1873, 2147483648
    %v1938 = vxor.u32 %v1877, 2147483648
    %v1939 = vxor.u32 %v1881, 2147483648
    %v1940 = vmul.f32 %v1932, 1.442695
    %v1941 = vpow.pop %v1940
    %v1942 = vmul.f32 %v1933, 1.442695
    %v1943 = vpow.pop %v1942
    %v1944 = vmul.f32 %v1934, 1.442695
    %v1945 = vpow.pop %v1944
    %v1946 = vmul.f32 %v1935, 1.442695
    %v1947 = vpow.pop %v1946
    %v1948 = vmul.f32 %v1936, 1.442695
    %v1949 = vpow.pop %v1948
    %v1950 = vmul.f32 %v1937, 1.442695
    %v1951 = vpow.pop %v1950
    %v1952 = vmul.f32 %v1938, 1.442695
    %v1953 = vpow.pop %v1952
    %v1954 = vmul.f32 %v1939, 1.442695
    %v1955 = vpow.pop %v1954
    %v1956 = vadd.f32 %v1941, 1.0
    %v1957 = vadd.f32 %v1943, 1.0
    %v1958 = vadd.f32 %v1945, 1.0
    %v1959 = vadd.f32 %v1947, 1.0
    %v1960 = vadd.f32 %v1949, 1.0
    %v1961 = vadd.f32 %v1951, 1.0
    %v1962 = vadd.f32 %v1953, 1.0
    %v1963 = vadd.f32 %v1955, 1.0
    %v1964 = vrcp.pop %v1956
    %v1965 = vmul.f32 1.0, %v1964
    %v1966 = vrcp.pop %v1957
    %v1967 = vmul.f32 1.0, %v1966
    %v1968 = vrcp.pop %v1958
    %v1969 = vmul.f32 1.0, %v1968
    %v1970 = vrcp.pop %v1959
    %v1971 = vmul.f32 1.0, %v1970
    %v1972 = vrcp.pop %v1960
    %v1973 = vmul.f32 1.0, %v1972
    %v1974 = vrcp.pop %v1961
    %v1975 = vmul.f32 1.0, %v1974
    %v1976 = vrcp.pop %v1962
    %v1977 = vmul.f32 1.0, %v1976
    %v1978 = vrcp.pop %v1963
    %v1979 = vmul.f32 1.0, %v1978
    %v1980 = vtanh.pop %v1854
    %v1981 = vtanh.pop %v1858
    %v1982 = vtanh.pop %v1862
    %v1983 = vtanh.pop %v1866
    %v1984 = vtanh.pop %v1870
    %v1985 = vtanh.pop %v1874
    %v1986 = vtanh.pop %v1878
    %v1987 = vtanh.pop %v1882
    %v1988 = vxor.u32 %v1855, 2147483648
    %v1989 = vxor.u32 %v1859, 2147483648
    %v1990 = vxor.u32 %v1863, 2147483648
    %v1991 = vxor.u32 %v1867, 2147483648
    %v1992 = vxor.u32 %v1871, 2147483648
    %v1993 = vxor.u32 %v1875, 2147483648
    %v1994 = vxor.u32 %v1879, 2147483648
    %v1995 = vxor.u32 %v1883, 2147483648
    %v1996 = vmul.f32 %v1988, 1.442695
    %v1997 = vpow.pop %v1996
    %v1998 = vmul.f32 %v1989, 1.442695
    %v1999 = vpow.pop %v1998
    %v2000 = vmul.f32 %v1990, 1.442695
    %v2001 = vpow.pop %v2000
    %v2002 = vmul.f32 %v1991, 1.442695
    %v2003 = vpow.pop %v2002
    %v2004 = vmul.f32 %v1992, 1.442695
    %v2005 = vpow.pop %v2004
    %v2006 = vmul.f32 %v1993, 1.442695
    %v2007 = vpow.pop %v2006
    %v2008 = vmul.f32 %v1994, 1.442695
    %v2009 = vpow.pop %v2008
    %v2010 = vmul.f32 %v1995, 1.442695
    %v2011 = vpow.pop %v2010
    %v2012 = vadd.f32 %v1997, 1.0
    %v2013 = vadd.f32 %v1999, 1.0
    %v2014 = vadd.f32 %v2001, 1.0
    %v2015 = vadd.f32 %v2003, 1.0
    %v2016 = vadd.f32 %v2005, 1.0
    %v2017 = vadd.f32 %v2007, 1.0
    %v2018 = vadd.f32 %v2009, 1.0
    %v2019 = vadd.f32 %v2011, 1.0
    %v2020 = vrcp.pop %v2012
    %v2021 = vmul.f32 1.0, %v2020
    %v2022 = vrcp.pop %v2013
    %v2023 = vmul.f32 1.0, %v2022
    %v2024 = vrcp.pop %v2014
    %v2025 = vmul.f32 1.0, %v2024
    %v2026 = vrcp.pop %v2015
    %v2027 = vmul.f32 1.0, %v2026
    %v2028 = vrcp.pop %v2016
    %v2029 = vmul.f32 1.0, %v2028
    %v2030 = vrcp.pop %v2017
    %v2031 = vmul.f32 1.0, %v2030
    %v2032 = vrcp.pop %v2018
    %v2033 = vmul.f32 1.0, %v2032
    %v2034 = vrcp.pop %v2019
    %v2035 = vmul.f32 1.0, %v2034
    %v2044 = vrot.slane %v1102, 7
    %v2045 = vrot.slane %v1103, 7
    %v2046 = vrot.slane %v1104, 7
    %v2047 = vrot.slane %v1105, 7
    %v2048 = vrot.slane %v1106, 7
    %v2049 = vrot.slane %v1107, 7
    %v2050 = vrot.slane %v1108, 7
    %v2051 = vrot.slane %v1109, 7
    %v2060 = vmul.f32 %v1965, %v2044
    %v2061 = vmul.f32 %v1967, %v2045
    %v2062 = vmul.f32 %v1969, %v2046
    %v2063 = vmul.f32 %v1971, %v2047
    %v2064 = vmul.f32 %v1973, %v2048
    %v2065 = vmul.f32 %v1975, %v2049
    %v2066 = vmul.f32 %v1977, %v2050
    %v2067 = vmul.f32 %v1979, %v2051
    %v2068 = vmul.f32 %v1917, %v1980
    %v2069 = vmul.f32 %v1919, %v1981
    %v2070 = vmul.f32 %v1921, %v1982
    %v2071 = vmul.f32 %v1923, %v1983
    %v2072 = vmul.f32 %v1925, %v1984
    %v2073 = vmul.f32 %v1927, %v1985
    %v2074 = vmul.f32 %v1929, %v1986
    %v2075 = vmul.f32 %v1931, %v1987
    %v2076 = vadd.f32 %v2060, %v2068
    %v2077 = vadd.f32 %v2061, %v2069
    %v2078 = vadd.f32 %v2062, %v2070
    %v2079 = vadd.f32 %v2063, %v2071
    %v2080 = vadd.f32 %v2064, %v2072
    %v2081 = vadd.f32 %v2065, %v2073
    %v2082 = vadd.f32 %v2066, %v2074
    %v2083 = vadd.f32 %v2067, %v2075
    %v2084 = vtanh.pop %v2076
    %v2085 = vtanh.pop %v2077
    %v2086 = vtanh.pop %v2078
    %v2087 = vtanh.pop %v2079
    %v2088 = vtanh.pop %v2080
    %v2089 = vtanh.pop %v2081
    %v2090 = vtanh.pop %v2082
    %v2091 = vtanh.pop %v2083
    %v2092 = vmul.f32 %v2021, %v2084
    %v2093 = vmul.f32 %v2023, %v2085
    %v2094 = vmul.f32 %v2025, %v2086
    %v2095 = vmul.f32 %v2027, %v2087
    %v2096 = vmul.f32 %v2029, %v2088
    %v2097 = vmul.f32 %v2031, %v2089
    %v2098 = vmul.f32 %v2033, %v2090
    %v2099 = vmul.f32 %v2035, %v2091
    %v2100 = vpack.c.bf16 %v2092, %v2092
    %v2101 = vpack.c.bf16 %v2093, %v2093
    %v2102 = vpack.c.bf16 %v2094, %v2094
    %v2103 = vpack.c.bf16 %v2095, %v2095
    %v2104 = vpack.c.bf16 %v2096, %v2096
    %v2105 = vpack.c.bf16 %v2097, %v2097
    %v2106 = vpack.c.bf16 %v2098, %v2098
    %v2107 = vpack.c.bf16 %v2099, %v2099
    %v2108 = vpack.c.bf16 %v1705, %v1705
    %2109 = vmatprep.subr.bf16.mxu0 %v1231
    %2110 = vmatpush1.bf16.msra.mxu0 %v1230
    %2111 = vmatprep.subr.bf16.mxu0 %v1235
    %2112 = vmatpush1.bf16.msra.mxu0 %v1234
    %2113 = vmatprep.subr.bf16.mxu0 %v1239
    %2114 = vmatpush1.bf16.msra.mxu0 %v1238
    %2115 = vmatprep.subr.bf16.mxu0 %v1243
    %2116 = vmatpush1.bf16.msra.mxu0 %v1242
    %2117 = vmatprep.subr.bf16.mxu0 %v1247
    %2118 = vmatpush1.bf16.msra.mxu0 %v1246
    %2119 = vmatprep.subr.bf16.mxu0 %v1251
    %2120 = vmatpush1.bf16.msra.mxu0 %v1250
    %2121 = vmatprep.subr.bf16.mxu0 %v1255
    %2122 = vmatpush1.bf16.msra.mxu0 %v1254
    %2123 = vmatprep.subr.bf16.mxu0 %v1259
    %2124 = vmatpush1.bf16.msra.mxu0 %v1258
    %2125 = vmatprep.subr.bf16.mxu0 0
    %2126 = vmatpush1.bf16.msra.mxu0 0
    %2127 = vmatprep.subr.bf16.mxu0 0
    %2128 = vmatpush1.bf16.msra.mxu0 0
    %2129 = vmatprep.subr.bf16.mxu0 0
    %2130 = vmatpush1.bf16.msra.mxu0 0
    %2131 = vmatprep.subr.bf16.mxu0 0
    %2132 = vmatpush1.bf16.msra.mxu0 0
    %2133 = vmatprep.subr.bf16.mxu0 0
    %2134 = vmatpush1.bf16.msra.mxu0 0
    %2135 = vmatprep.subr.bf16.mxu0 0
    %2136 = vmatpush1.bf16.msra.mxu0 0
    %2137 = vmatprep.subr.bf16.mxu0 0
    %2138 = vmatpush1.bf16.msra.mxu0 0
    %2139 = vmatprep.subr.bf16.mxu0 0
    %2140 = vmatpush1.bf16.msra.mxu0 0
    %2141 = vmatprep.mubr.bf16.mxu0 0
    %2142 = vmatmul.mubr.bf16.gmra.mrb[0].mxu0 %v2108
    %v2143 = vpop.f32.mrb[0].mxu0
    %v2144 = vadd.f32 0.0, %v2143
    %v2145 = vpop.f32.mrb[0].mxu0
    %v2146 = vadd.f32 0.0, %v2145
    %v2147 = vpop.f32.mrb[0].mxu0
    %v2148 = vpop.f32.mrb[0].mxu0
    %2149 = vdwg.mxu0
    %2150 = vmatprep.subr.bf16.mxu0 %v1233
    %2151 = vmatpush1.bf16.msra.mxu0 %v1232
    %2152 = vmatprep.subr.bf16.mxu0 %v1237
    %2153 = vmatpush1.bf16.msra.mxu0 %v1236
    %2154 = vmatprep.subr.bf16.mxu0 %v1241
    %2155 = vmatpush1.bf16.msra.mxu0 %v1240
    %2156 = vmatprep.subr.bf16.mxu0 %v1245
    %2157 = vmatpush1.bf16.msra.mxu0 %v1244
    %2158 = vmatprep.subr.bf16.mxu0 %v1249
    %2159 = vmatpush1.bf16.msra.mxu0 %v1248
    %2160 = vmatprep.subr.bf16.mxu0 %v1253
    %2161 = vmatpush1.bf16.msra.mxu0 %v1252
    %2162 = vmatprep.subr.bf16.mxu0 %v1257
    %2163 = vmatpush1.bf16.msra.mxu0 %v1256
    %2164 = vmatprep.subr.bf16.mxu0 %v1261
    %2165 = vmatpush1.bf16.msra.mxu0 %v1260
    %2166 = vmatprep.subr.bf16.mxu0 0
    %2167 = vmatpush1.bf16.msra.mxu0 0
    %2168 = vmatprep.subr.bf16.mxu0 0
    %2169 = vmatpush1.bf16.msra.mxu0 0
    %2170 = vmatprep.subr.bf16.mxu0 0
    %2171 = vmatpush1.bf16.msra.mxu0 0
    %2172 = vmatprep.subr.bf16.mxu0 0
    %2173 = vmatpush1.bf16.msra.mxu0 0
    %2174 = vmatprep.subr.bf16.mxu0 0
    %2175 = vmatpush1.bf16.msra.mxu0 0
    %2176 = vmatprep.subr.bf16.mxu0 0
    %2177 = vmatpush1.bf16.msra.mxu0 0
    %2178 = vmatprep.subr.bf16.mxu0 0
    %2179 = vmatpush1.bf16.msra.mxu0 0
    %2180 = vmatprep.subr.bf16.mxu0 0
    %2181 = vmatpush1.bf16.msra.mxu0 0
    %2182 = vmatprep.mubr.bf16.mxu0 0
    %2183 = vmatmul.mubr.bf16.gmra.mrb[0].mxu0 %v2108
    %v2184 = vpop.f32.mrb[0].mxu0
    %v2185 = vadd.f32 0.0, %v2184
    %v2186 = vpop.f32.mrb[0].mxu0
    %v2187 = vadd.f32 0.0, %v2186
    %v2188 = vpop.f32.mrb[0].mxu0
    %v2189 = vpop.f32.mrb[0].mxu0
    %2190 = vdwg.mxu0
    %v2199 = vunpack.c.l.b16 %v2100
    %v2200 = vunpack.c.l.b16 %v2101
    %v2201 = vunpack.c.l.b16 %v2102
    %v2202 = vunpack.c.l.b16 %v2103
    %v2203 = vunpack.c.l.b16 %v2104
    %v2204 = vunpack.c.l.b16 %v2105
    %v2205 = vunpack.c.l.b16 %v2106
    %v2206 = vunpack.c.l.b16 %v2107
    %v2207 = vrot.slane %v2199, 1
    %v2208 = vsel %vm1393, %v2200, %v2207
    %v2209 = vrot.slane %v2201, 7
    %v2210 = vsel %vm1396, %v2209, %v2208
    %v2211 = vrot.slane %v2202, 6
    %v2212 = vsel %vm1399, %v2211, %v2210
    %v2213 = vrot.slane %v2203, 5
    %v2214 = vsel %vm1402, %v2213, %v2212
    %v2215 = vrot.slane %v2204, 4
    %v2216 = vsel %vm1405, %v2215, %v2214
    %v2217 = vrot.slane %v2205, 3
    %v2218 = vsel %vm1408, %v2217, %v2216
    %v2219 = vrot.slane %v2206, 2
    %v2220 = vsel %vm1411, %v2219, %v2218
    %v2221 = vpack.c.b16 %v2220, %v2220
    %2223 = vmatprep.subr.bf16.mxu0 %v1512
    %2224 = vmatpush1.bf16.msra.mxu0 %v1511
    %2225 = vmatprep.subr.bf16.mxu0 %v1516
    %2226 = vmatpush1.bf16.msra.mxu0 %v1515
    %2227 = vmatprep.subr.bf16.mxu0 %v1520
    %2228 = vmatpush1.bf16.msra.mxu0 %v1519
    %2229 = vmatprep.subr.bf16.mxu0 %v1524
    %2230 = vmatpush1.bf16.msra.mxu0 %v1523
    %2231 = vmatprep.subr.bf16.mxu0 %v1528
    %2232 = vmatpush1.bf16.msra.mxu0 %v1527
    %2233 = vmatprep.subr.bf16.mxu0 %v1532
    %2234 = vmatpush1.bf16.msra.mxu0 %v1531
    %2235 = vmatprep.subr.bf16.mxu0 %v1536
    %2236 = vmatpush1.bf16.msra.mxu0 %v1535
    %2237 = vmatprep.subr.bf16.mxu0 %v1540
    %2238 = vmatpush1.bf16.msra.mxu0 %v1539
    %2239 = vmatprep.subr.bf16.mxu0 0
    %2240 = vmatpush1.bf16.msra.mxu0 0
    %2241 = vmatprep.subr.bf16.mxu0 0
    %2242 = vmatpush1.bf16.msra.mxu0 0
    %2243 = vmatprep.subr.bf16.mxu0 0
    %2244 = vmatpush1.bf16.msra.mxu0 0
    %2245 = vmatprep.subr.bf16.mxu0 0
    %2246 = vmatpush1.bf16.msra.mxu0 0
    %2247 = vmatprep.subr.bf16.mxu0 0
    %2248 = vmatpush1.bf16.msra.mxu0 0
    %2249 = vmatprep.subr.bf16.mxu0 0
    %2250 = vmatpush1.bf16.msra.mxu0 0
    %2251 = vmatprep.subr.bf16.mxu0 0
    %2252 = vmatpush1.bf16.msra.mxu0 0
    %2253 = vmatprep.subr.bf16.mxu0 0
    %2254 = vmatpush1.bf16.msra.mxu0 0
    %2255 = vmatprep.mubr.bf16.mxu0 0
    %2256 = vmatmul.mubr.bf16.gmra.mrb[0].mxu0 %v2221
    %v2257 = vpop.f32.mrb[0].mxu0
    %v2258 = vadd.f32 %v2144, %v2257
    %v2259 = vpop.f32.mrb[0].mxu0
    %v2260 = vadd.f32 %v2146, %v2259
    %v2261 = vpop.f32.mrb[0].mxu0
    %v2262 = vpop.f32.mrb[0].mxu0
    %2263 = vdwg.mxu0
    %2264 = vmatprep.subr.bf16.mxu0 %v1514
    %2265 = vmatpush1.bf16.msra.mxu0 %v1513
    %2266 = vmatprep.subr.bf16.mxu0 %v1518
    %2267 = vmatpush1.bf16.msra.mxu0 %v1517
    %2268 = vmatprep.subr.bf16.mxu0 %v1522
    %2269 = vmatpush1.bf16.msra.mxu0 %v1521
    %2270 = vmatprep.subr.bf16.mxu0 %v1526
    %2271 = vmatpush1.bf16.msra.mxu0 %v1525
    %2272 = vmatprep.subr.bf16.mxu0 %v1530
    %2273 = vmatpush1.bf16.msra.mxu0 %v1529
    %2274 = vmatprep.subr.bf16.mxu0 %v1534
    %2275 = vmatpush1.bf16.msra.mxu0 %v1533
    %2276 = vmatprep.subr.bf16.mxu0 %v1538
    %2277 = vmatpush1.bf16.msra.mxu0 %v1537
    %2278 = vmatprep.subr.bf16.mxu0 %v1542
    %2279 = vmatpush1.bf16.msra.mxu0 %v1541
    %2280 = vmatprep.subr.bf16.mxu0 0
    %2281 = vmatpush1.bf16.msra.mxu0 0
    %2282 = vmatprep.subr.bf16.mxu0 0
    %2283 = vmatpush1.bf16.msra.mxu0 0
    %2284 = vmatprep.subr.bf16.mxu0 0
    %2285 = vmatpush1.bf16.msra.mxu0 0
    %2286 = vmatprep.subr.bf16.mxu0 0
    %2287 = vmatpush1.bf16.msra.mxu0 0
    %2288 = vmatprep.subr.bf16.mxu0 0
    %2289 = vmatpush1.bf16.msra.mxu0 0
    %2290 = vmatprep.subr.bf16.mxu0 0
    %2291 = vmatpush1.bf16.msra.mxu0 0
    %2292 = vmatprep.subr.bf16.mxu0 0
    %2293 = vmatpush1.bf16.msra.mxu0 0
    %2294 = vmatprep.subr.bf16.mxu0 0
    %2295 = vmatpush1.bf16.msra.mxu0 0
    %2296 = vmatprep.mubr.bf16.mxu0 0
    %2297 = vmatmul.mubr.bf16.gmra.mrb[0].mxu0 %v2221
    %v2298 = vpop.f32.mrb[0].mxu0
    %v2299 = vadd.f32 %v2185, %v2298
    %v2300 = vpop.f32.mrb[0].mxu0
    %v2301 = vadd.f32 %v2187, %v2300
    %v2302 = vpop.f32.mrb[0].mxu0
    %v2303 = vpop.f32.mrb[0].mxu0
    %2304 = vdwg.mxu0
    %v2305 = vadd.f32 %v2258, %v1661
    %v2306 = vadd.f32 %v2260, %v1665
    %v2307 = vadd.f32 %v2299, %v1669
    %v2308 = vadd.f32 %v2301, %v1673
    %v2309 = vxor.u32 %v2305, 2147483648
    %v2310 = vmul.f32 %v2309, 1.442695
    %v2311 = vpow.pop %v2310
    %v2312 = vadd.f32 %v2311, 1.0
    %v2313 = vrcp.pop %v2312
    %v2314 = vmul.f32 1.0, %v2313
    %v2315 = vxor.u32 %v2306, 2147483648
    %v2316 = vmul.f32 %v2315, 1.442695
    %v2317 = vpow.pop %v2316
    %v2318 = vadd.f32 %v2317, 1.0
    %v2319 = vrcp.pop %v2318
    %v2320 = vmul.f32 1.0, %v2319
    %v2321 = vtanh.pop %v2307
    %v2322 = vxor.u32 %v2308, 2147483648
    %v2323 = vmul.f32 %v2322, 1.442695
    %v2324 = vpow.pop %v2323
    %v2325 = vadd.f32 %v2324, 1.0
    %v2326 = vrcp.pop %v2325
    %v2327 = vmul.f32 1.0, %v2326
    %v2328 = vmul.f32 %v2320, %v1703
    %v2329 = vmul.f32 %v2314, %v2321
    %v2330 = vadd.f32 %v2328, %v2329
    %v2331 = vtanh.pop %v2330
    %v2332 = vmul.f32 %v2327, %v2331
    %2333 = vmatprep.subr.bf16.mxu0 %v693
    %2334 = vmatpush1.bf16.msra.mxu0 %v692
    %2335 = vmatprep.subr.bf16.mxu0 %v697
    %2336 = vmatpush1.bf16.msra.mxu0 %v696
    %2337 = vmatprep.subr.bf16.mxu0 %v701
    %2338 = vmatpush1.bf16.msra.mxu0 %v700
    %2339 = vmatprep.subr.bf16.mxu0 %v705
    %2340 = vmatpush1.bf16.msra.mxu0 %v704
    %2341 = vmatprep.subr.bf16.mxu0 %v709
    %2342 = vmatpush1.bf16.msra.mxu0 %v708
    %2343 = vmatprep.subr.bf16.mxu0 %v713
    %2344 = vmatpush1.bf16.msra.mxu0 %v712
    %2345 = vmatprep.subr.bf16.mxu0 %v717
    %2346 = vmatpush1.bf16.msra.mxu0 %v716
    %2347 = vmatprep.subr.bf16.mxu0 %v721
    %2348 = vmatpush1.bf16.msra.mxu0 %v720
    %2349 = vmatprep.subr.bf16.mxu0 0
    %2350 = vmatpush1.bf16.msra.mxu0 0
    %2351 = vmatprep.subr.bf16.mxu0 0
    %2352 = vmatpush1.bf16.msra.mxu0 0
    %2353 = vmatprep.subr.bf16.mxu0 0
    %2354 = vmatpush1.bf16.msra.mxu0 0
    %2355 = vmatprep.subr.bf16.mxu0 0
    %2356 = vmatpush1.bf16.msra.mxu0 0
    %2357 = vmatprep.subr.bf16.mxu0 0
    %2358 = vmatpush1.bf16.msra.mxu0 0
    %2359 = vmatprep.subr.bf16.mxu0 0
    %2360 = vmatpush1.bf16.msra.mxu0 0
    %2361 = vmatprep.subr.bf16.mxu0 0
    %2362 = vmatpush1.bf16.msra.mxu0 0
    %2363 = vmatprep.subr.bf16.mxu0 0
    %2364 = vmatpush1.bf16.msra.mxu0 0
    %2365 = vmatprep.mubr.bf16.mxu0 0
    %2366 = vmatmul.mubr.bf16.gmra.mrb[0].mxu0 %v2221
    %v2367 = vpop.f32.mrb[0].mxu0
    %v2368 = vadd.f32 0.0, %v2367
    %v2369 = vpop.f32.mrb[0].mxu0
    %v2370 = vadd.f32 0.0, %v2369
    %v2371 = vpop.f32.mrb[0].mxu0
    %v2372 = vpop.f32.mrb[0].mxu0
    %2373 = vdwg.mxu0
    %2374 = vmatprep.subr.bf16.mxu0 %v695
    %2375 = vmatpush1.bf16.msra.mxu0 %v694
    %2376 = vmatprep.subr.bf16.mxu0 %v699
    %2377 = vmatpush1.bf16.msra.mxu0 %v698
    %2378 = vmatprep.subr.bf16.mxu0 %v703
    %2379 = vmatpush1.bf16.msra.mxu0 %v702
    %2380 = vmatprep.subr.bf16.mxu0 %v707
    %2381 = vmatpush1.bf16.msra.mxu0 %v706
    %2382 = vmatprep.subr.bf16.mxu0 %v711
    %2383 = vmatpush1.bf16.msra.mxu0 %v710
    %2384 = vmatprep.subr.bf16.mxu0 %v715
    %2385 = vmatpush1.bf16.msra.mxu0 %v714
    %2386 = vmatprep.subr.bf16.mxu0 %v719
    %2387 = vmatpush1.bf16.msra.mxu0 %v718
    %2388 = vmatprep.subr.bf16.mxu0 %v723
    %2389 = vmatpush1.bf16.msra.mxu0 %v722
    %2390 = vmatprep.subr.bf16.mxu0 0
    %2391 = vmatpush1.bf16.msra.mxu0 0
    %2392 = vmatprep.subr.bf16.mxu0 0
    %2393 = vmatpush1.bf16.msra.mxu0 0
    %2394 = vmatprep.subr.bf16.mxu0 0
    %2395 = vmatpush1.bf16.msra.mxu0 0
    %2396 = vmatprep.subr.bf16.mxu0 0
    %2397 = vmatpush1.bf16.msra.mxu0 0
    %2398 = vmatprep.subr.bf16.mxu0 0
    %2399 = vmatpush1.bf16.msra.mxu0 0
    %2400 = vmatprep.subr.bf16.mxu0 0
    %2401 = vmatpush1.bf16.msra.mxu0 0
    %2402 = vmatprep.subr.bf16.mxu0 0
    %2403 = vmatpush1.bf16.msra.mxu0 0
    %2404 = vmatprep.subr.bf16.mxu0 0
    %2405 = vmatpush1.bf16.msra.mxu0 0
    %2406 = vmatprep.mubr.bf16.mxu0 0
    %2407 = vmatmul.mubr.bf16.gmra.mrb[0].mxu0 %v2221
    %v2408 = vpop.f32.mrb[0].mxu0
    %v2409 = vadd.f32 0.0, %v2408
    %v2410 = vpop.f32.mrb[0].mxu0
    %v2411 = vadd.f32 0.0, %v2410
    %v2412 = vpop.f32.mrb[0].mxu0
    %v2413 = vpop.f32.mrb[0].mxu0
    %2414 = vdwg.mxu0
    %v2419 = vrot.slane %v2368, 6
    %v2420 = vrot.slane %v2370, 6
    %v2421 = vrot.slane %v2409, 6
    %v2422 = vrot.slane %v2411, 6
    %v2423 = vrot.slane %v2368, 7
    %v2424 = vrot.slane %v2370, 7
    %v2425 = vrot.slane %v2409, 7
    %v2426 = vrot.slane %v2411, 7
    %v2427 = vrot.slane %v2368, 1
    %v2428 = vrot.slane %v2370, 1
    %v2429 = vrot.slane %v2409, 1
    %v2430 = vrot.slane %v2411, 1
    %v2431 = vrot.slane %v2368, 2
    %v2432 = vrot.slane %v2370, 2
    %v2433 = vrot.slane %v2409, 2
    %v2434 = vrot.slane %v2411, 2
    %v2435 = vrot.slane %v2368, 3
    %v2436 = vrot.slane %v2370, 3
    %v2437 = vrot.slane %v2409, 3
    %v2438 = vrot.slane %v2411, 3
    %v2439 = vrot.slane %v2368, 4
    %v2440 = vrot.slane %v2370, 4
    %v2441 = vrot.slane %v2409, 4
    %v2442 = vrot.slane %v2411, 4
    %v2443 = vrot.slane %v2368, 5
    %v2444 = vrot.slane %v2370, 5
    %v2445 = vrot.slane %v2409, 5
    %v2446 = vrot.slane %v2411, 5
    %v2479 = vadd.f32 %v388, %v2419
    %v2480 = vadd.f32 %v390, %v2420
    %v2481 = vadd.f32 %v461, %v2421
    %v2482 = vadd.f32 %v463, %v2422
    %v2483 = vadd.f32 %v392, %v2423
    %v2484 = vadd.f32 %v394, %v2424
    %v2485 = vadd.f32 %v465, %v2425
    %v2486 = vadd.f32 %v467, %v2426
    %v2487 = vadd.f32 %v398, %v2368
    %v2488 = vadd.f32 %v400, %v2370
    %v2489 = vadd.f32 %v471, %v2409
    %v2490 = vadd.f32 %v473, %v2411
    %v2491 = vadd.f32 %v402, %v2427
    %v2492 = vadd.f32 %v404, %v2428
    %v2493 = vadd.f32 %v475, %v2429
    %v2494 = vadd.f32 %v477, %v2430
    %v2495 = vadd.f32 %v408, %v2431
    %v2496 = vadd.f32 %v410, %v2432
    %v2497 = vadd.f32 %v481, %v2433
    %v2498 = vadd.f32 %v483, %v2434
    %v2499 = vadd.f32 %v412, %v2435
    %v2500 = vadd.f32 %v414, %v2436
    %v2501 = vadd.f32 %v485, %v2437
    %v2502 = vadd.f32 %v487, %v2438
    %v2503 = vadd.f32 %v418, %v2439
    %v2504 = vadd.f32 %v420, %v2440
    %v2505 = vadd.f32 %v491, %v2441
    %v2506 = vadd.f32 %v493, %v2442
    %v2507 = vadd.f32 %v422, %v2443
    %v2508 = vadd.f32 %v424, %v2444
    %v2509 = vadd.f32 %v495, %v2445
    %v2510 = vadd.f32 %v497, %v2446
    %v2511 = vxor.u32 %v2479, 2147483648
    %v2512 = vxor.u32 %v2483, 2147483648
    %v2513 = vxor.u32 %v2487, 2147483648
    %v2514 = vxor.u32 %v2491, 2147483648
    %v2515 = vxor.u32 %v2495, 2147483648
    %v2516 = vxor.u32 %v2499, 2147483648
    %v2517 = vxor.u32 %v2503, 2147483648
    %v2518 = vxor.u32 %v2507, 2147483648
    %v2519 = vmul.f32 %v2511, 1.442695
    %v2520 = vpow.pop %v2519
    %v2521 = vmul.f32 %v2512, 1.442695
    %v2522 = vpow.pop %v2521
    %v2523 = vmul.f32 %v2513, 1.442695
    %v2524 = vpow.pop %v2523
    %v2525 = vmul.f32 %v2514, 1.442695
    %v2526 = vpow.pop %v2525
    %v2527 = vmul.f32 %v2515, 1.442695
    %v2528 = vpow.pop %v2527
    %v2529 = vmul.f32 %v2516, 1.442695
    %v2530 = vpow.pop %v2529
    %v2531 = vmul.f32 %v2517, 1.442695
    %v2532 = vpow.pop %v2531
    %v2533 = vmul.f32 %v2518, 1.442695
    %v2534 = vpow.pop %v2533
    %v2535 = vadd.f32 %v2520, 1.0
    %v2536 = vadd.f32 %v2522, 1.0
    %v2537 = vadd.f32 %v2524, 1.0
    %v2538 = vadd.f32 %v2526, 1.0
    %v2539 = vadd.f32 %v2528, 1.0
    %v2540 = vadd.f32 %v2530, 1.0
    %v2541 = vadd.f32 %v2532, 1.0
    %v2542 = vadd.f32 %v2534, 1.0
    %v2543 = vrcp.pop %v2535
    %v2544 = vmul.f32 1.0, %v2543
    %v2545 = vrcp.pop %v2536
    %v2546 = vmul.f32 1.0, %v2545
    %v2547 = vrcp.pop %v2537
    %v2548 = vmul.f32 1.0, %v2547
    %v2549 = vrcp.pop %v2538
    %v2550 = vmul.f32 1.0, %v2549
    %v2551 = vrcp.pop %v2539
    %v2552 = vmul.f32 1.0, %v2551
    %v2553 = vrcp.pop %v2540
    %v2554 = vmul.f32 1.0, %v2553
    %v2555 = vrcp.pop %v2541
    %v2556 = vmul.f32 1.0, %v2555
    %v2557 = vrcp.pop %v2542
    %v2558 = vmul.f32 1.0, %v2557
    %v2559 = vxor.u32 %v2480, 2147483648
    %v2560 = vxor.u32 %v2484, 2147483648
    %v2561 = vxor.u32 %v2488, 2147483648
    %v2562 = vxor.u32 %v2492, 2147483648
    %v2563 = vxor.u32 %v2496, 2147483648
    %v2564 = vxor.u32 %v2500, 2147483648
    %v2565 = vxor.u32 %v2504, 2147483648
    %v2566 = vxor.u32 %v2508, 2147483648
    %v2567 = vmul.f32 %v2559, 1.442695
    %v2568 = vpow.pop %v2567
    %v2569 = vmul.f32 %v2560, 1.442695
    %v2570 = vpow.pop %v2569
    %v2571 = vmul.f32 %v2561, 1.442695
    %v2572 = vpow.pop %v2571
    %v2573 = vmul.f32 %v2562, 1.442695
    %v2574 = vpow.pop %v2573
    %v2575 = vmul.f32 %v2563, 1.442695
    %v2576 = vpow.pop %v2575
    %v2577 = vmul.f32 %v2564, 1.442695
    %v2578 = vpow.pop %v2577
    %v2579 = vmul.f32 %v2565, 1.442695
    %v2580 = vpow.pop %v2579
    %v2581 = vmul.f32 %v2566, 1.442695
    %v2582 = vpow.pop %v2581
    %v2583 = vadd.f32 %v2568, 1.0
    %v2584 = vadd.f32 %v2570, 1.0
    %v2585 = vadd.f32 %v2572, 1.0
    %v2586 = vadd.f32 %v2574, 1.0
    %v2587 = vadd.f32 %v2576, 1.0
    %v2588 = vadd.f32 %v2578, 1.0
    %v2589 = vadd.f32 %v2580, 1.0
    %v2590 = vadd.f32 %v2582, 1.0
    %v2591 = vrcp.pop %v2583
    %v2592 = vmul.f32 1.0, %v2591
    %v2593 = vrcp.pop %v2584
    %v2594 = vmul.f32 1.0, %v2593
    %v2595 = vrcp.pop %v2585
    %v2596 = vmul.f32 1.0, %v2595
    %v2597 = vrcp.pop %v2586
    %v2598 = vmul.f32 1.0, %v2597
    %v2599 = vrcp.pop %v2587
    %v2600 = vmul.f32 1.0, %v2599
    %v2601 = vrcp.pop %v2588
    %v2602 = vmul.f32 1.0, %v2601
    %v2603 = vrcp.pop %v2589
    %v2604 = vmul.f32 1.0, %v2603
    %v2605 = vrcp.pop %v2590
    %v2606 = vmul.f32 1.0, %v2605
    %v2607 = vtanh.pop %v2481
    %v2608 = vtanh.pop %v2485
    %v2609 = vtanh.pop %v2489
    %v2610 = vtanh.pop %v2493
    %v2611 = vtanh.pop %v2497
    %v2612 = vtanh.pop %v2501
    %v2613 = vtanh.pop %v2505
    %v2614 = vtanh.pop %v2509
    %v2615 = vxor.u32 %v2482, 2147483648
    %v2616 = vxor.u32 %v2486, 2147483648
    %v2617 = vxor.u32 %v2490, 2147483648
    %v2618 = vxor.u32 %v2494, 2147483648
    %v2619 = vxor.u32 %v2498, 2147483648
    %v2620 = vxor.u32 %v2502, 2147483648
    %v2621 = vxor.u32 %v2506, 2147483648
    %v2622 = vxor.u32 %v2510, 2147483648
    %v2623 = vmul.f32 %v2615, 1.442695
    %v2624 = vpow.pop %v2623
    %v2625 = vmul.f32 %v2616, 1.442695
    %v2626 = vpow.pop %v2625
    %v2627 = vmul.f32 %v2617, 1.442695
    %v2628 = vpow.pop %v2627
    %v2629 = vmul.f32 %v2618, 1.442695
    %v2630 = vpow.pop %v2629
    %v2631 = vmul.f32 %v2619, 1.442695
    %v2632 = vpow.pop %v2631
    %v2633 = vmul.f32 %v2620, 1.442695
    %v2634 = vpow.pop %v2633
    %v2635 = vmul.f32 %v2621, 1.442695
    %v2636 = vpow.pop %v2635
    %v2637 = vmul.f32 %v2622, 1.442695
    %v2638 = vpow.pop %v2637
    %v2639 = vadd.f32 %v2624, 1.0
    %v2640 = vadd.f32 %v2626, 1.0
    %v2641 = vadd.f32 %v2628, 1.0
    %v2642 = vadd.f32 %v2630, 1.0
    %v2643 = vadd.f32 %v2632, 1.0
    %v2644 = vadd.f32 %v2634, 1.0
    %v2645 = vadd.f32 %v2636, 1.0
    %v2646 = vadd.f32 %v2638, 1.0
    %v2647 = vrcp.pop %v2639
    %v2648 = vmul.f32 1.0, %v2647
    %v2649 = vrcp.pop %v2640
    %v2650 = vmul.f32 1.0, %v2649
    %v2651 = vrcp.pop %v2641
    %v2652 = vmul.f32 1.0, %v2651
    %v2653 = vrcp.pop %v2642
    %v2654 = vmul.f32 1.0, %v2653
    %v2655 = vrcp.pop %v2643
    %v2656 = vmul.f32 1.0, %v2655
    %v2657 = vrcp.pop %v2644
    %v2658 = vmul.f32 1.0, %v2657
    %v2659 = vrcp.pop %v2645
    %v2660 = vmul.f32 1.0, %v2659
    %v2661 = vrcp.pop %v2646
    %v2662 = vmul.f32 1.0, %v2661
    %v2671 = vrot.slane %v2076, 7
    %v2672 = vrot.slane %v2077, 7
    %v2673 = vrot.slane %v2078, 7
    %v2674 = vrot.slane %v2079, 7
    %v2675 = vrot.slane %v2080, 7
    %v2676 = vrot.slane %v2081, 7
    %v2677 = vrot.slane %v2082, 7
    %v2678 = vrot.slane %v2083, 7
    %v2687 = vmul.f32 %v2592, %v2671
    %v2688 = vmul.f32 %v2594, %v2672
    %v2689 = vmul.f32 %v2596, %v2673
    %v2690 = vmul.f32 %v2598, %v2674
    %v2691 = vmul.f32 %v2600, %v2675
    %v2692 = vmul.f32 %v2602, %v2676
    %v2693 = vmul.f32 %v2604, %v2677
    %v2694 = vmul.f32 %v2606, %v2678
    %v2695 = vmul.f32 %v2544, %v2607
    %v2696 = vmul.f32 %v2546, %v2608
    %v2697 = vmul.f32 %v2548, %v2609
    %v2698 = vmul.f32 %v2550, %v2610
    %v2699 = vmul.f32 %v2552, %v2611
    %v2700 = vmul.f32 %v2554, %v2612
    %v2701 = vmul.f32 %v2556, %v2613
    %v2702 = vmul.f32 %v2558, %v2614
    %v2703 = vadd.f32 %v2687, %v2695
    %v2704 = vadd.f32 %v2688, %v2696
    %v2705 = vadd.f32 %v2689, %v2697
    %v2706 = vadd.f32 %v2690, %v2698
    %v2707 = vadd.f32 %v2691, %v2699
    %v2708 = vadd.f32 %v2692, %v2700
    %v2709 = vadd.f32 %v2693, %v2701
    %v2710 = vadd.f32 %v2694, %v2702
    %v2711 = vtanh.pop %v2703
    %v2712 = vtanh.pop %v2704
    %v2713 = vtanh.pop %v2705
    %v2714 = vtanh.pop %v2706
    %v2715 = vtanh.pop %v2707
    %v2716 = vtanh.pop %v2708
    %v2717 = vtanh.pop %v2709
    %v2718 = vtanh.pop %v2710
    %v2719 = vmul.f32 %v2648, %v2711
    %v2720 = vmul.f32 %v2650, %v2712
    %v2721 = vmul.f32 %v2652, %v2713
    %v2722 = vmul.f32 %v2654, %v2714
    %v2723 = vmul.f32 %v2656, %v2715
    %v2724 = vmul.f32 %v2658, %v2716
    %v2725 = vmul.f32 %v2660, %v2717
    %v2726 = vmul.f32 %v2662, %v2718
    %v2727 = vpack.c.bf16 %v2719, %v2719
    %v2728 = vpack.c.bf16 %v2720, %v2720
    %v2729 = vpack.c.bf16 %v2721, %v2721
    %v2730 = vpack.c.bf16 %v2722, %v2722
    %v2731 = vpack.c.bf16 %v2723, %v2723
    %v2732 = vpack.c.bf16 %v2724, %v2724
    %v2733 = vpack.c.bf16 %v2725, %v2725
    %v2734 = vpack.c.bf16 %v2726, %v2726
    %v2735 = vpack.c.bf16 %v2332, %v2332
    %2736 = vmatprep.subr.bf16.mxu0 %v1231
    %2737 = vmatpush1.bf16.msra.mxu0 %v1230
    %2738 = vmatprep.subr.bf16.mxu0 %v1235
    %2739 = vmatpush1.bf16.msra.mxu0 %v1234
    %2740 = vmatprep.subr.bf16.mxu0 %v1239
    %2741 = vmatpush1.bf16.msra.mxu0 %v1238
    %2742 = vmatprep.subr.bf16.mxu0 %v1243
    %2743 = vmatpush1.bf16.msra.mxu0 %v1242
    %2744 = vmatprep.subr.bf16.mxu0 %v1247
    %2745 = vmatpush1.bf16.msra.mxu0 %v1246
    %2746 = vmatprep.subr.bf16.mxu0 %v1251
    %2747 = vmatpush1.bf16.msra.mxu0 %v1250
    %2748 = vmatprep.subr.bf16.mxu0 %v1255
    %2749 = vmatpush1.bf16.msra.mxu0 %v1254
    %2750 = vmatprep.subr.bf16.mxu0 %v1259
    %2751 = vmatpush1.bf16.msra.mxu0 %v1258
    %2752 = vmatprep.subr.bf16.mxu0 0
    %2753 = vmatpush1.bf16.msra.mxu0 0
    %2754 = vmatprep.subr.bf16.mxu0 0
    %2755 = vmatpush1.bf16.msra.mxu0 0
    %2756 = vmatprep.subr.bf16.mxu0 0
    %2757 = vmatpush1.bf16.msra.mxu0 0
    %2758 = vmatprep.subr.bf16.mxu0 0
    %2759 = vmatpush1.bf16.msra.mxu0 0
    %2760 = vmatprep.subr.bf16.mxu0 0
    %2761 = vmatpush1.bf16.msra.mxu0 0
    %2762 = vmatprep.subr.bf16.mxu0 0
    %2763 = vmatpush1.bf16.msra.mxu0 0
    %2764 = vmatprep.subr.bf16.mxu0 0
    %2765 = vmatpush1.bf16.msra.mxu0 0
    %2766 = vmatprep.subr.bf16.mxu0 0
    %2767 = vmatpush1.bf16.msra.mxu0 0
    %2768 = vmatprep.mubr.bf16.mxu0 0
    %2769 = vmatmul.mubr.bf16.gmra.mrb[0].mxu0 %v2735
    %v2770 = vpop.f32.mrb[0].mxu0
    %v2771 = vadd.f32 0.0, %v2770
    %v2772 = vpop.f32.mrb[0].mxu0
    %v2773 = vadd.f32 0.0, %v2772
    %v2774 = vpop.f32.mrb[0].mxu0
    %v2775 = vpop.f32.mrb[0].mxu0
    %2776 = vdwg.mxu0
    %2777 = vmatprep.subr.bf16.mxu0 %v1233
    %2778 = vmatpush1.bf16.msra.mxu0 %v1232
    %2779 = vmatprep.subr.bf16.mxu0 %v1237
    %2780 = vmatpush1.bf16.msra.mxu0 %v1236
    %2781 = vmatprep.subr.bf16.mxu0 %v1241
    %2782 = vmatpush1.bf16.msra.mxu0 %v1240
    %2783 = vmatprep.subr.bf16.mxu0 %v1245
    %2784 = vmatpush1.bf16.msra.mxu0 %v1244
    %2785 = vmatprep.subr.bf16.mxu0 %v1249
    %2786 = vmatpush1.bf16.msra.mxu0 %v1248
    %2787 = vmatprep.subr.bf16.mxu0 %v1253
    %2788 = vmatpush1.bf16.msra.mxu0 %v1252
    %2789 = vmatprep.subr.bf16.mxu0 %v1257
    %2790 = vmatpush1.bf16.msra.mxu0 %v1256
    %2791 = vmatprep.subr.bf16.mxu0 %v1261
    %2792 = vmatpush1.bf16.msra.mxu0 %v1260
    %2793 = vmatprep.subr.bf16.mxu0 0
    %2794 = vmatpush1.bf16.msra.mxu0 0
    %2795 = vmatprep.subr.bf16.mxu0 0
    %2796 = vmatpush1.bf16.msra.mxu0 0
    %2797 = vmatprep.subr.bf16.mxu0 0
    %2798 = vmatpush1.bf16.msra.mxu0 0
    %2799 = vmatprep.subr.bf16.mxu0 0
    %2800 = vmatpush1.bf16.msra.mxu0 0
    %2801 = vmatprep.subr.bf16.mxu0 0
    %2802 = vmatpush1.bf16.msra.mxu0 0
    %2803 = vmatprep.subr.bf16.mxu0 0
    %2804 = vmatpush1.bf16.msra.mxu0 0
    %2805 = vmatprep.subr.bf16.mxu0 0
    %2806 = vmatpush1.bf16.msra.mxu0 0
    %2807 = vmatprep.subr.bf16.mxu0 0
    %2808 = vmatpush1.bf16.msra.mxu0 0
    %2809 = vmatprep.mubr.bf16.mxu0 0
    %2810 = vmatmul.mubr.bf16.gmra.mrb[0].mxu0 %v2735
    %v2811 = vpop.f32.mrb[0].mxu0
    %v2812 = vadd.f32 0.0, %v2811
    %v2813 = vpop.f32.mrb[0].mxu0
    %v2814 = vadd.f32 0.0, %v2813
    %v2815 = vpop.f32.mrb[0].mxu0
    %v2816 = vpop.f32.mrb[0].mxu0
    %2817 = vdwg.mxu0
    %v2826 = vunpack.c.l.b16 %v2727
    %v2827 = vunpack.c.l.b16 %v2728
    %v2828 = vunpack.c.l.b16 %v2729
    %v2829 = vunpack.c.l.b16 %v2730
    %v2830 = vunpack.c.l.b16 %v2731
    %v2831 = vunpack.c.l.b16 %v2732
    %v2832 = vunpack.c.l.b16 %v2733
    %v2833 = vunpack.c.l.b16 %v2734
    %v2834 = vrot.slane %v2826, 2
    %v2835 = vrot.slane %v2827, 1
    %v2836 = vsel %vm1393, %v2835, %v2834
    %v2837 = vsel %vm1396, %v2828, %v2836
    %v2838 = vrot.slane %v2829, 7
    %v2839 = vsel %vm1399, %v2838, %v2837
    %v2840 = vrot.slane %v2830, 6
    %v2841 = vsel %vm1402, %v2840, %v2839
    %v2842 = vrot.slane %v2831, 5
    %v2843 = vsel %vm1405, %v2842, %v2841
    %v2844 = vrot.slane %v2832, 4
    %v2845 = vsel %vm1408, %v2844, %v2843
    %v2846 = vrot.slane %v2833, 3
    %v2847 = vsel %vm1411, %v2846, %v2845
    %v2848 = vpack.c.b16 %v2847, %v2847
    %2850 = vmatprep.subr.bf16.mxu0 %v1512
    %2851 = vmatpush1.bf16.msra.mxu0 %v1511
    %2852 = vmatprep.subr.bf16.mxu0 %v1516
    %2853 = vmatpush1.bf16.msra.mxu0 %v1515
    %2854 = vmatprep.subr.bf16.mxu0 %v1520
    %2855 = vmatpush1.bf16.msra.mxu0 %v1519
    %2856 = vmatprep.subr.bf16.mxu0 %v1524
    %2857 = vmatpush1.bf16.msra.mxu0 %v1523
    %2858 = vmatprep.subr.bf16.mxu0 %v1528
    %2859 = vmatpush1.bf16.msra.mxu0 %v1527
    %2860 = vmatprep.subr.bf16.mxu0 %v1532
    %2861 = vmatpush1.bf16.msra.mxu0 %v1531
    %2862 = vmatprep.subr.bf16.mxu0 %v1536
    %2863 = vmatpush1.bf16.msra.mxu0 %v1535
    %2864 = vmatprep.subr.bf16.mxu0 %v1540
    %2865 = vmatpush1.bf16.msra.mxu0 %v1539
    %2866 = vmatprep.subr.bf16.mxu0 0
    %2867 = vmatpush1.bf16.msra.mxu0 0
    %2868 = vmatprep.subr.bf16.mxu0 0
    %2869 = vmatpush1.bf16.msra.mxu0 0
    %2870 = vmatprep.subr.bf16.mxu0 0
    %2871 = vmatpush1.bf16.msra.mxu0 0
    %2872 = vmatprep.subr.bf16.mxu0 0
    %2873 = vmatpush1.bf16.msra.mxu0 0
    %2874 = vmatprep.subr.bf16.mxu0 0
    %2875 = vmatpush1.bf16.msra.mxu0 0
    %2876 = vmatprep.subr.bf16.mxu0 0
    %2877 = vmatpush1.bf16.msra.mxu0 0
    %2878 = vmatprep.subr.bf16.mxu0 0
    %2879 = vmatpush1.bf16.msra.mxu0 0
    %2880 = vmatprep.subr.bf16.mxu0 0
    %2881 = vmatpush1.bf16.msra.mxu0 0
    %2882 = vmatprep.mubr.bf16.mxu0 0
    %2883 = vmatmul.mubr.bf16.gmra.mrb[0].mxu0 %v2848
    %v2884 = vpop.f32.mrb[0].mxu0
    %v2885 = vadd.f32 %v2771, %v2884
    %v2886 = vpop.f32.mrb[0].mxu0
    %v2887 = vadd.f32 %v2773, %v2886
    %v2888 = vpop.f32.mrb[0].mxu0
    %v2889 = vpop.f32.mrb[0].mxu0
    %2890 = vdwg.mxu0
    %2891 = vmatprep.subr.bf16.mxu0 %v1514
    %2892 = vmatpush1.bf16.msra.mxu0 %v1513
    %2893 = vmatprep.subr.bf16.mxu0 %v1518
    %2894 = vmatpush1.bf16.msra.mxu0 %v1517
    %2895 = vmatprep.subr.bf16.mxu0 %v1522
    %2896 = vmatpush1.bf16.msra.mxu0 %v1521
    %2897 = vmatprep.subr.bf16.mxu0 %v1526
    %2898 = vmatpush1.bf16.msra.mxu0 %v1525
    %2899 = vmatprep.subr.bf16.mxu0 %v1530
    %2900 = vmatpush1.bf16.msra.mxu0 %v1529
    %2901 = vmatprep.subr.bf16.mxu0 %v1534
    %2902 = vmatpush1.bf16.msra.mxu0 %v1533
    %2903 = vmatprep.subr.bf16.mxu0 %v1538
    %2904 = vmatpush1.bf16.msra.mxu0 %v1537
    %2905 = vmatprep.subr.bf16.mxu0 %v1542
    %2906 = vmatpush1.bf16.msra.mxu0 %v1541
    %2907 = vmatprep.subr.bf16.mxu0 0
    %2908 = vmatpush1.bf16.msra.mxu0 0
    %2909 = vmatprep.subr.bf16.mxu0 0
    %2910 = vmatpush1.bf16.msra.mxu0 0
    %2911 = vmatprep.subr.bf16.mxu0 0
    %2912 = vmatpush1.bf16.msra.mxu0 0
    %2913 = vmatprep.subr.bf16.mxu0 0
    %2914 = vmatpush1.bf16.msra.mxu0 0
    %2915 = vmatprep.subr.bf16.mxu0 0
    %2916 = vmatpush1.bf16.msra.mxu0 0
    %2917 = vmatprep.subr.bf16.mxu0 0
    %2918 = vmatpush1.bf16.msra.mxu0 0
    %2919 = vmatprep.subr.bf16.mxu0 0
    %2920 = vmatpush1.bf16.msra.mxu0 0
    %2921 = vmatprep.subr.bf16.mxu0 0
    %2922 = vmatpush1.bf16.msra.mxu0 0
    %2923 = vmatprep.mubr.bf16.mxu0 0
    %2924 = vmatmul.mubr.bf16.gmra.mrb[0].mxu0 %v2848
    %v2925 = vpop.f32.mrb[0].mxu0
    %v2926 = vadd.f32 %v2812, %v2925
    %v2927 = vpop.f32.mrb[0].mxu0
    %v2928 = vadd.f32 %v2814, %v2927
    %v2929 = vpop.f32.mrb[0].mxu0
    %v2930 = vpop.f32.mrb[0].mxu0
    %2931 = vdwg.mxu0
    %v2932 = vadd.f32 %v2885, %v1661
    %v2933 = vadd.f32 %v2887, %v1665
    %v2934 = vadd.f32 %v2926, %v1669
    %v2935 = vadd.f32 %v2928, %v1673
    %v2936 = vxor.u32 %v2932, 2147483648
    %v2937 = vmul.f32 %v2936, 1.442695
    %v2938 = vpow.pop %v2937
    %v2939 = vadd.f32 %v2938, 1.0
    %v2940 = vrcp.pop %v2939
    %v2941 = vmul.f32 1.0, %v2940
    %v2942 = vxor.u32 %v2933, 2147483648
    %v2943 = vmul.f32 %v2942, 1.442695
    %v2944 = vpow.pop %v2943
    %v2945 = vadd.f32 %v2944, 1.0
    %v2946 = vrcp.pop %v2945
    %v2947 = vmul.f32 1.0, %v2946
    %v2948 = vtanh.pop %v2934
    %v2949 = vxor.u32 %v2935, 2147483648
    %v2950 = vmul.f32 %v2949, 1.442695
    %v2951 = vpow.pop %v2950
    %v2952 = vadd.f32 %v2951, 1.0
    %v2953 = vrcp.pop %v2952
    %v2954 = vmul.f32 1.0, %v2953
    %v2955 = vmul.f32 %v2947, %v2330
    %v2956 = vmul.f32 %v2941, %v2948
    %v2957 = vadd.f32 %v2955, %v2956
    %v2958 = vtanh.pop %v2957
    %v2959 = vmul.f32 %v2954, %v2958
    %2960 = vmatprep.subr.bf16.mxu0 %v693
    %2961 = vmatpush1.bf16.msra.mxu0 %v692
    %2962 = vmatprep.subr.bf16.mxu0 %v697
    %2963 = vmatpush1.bf16.msra.mxu0 %v696
    %2964 = vmatprep.subr.bf16.mxu0 %v701
    %2965 = vmatpush1.bf16.msra.mxu0 %v700
    %2966 = vmatprep.subr.bf16.mxu0 %v705
    %2967 = vmatpush1.bf16.msra.mxu0 %v704
    %2968 = vmatprep.subr.bf16.mxu0 %v709
    %2969 = vmatpush1.bf16.msra.mxu0 %v708
    %2970 = vmatprep.subr.bf16.mxu0 %v713
    %2971 = vmatpush1.bf16.msra.mxu0 %v712
    %2972 = vmatprep.subr.bf16.mxu0 %v717
    %2973 = vmatpush1.bf16.msra.mxu0 %v716
    %2974 = vmatprep.subr.bf16.mxu0 %v721
    %2975 = vmatpush1.bf16.msra.mxu0 %v720
    %2976 = vmatprep.subr.bf16.mxu0 0
    %2977 = vmatpush1.bf16.msra.mxu0 0
    %2978 = vmatprep.subr.bf16.mxu0 0
    %2979 = vmatpush1.bf16.msra.mxu0 0
    %2980 = vmatprep.subr.bf16.mxu0 0
    %2981 = vmatpush1.bf16.msra.mxu0 0
    %2982 = vmatprep.subr.bf16.mxu0 0
    %2983 = vmatpush1.bf16.msra.mxu0 0
    %2984 = vmatprep.subr.bf16.mxu0 0
    %2985 = vmatpush1.bf16.msra.mxu0 0
    %2986 = vmatprep.subr.bf16.mxu0 0
    %2987 = vmatpush1.bf16.msra.mxu0 0
    %2988 = vmatprep.subr.bf16.mxu0 0
    %2989 = vmatpush1.bf16.msra.mxu0 0
    %2990 = vmatprep.subr.bf16.mxu0 0
    %2991 = vmatpush1.bf16.msra.mxu0 0
    %2992 = vmatprep.mubr.bf16.mxu0 0
    %2993 = vmatmul.mubr.bf16.gmra.mrb[0].mxu0 %v2848
    %v2994 = vpop.f32.mrb[0].mxu0
    %v2995 = vadd.f32 0.0, %v2994
    %v2996 = vpop.f32.mrb[0].mxu0
    %v2997 = vadd.f32 0.0, %v2996
    %v2998 = vpop.f32.mrb[0].mxu0
    %v2999 = vpop.f32.mrb[0].mxu0
    %3000 = vdwg.mxu0
    %3001 = vmatprep.subr.bf16.mxu0 %v695
    %3002 = vmatpush1.bf16.msra.mxu0 %v694
    %3003 = vmatprep.subr.bf16.mxu0 %v699
    %3004 = vmatpush1.bf16.msra.mxu0 %v698
    %3005 = vmatprep.subr.bf16.mxu0 %v703
    %3006 = vmatpush1.bf16.msra.mxu0 %v702
    %3007 = vmatprep.subr.bf16.mxu0 %v707
    %3008 = vmatpush1.bf16.msra.mxu0 %v706
    %3009 = vmatprep.subr.bf16.mxu0 %v711
    %3010 = vmatpush1.bf16.msra.mxu0 %v710
    %3011 = vmatprep.subr.bf16.mxu0 %v715
    %3012 = vmatpush1.bf16.msra.mxu0 %v714
    %3013 = vmatprep.subr.bf16.mxu0 %v719
    %3014 = vmatpush1.bf16.msra.mxu0 %v718
    %3015 = vmatprep.subr.bf16.mxu0 %v723
    %3016 = vmatpush1.bf16.msra.mxu0 %v722
    %3017 = vmatprep.subr.bf16.mxu0 0
    %3018 = vmatpush1.bf16.msra.mxu0 0
    %3019 = vmatprep.subr.bf16.mxu0 0
    %3020 = vmatpush1.bf16.msra.mxu0 0
    %3021 = vmatprep.subr.bf16.mxu0 0
    %3022 = vmatpush1.bf16.msra.mxu0 0
    %3023 = vmatprep.subr.bf16.mxu0 0
    %3024 = vmatpush1.bf16.msra.mxu0 0
    %3025 = vmatprep.subr.bf16.mxu0 0
    %3026 = vmatpush1.bf16.msra.mxu0 0
    %3027 = vmatprep.subr.bf16.mxu0 0
    %3028 = vmatpush1.bf16.msra.mxu0 0
    %3029 = vmatprep.subr.bf16.mxu0 0
    %3030 = vmatpush1.bf16.msra.mxu0 0
    %3031 = vmatprep.subr.bf16.mxu0 0
    %3032 = vmatpush1.bf16.msra.mxu0 0
    %3033 = vmatprep.mubr.bf16.mxu0 0
    %3034 = vmatmul.mubr.bf16.gmra.mrb[0].mxu0 %v2848
    %v3035 = vpop.f32.mrb[0].mxu0
    %v3036 = vadd.f32 0.0, %v3035
    %v3037 = vpop.f32.mrb[0].mxu0
    %v3038 = vadd.f32 0.0, %v3037
    %v3039 = vpop.f32.mrb[0].mxu0
    %v3040 = vpop.f32.mrb[0].mxu0
    %3041 = vdwg.mxu0
    %v3046 = vrot.slane %v2995, 5
    %v3047 = vrot.slane %v2997, 5
    %v3048 = vrot.slane %v3036, 5
    %v3049 = vrot.slane %v3038, 5
    %v3050 = vrot.slane %v2995, 6
    %v3051 = vrot.slane %v2997, 6
    %v3052 = vrot.slane %v3036, 6
    %v3053 = vrot.slane %v3038, 6
    %v3054 = vrot.slane %v2995, 7
    %v3055 = vrot.slane %v2997, 7
    %v3056 = vrot.slane %v3036, 7
    %v3057 = vrot.slane %v3038, 7
    %v3058 = vrot.slane %v2995, 1
    %v3059 = vrot.slane %v2997, 1
    %v3060 = vrot.slane %v3036, 1
    %v3061 = vrot.slane %v3038, 1
    %v3062 = vrot.slane %v2995, 2
    %v3063 = vrot.slane %v2997, 2
    %v3064 = vrot.slane %v3036, 2
    %v3065 = vrot.slane %v3038, 2
    %v3066 = vrot.slane %v2995, 3
    %v3067 = vrot.slane %v2997, 3
    %v3068 = vrot.slane %v3036, 3
    %v3069 = vrot.slane %v3038, 3
    %v3070 = vrot.slane %v2995, 4
    %v3071 = vrot.slane %v2997, 4
    %v3072 = vrot.slane %v3036, 4
    %v3073 = vrot.slane %v3038, 4
    %v3106 = vadd.f32 %v388, %v3046
    %v3107 = vadd.f32 %v390, %v3047
    %v3108 = vadd.f32 %v461, %v3048
    %v3109 = vadd.f32 %v463, %v3049
    %v3110 = vadd.f32 %v392, %v3050
    %v3111 = vadd.f32 %v394, %v3051
    %v3112 = vadd.f32 %v465, %v3052
    %v3113 = vadd.f32 %v467, %v3053
    %v3114 = vadd.f32 %v398, %v3054
    %v3115 = vadd.f32 %v400, %v3055
    %v3116 = vadd.f32 %v471, %v3056
    %v3117 = vadd.f32 %v473, %v3057
    %v3118 = vadd.f32 %v402, %v2995
    %v3119 = vadd.f32 %v404, %v2997
    %v3120 = vadd.f32 %v475, %v3036
    %v3121 = vadd.f32 %v477, %v3038
    %v3122 = vadd.f32 %v408, %v3058
    %v3123 = vadd.f32 %v410, %v3059
    %v3124 = vadd.f32 %v481, %v3060
    %v3125 = vadd.f32 %v483, %v3061
    %v3126 = vadd.f32 %v412, %v3062
    %v3127 = vadd.f32 %v414, %v3063
    %v3128 = vadd.f32 %v485, %v3064
    %v3129 = vadd.f32 %v487, %v3065
    %v3130 = vadd.f32 %v418, %v3066
    %v3131 = vadd.f32 %v420, %v3067
    %v3132 = vadd.f32 %v491, %v3068
    %v3133 = vadd.f32 %v493, %v3069
    %v3134 = vadd.f32 %v422, %v3070
    %v3135 = vadd.f32 %v424, %v3071
    %v3136 = vadd.f32 %v495, %v3072
    %v3137 = vadd.f32 %v497, %v3073
    %v3138 = vxor.u32 %v3106, 2147483648
    %v3139 = vxor.u32 %v3110, 2147483648
    %v3140 = vxor.u32 %v3114, 2147483648
    %v3141 = vxor.u32 %v3118, 2147483648
    %v3142 = vxor.u32 %v3122, 2147483648
    %v3143 = vxor.u32 %v3126, 2147483648
    %v3144 = vxor.u32 %v3130, 2147483648
    %v3145 = vxor.u32 %v3134, 2147483648
    %v3146 = vmul.f32 %v3138, 1.442695
    %v3147 = vpow.pop %v3146
    %v3148 = vmul.f32 %v3139, 1.442695
    %v3149 = vpow.pop %v3148
    %v3150 = vmul.f32 %v3140, 1.442695
    %v3151 = vpow.pop %v3150
    %v3152 = vmul.f32 %v3141, 1.442695
    %v3153 = vpow.pop %v3152
    %v3154 = vmul.f32 %v3142, 1.442695
    %v3155 = vpow.pop %v3154
    %v3156 = vmul.f32 %v3143, 1.442695
    %v3157 = vpow.pop %v3156
    %v3158 = vmul.f32 %v3144, 1.442695
    %v3159 = vpow.pop %v3158
    %v3160 = vmul.f32 %v3145, 1.442695
    %v3161 = vpow.pop %v3160
    %v3162 = vadd.f32 %v3147, 1.0
    %v3163 = vadd.f32 %v3149, 1.0
    %v3164 = vadd.f32 %v3151, 1.0
    %v3165 = vadd.f32 %v3153, 1.0
    %v3166 = vadd.f32 %v3155, 1.0
    %v3167 = vadd.f32 %v3157, 1.0
    %v3168 = vadd.f32 %v3159, 1.0
    %v3169 = vadd.f32 %v3161, 1.0
    %v3170 = vrcp.pop %v3162
    %v3171 = vmul.f32 1.0, %v3170
    %v3172 = vrcp.pop %v3163
    %v3173 = vmul.f32 1.0, %v3172
    %v3174 = vrcp.pop %v3164
    %v3175 = vmul.f32 1.0, %v3174
    %v3176 = vrcp.pop %v3165
    %v3177 = vmul.f32 1.0, %v3176
    %v3178 = vrcp.pop %v3166
    %v3179 = vmul.f32 1.0, %v3178
    %v3180 = vrcp.pop %v3167
    %v3181 = vmul.f32 1.0, %v3180
    %v3182 = vrcp.pop %v3168
    %v3183 = vmul.f32 1.0, %v3182
    %v3184 = vrcp.pop %v3169
    %v3185 = vmul.f32 1.0, %v3184
    %v3186 = vxor.u32 %v3107, 2147483648
    %v3187 = vxor.u32 %v3111, 2147483648
    %v3188 = vxor.u32 %v3115, 2147483648
    %v3189 = vxor.u32 %v3119, 2147483648
    %v3190 = vxor.u32 %v3123, 2147483648
    %v3191 = vxor.u32 %v3127, 2147483648
    %v3192 = vxor.u32 %v3131, 2147483648
    %v3193 = vxor.u32 %v3135, 2147483648
    %v3194 = vmul.f32 %v3186, 1.442695
    %v3195 = vpow.pop %v3194
    %v3196 = vmul.f32 %v3187, 1.442695
    %v3197 = vpow.pop %v3196
    %v3198 = vmul.f32 %v3188, 1.442695
    %v3199 = vpow.pop %v3198
    %v3200 = vmul.f32 %v3189, 1.442695
    %v3201 = vpow.pop %v3200
    %v3202 = vmul.f32 %v3190, 1.442695
    %v3203 = vpow.pop %v3202
    %v3204 = vmul.f32 %v3191, 1.442695
    %v3205 = vpow.pop %v3204
    %v3206 = vmul.f32 %v3192, 1.442695
    %v3207 = vpow.pop %v3206
    %v3208 = vmul.f32 %v3193, 1.442695
    %v3209 = vpow.pop %v3208
    %v3210 = vadd.f32 %v3195, 1.0
    %v3211 = vadd.f32 %v3197, 1.0
    %v3212 = vadd.f32 %v3199, 1.0
    %v3213 = vadd.f32 %v3201, 1.0
    %v3214 = vadd.f32 %v3203, 1.0
    %v3215 = vadd.f32 %v3205, 1.0
    %v3216 = vadd.f32 %v3207, 1.0
    %v3217 = vadd.f32 %v3209, 1.0
    %v3218 = vrcp.pop %v3210
    %v3219 = vmul.f32 1.0, %v3218
    %v3220 = vrcp.pop %v3211
    %v3221 = vmul.f32 1.0, %v3220
    %v3222 = vrcp.pop %v3212
    %v3223 = vmul.f32 1.0, %v3222
    %v3224 = vrcp.pop %v3213
    %v3225 = vmul.f32 1.0, %v3224
    %v3226 = vrcp.pop %v3214
    %v3227 = vmul.f32 1.0, %v3226
    %v3228 = vrcp.pop %v3215
    %v3229 = vmul.f32 1.0, %v3228
    %v3230 = vrcp.pop %v3216
    %v3231 = vmul.f32 1.0, %v3230
    %v3232 = vrcp.pop %v3217
    %v3233 = vmul.f32 1.0, %v3232
    %v3234 = vtanh.pop %v3108
    %v3235 = vtanh.pop %v3112
    %v3236 = vtanh.pop %v3116
    %v3237 = vtanh.pop %v3120
    %v3238 = vtanh.pop %v3124
    %v3239 = vtanh.pop %v3128
    %v3240 = vtanh.pop %v3132
    %v3241 = vtanh.pop %v3136
    %v3242 = vxor.u32 %v3109, 2147483648
    %v3243 = vxor.u32 %v3113, 2147483648
    %v3244 = vxor.u32 %v3117, 2147483648
    %v3245 = vxor.u32 %v3121, 2147483648
    %v3246 = vxor.u32 %v3125, 2147483648
    %v3247 = vxor.u32 %v3129, 2147483648
    %v3248 = vxor.u32 %v3133, 2147483648
    %v3249 = vxor.u32 %v3137, 2147483648
    %v3250 = vmul.f32 %v3242, 1.442695
    %v3251 = vpow.pop %v3250
    %v3252 = vmul.f32 %v3243, 1.442695
    %v3253 = vpow.pop %v3252
    %v3254 = vmul.f32 %v3244, 1.442695
    %v3255 = vpow.pop %v3254
    %v3256 = vmul.f32 %v3245, 1.442695
    %v3257 = vpow.pop %v3256
    %v3258 = vmul.f32 %v3246, 1.442695
    %v3259 = vpow.pop %v3258
    %v3260 = vmul.f32 %v3247, 1.442695
    %v3261 = vpow.pop %v3260
    %v3262 = vmul.f32 %v3248, 1.442695
    %v3263 = vpow.pop %v3262
    %v3264 = vmul.f32 %v3249, 1.442695
    %v3265 = vpow.pop %v3264
    %v3266 = vadd.f32 %v3251, 1.0
    %v3267 = vadd.f32 %v3253, 1.0
    %v3268 = vadd.f32 %v3255, 1.0
    %v3269 = vadd.f32 %v3257, 1.0
    %v3270 = vadd.f32 %v3259, 1.0
    %v3271 = vadd.f32 %v3261, 1.0
    %v3272 = vadd.f32 %v3263, 1.0
    %v3273 = vadd.f32 %v3265, 1.0
    %v3274 = vrcp.pop %v3266
    %v3275 = vmul.f32 1.0, %v3274
    %v3276 = vrcp.pop %v3267
    %v3277 = vmul.f32 1.0, %v3276
    %v3278 = vrcp.pop %v3268
    %v3279 = vmul.f32 1.0, %v3278
    %v3280 = vrcp.pop %v3269
    %v3281 = vmul.f32 1.0, %v3280
    %v3282 = vrcp.pop %v3270
    %v3283 = vmul.f32 1.0, %v3282
    %v3284 = vrcp.pop %v3271
    %v3285 = vmul.f32 1.0, %v3284
    %v3286 = vrcp.pop %v3272
    %v3287 = vmul.f32 1.0, %v3286
    %v3288 = vrcp.pop %v3273
    %v3289 = vmul.f32 1.0, %v3288
    %v3298 = vrot.slane %v2703, 7
    %v3299 = vrot.slane %v2704, 7
    %v3300 = vrot.slane %v2705, 7
    %v3301 = vrot.slane %v2706, 7
    %v3302 = vrot.slane %v2707, 7
    %v3303 = vrot.slane %v2708, 7
    %v3304 = vrot.slane %v2709, 7
    %v3305 = vrot.slane %v2710, 7
    %v3314 = vmul.f32 %v3219, %v3298
    %v3315 = vmul.f32 %v3221, %v3299
    %v3316 = vmul.f32 %v3223, %v3300
    %v3317 = vmul.f32 %v3225, %v3301
    %v3318 = vmul.f32 %v3227, %v3302
    %v3319 = vmul.f32 %v3229, %v3303
    %v3320 = vmul.f32 %v3231, %v3304
    %v3321 = vmul.f32 %v3233, %v3305
    %v3322 = vmul.f32 %v3171, %v3234
    %v3323 = vmul.f32 %v3173, %v3235
    %v3324 = vmul.f32 %v3175, %v3236
    %v3325 = vmul.f32 %v3177, %v3237
    %v3326 = vmul.f32 %v3179, %v3238
    %v3327 = vmul.f32 %v3181, %v3239
    %v3328 = vmul.f32 %v3183, %v3240
    %v3329 = vmul.f32 %v3185, %v3241
    %v3330 = vadd.f32 %v3314, %v3322
    %v3331 = vadd.f32 %v3315, %v3323
    %v3332 = vadd.f32 %v3316, %v3324
    %v3333 = vadd.f32 %v3317, %v3325
    %v3334 = vadd.f32 %v3318, %v3326
    %v3335 = vadd.f32 %v3319, %v3327
    %v3336 = vadd.f32 %v3320, %v3328
    %v3337 = vadd.f32 %v3321, %v3329
    %v3338 = vtanh.pop %v3330
    %v3339 = vtanh.pop %v3331
    %v3340 = vtanh.pop %v3332
    %v3341 = vtanh.pop %v3333
    %v3342 = vtanh.pop %v3334
    %v3343 = vtanh.pop %v3335
    %v3344 = vtanh.pop %v3336
    %v3345 = vtanh.pop %v3337
    %v3346 = vmul.f32 %v3275, %v3338
    %v3347 = vmul.f32 %v3277, %v3339
    %v3348 = vmul.f32 %v3279, %v3340
    %v3349 = vmul.f32 %v3281, %v3341
    %v3350 = vmul.f32 %v3283, %v3342
    %v3351 = vmul.f32 %v3285, %v3343
    %v3352 = vmul.f32 %v3287, %v3344
    %v3353 = vmul.f32 %v3289, %v3345
    %v3354 = vpack.c.bf16 %v3346, %v3346
    %v3355 = vpack.c.bf16 %v3347, %v3347
    %v3356 = vpack.c.bf16 %v3348, %v3348
    %v3357 = vpack.c.bf16 %v3349, %v3349
    %v3358 = vpack.c.bf16 %v3350, %v3350
    %v3359 = vpack.c.bf16 %v3351, %v3351
    %v3360 = vpack.c.bf16 %v3352, %v3352
    %v3361 = vpack.c.bf16 %v3353, %v3353
    %v3362 = vpack.c.bf16 %v2959, %v2959
    %3363 = vmatprep.subr.bf16.mxu0 %v1231
    %3364 = vmatpush1.bf16.msra.mxu0 %v1230
    %3365 = vmatprep.subr.bf16.mxu0 %v1235
    %3366 = vmatpush1.bf16.msra.mxu0 %v1234
    %3367 = vmatprep.subr.bf16.mxu0 %v1239
    %3368 = vmatpush1.bf16.msra.mxu0 %v1238
    %3369 = vmatprep.subr.bf16.mxu0 %v1243
    %3370 = vmatpush1.bf16.msra.mxu0 %v1242
    %3371 = vmatprep.subr.bf16.mxu0 %v1247
    %3372 = vmatpush1.bf16.msra.mxu0 %v1246
    %3373 = vmatprep.subr.bf16.mxu0 %v1251
    %3374 = vmatpush1.bf16.msra.mxu0 %v1250
    %3375 = vmatprep.subr.bf16.mxu0 %v1255
    %3376 = vmatpush1.bf16.msra.mxu0 %v1254
    %3377 = vmatprep.subr.bf16.mxu0 %v1259
    %3378 = vmatpush1.bf16.msra.mxu0 %v1258
    %3379 = vmatprep.subr.bf16.mxu0 0
    %3380 = vmatpush1.bf16.msra.mxu0 0
    %3381 = vmatprep.subr.bf16.mxu0 0
    %3382 = vmatpush1.bf16.msra.mxu0 0
    %3383 = vmatprep.subr.bf16.mxu0 0
    %3384 = vmatpush1.bf16.msra.mxu0 0
    %3385 = vmatprep.subr.bf16.mxu0 0
    %3386 = vmatpush1.bf16.msra.mxu0 0
    %3387 = vmatprep.subr.bf16.mxu0 0
    %3388 = vmatpush1.bf16.msra.mxu0 0
    %3389 = vmatprep.subr.bf16.mxu0 0
    %3390 = vmatpush1.bf16.msra.mxu0 0
    %3391 = vmatprep.subr.bf16.mxu0 0
    %3392 = vmatpush1.bf16.msra.mxu0 0
    %3393 = vmatprep.subr.bf16.mxu0 0
    %3394 = vmatpush1.bf16.msra.mxu0 0
    %3395 = vmatprep.mubr.bf16.mxu0 0
    %3396 = vmatmul.mubr.bf16.gmra.mrb[0].mxu0 %v3362
    %v3397 = vpop.f32.mrb[0].mxu0
    %v3398 = vadd.f32 0.0, %v3397
    %v3399 = vpop.f32.mrb[0].mxu0
    %v3400 = vadd.f32 0.0, %v3399
    %v3401 = vpop.f32.mrb[0].mxu0
    %v3402 = vpop.f32.mrb[0].mxu0
    %3403 = vdwg.mxu0
    %3404 = vmatprep.subr.bf16.mxu0 %v1233
    %3405 = vmatpush1.bf16.msra.mxu0 %v1232
    %3406 = vmatprep.subr.bf16.mxu0 %v1237
    %3407 = vmatpush1.bf16.msra.mxu0 %v1236
    %3408 = vmatprep.subr.bf16.mxu0 %v1241
    %3409 = vmatpush1.bf16.msra.mxu0 %v1240
    %3410 = vmatprep.subr.bf16.mxu0 %v1245
    %3411 = vmatpush1.bf16.msra.mxu0 %v1244
    %3412 = vmatprep.subr.bf16.mxu0 %v1249
    %3413 = vmatpush1.bf16.msra.mxu0 %v1248
    %3414 = vmatprep.subr.bf16.mxu0 %v1253
    %3415 = vmatpush1.bf16.msra.mxu0 %v1252
    %3416 = vmatprep.subr.bf16.mxu0 %v1257
    %3417 = vmatpush1.bf16.msra.mxu0 %v1256
    %3418 = vmatprep.subr.bf16.mxu0 %v1261
    %3419 = vmatpush1.bf16.msra.mxu0 %v1260
    %3420 = vmatprep.subr.bf16.mxu0 0
    %3421 = vmatpush1.bf16.msra.mxu0 0
    %3422 = vmatprep.subr.bf16.mxu0 0
    %3423 = vmatpush1.bf16.msra.mxu0 0
    %3424 = vmatprep.subr.bf16.mxu0 0
    %3425 = vmatpush1.bf16.msra.mxu0 0
    %3426 = vmatprep.subr.bf16.mxu0 0
    %3427 = vmatpush1.bf16.msra.mxu0 0
    %3428 = vmatprep.subr.bf16.mxu0 0
    %3429 = vmatpush1.bf16.msra.mxu0 0
    %3430 = vmatprep.subr.bf16.mxu0 0
    %3431 = vmatpush1.bf16.msra.mxu0 0
    %3432 = vmatprep.subr.bf16.mxu0 0
    %3433 = vmatpush1.bf16.msra.mxu0 0
    %3434 = vmatprep.subr.bf16.mxu0 0
    %3435 = vmatpush1.bf16.msra.mxu0 0
    %3436 = vmatprep.mubr.bf16.mxu0 0
    %3437 = vmatmul.mubr.bf16.gmra.mrb[0].mxu0 %v3362
    %v3438 = vpop.f32.mrb[0].mxu0
    %v3439 = vadd.f32 0.0, %v3438
    %v3440 = vpop.f32.mrb[0].mxu0
    %v3441 = vadd.f32 0.0, %v3440
    %v3442 = vpop.f32.mrb[0].mxu0
    %v3443 = vpop.f32.mrb[0].mxu0
    %3444 = vdwg.mxu0
    %v3453 = vunpack.c.l.b16 %v3354
    %v3454 = vunpack.c.l.b16 %v3355
    %v3455 = vunpack.c.l.b16 %v3356
    %v3456 = vunpack.c.l.b16 %v3357
    %v3457 = vunpack.c.l.b16 %v3358
    %v3458 = vunpack.c.l.b16 %v3359
    %v3459 = vunpack.c.l.b16 %v3360
    %v3460 = vunpack.c.l.b16 %v3361
    %v3461 = vrot.slane %v3453, 3
    %v3462 = vrot.slane %v3454, 2
    %v3463 = vsel %vm1393, %v3462, %v3461
    %v3464 = vrot.slane %v3455, 1
    %v3465 = vsel %vm1396, %v3464, %v3463
    %v3466 = vsel %vm1399, %v3456, %v3465
    %v3467 = vrot.slane %v3457, 7
    %v3468 = vsel %vm1402, %v3467, %v3466
    %v3469 = vrot.slane %v3458, 6
    %v3470 = vsel %vm1405, %v3469, %v3468
    %v3471 = vrot.slane %v3459, 5
    %v3472 = vsel %vm1408, %v3471, %v3470
    %v3473 = vrot.slane %v3460, 4
    %v3474 = vsel %vm1411, %v3473, %v3472
    %v3475 = vpack.c.b16 %v3474, %v3474
    %3477 = vmatprep.subr.bf16.mxu0 %v1512
    %3478 = vmatpush1.bf16.msra.mxu0 %v1511
    %3479 = vmatprep.subr.bf16.mxu0 %v1516
    %3480 = vmatpush1.bf16.msra.mxu0 %v1515
    %3481 = vmatprep.subr.bf16.mxu0 %v1520
    %3482 = vmatpush1.bf16.msra.mxu0 %v1519
    %3483 = vmatprep.subr.bf16.mxu0 %v1524
    %3484 = vmatpush1.bf16.msra.mxu0 %v1523
    %3485 = vmatprep.subr.bf16.mxu0 %v1528
    %3486 = vmatpush1.bf16.msra.mxu0 %v1527
    %3487 = vmatprep.subr.bf16.mxu0 %v1532
    %3488 = vmatpush1.bf16.msra.mxu0 %v1531
    %3489 = vmatprep.subr.bf16.mxu0 %v1536
    %3490 = vmatpush1.bf16.msra.mxu0 %v1535
    %3491 = vmatprep.subr.bf16.mxu0 %v1540
    %3492 = vmatpush1.bf16.msra.mxu0 %v1539
    %3493 = vmatprep.subr.bf16.mxu0 0
    %3494 = vmatpush1.bf16.msra.mxu0 0
    %3495 = vmatprep.subr.bf16.mxu0 0
    %3496 = vmatpush1.bf16.msra.mxu0 0
    %3497 = vmatprep.subr.bf16.mxu0 0
    %3498 = vmatpush1.bf16.msra.mxu0 0
    %3499 = vmatprep.subr.bf16.mxu0 0
    %3500 = vmatpush1.bf16.msra.mxu0 0
    %3501 = vmatprep.subr.bf16.mxu0 0
    %3502 = vmatpush1.bf16.msra.mxu0 0
    %3503 = vmatprep.subr.bf16.mxu0 0
    %3504 = vmatpush1.bf16.msra.mxu0 0
    %3505 = vmatprep.subr.bf16.mxu0 0
    %3506 = vmatpush1.bf16.msra.mxu0 0
    %3507 = vmatprep.subr.bf16.mxu0 0
    %3508 = vmatpush1.bf16.msra.mxu0 0
    %3509 = vmatprep.mubr.bf16.mxu0 0
    %3510 = vmatmul.mubr.bf16.gmra.mrb[0].mxu0 %v3475
    %v3511 = vpop.f32.mrb[0].mxu0
    %v3512 = vadd.f32 %v3398, %v3511
    %v3513 = vpop.f32.mrb[0].mxu0
    %v3514 = vadd.f32 %v3400, %v3513
    %v3515 = vpop.f32.mrb[0].mxu0
    %v3516 = vpop.f32.mrb[0].mxu0
    %3517 = vdwg.mxu0
    %3518 = vmatprep.subr.bf16.mxu0 %v1514
    %3519 = vmatpush1.bf16.msra.mxu0 %v1513
    %3520 = vmatprep.subr.bf16.mxu0 %v1518
    %3521 = vmatpush1.bf16.msra.mxu0 %v1517
    %3522 = vmatprep.subr.bf16.mxu0 %v1522
    %3523 = vmatpush1.bf16.msra.mxu0 %v1521
    %3524 = vmatprep.subr.bf16.mxu0 %v1526
    %3525 = vmatpush1.bf16.msra.mxu0 %v1525
    %3526 = vmatprep.subr.bf16.mxu0 %v1530
    %3527 = vmatpush1.bf16.msra.mxu0 %v1529
    %3528 = vmatprep.subr.bf16.mxu0 %v1534
    %3529 = vmatpush1.bf16.msra.mxu0 %v1533
    %3530 = vmatprep.subr.bf16.mxu0 %v1538
    %3531 = vmatpush1.bf16.msra.mxu0 %v1537
    %3532 = vmatprep.subr.bf16.mxu0 %v1542
    %3533 = vmatpush1.bf16.msra.mxu0 %v1541
    %3534 = vmatprep.subr.bf16.mxu0 0
    %3535 = vmatpush1.bf16.msra.mxu0 0
    %3536 = vmatprep.subr.bf16.mxu0 0
    %3537 = vmatpush1.bf16.msra.mxu0 0
    %3538 = vmatprep.subr.bf16.mxu0 0
    %3539 = vmatpush1.bf16.msra.mxu0 0
    %3540 = vmatprep.subr.bf16.mxu0 0
    %3541 = vmatpush1.bf16.msra.mxu0 0
    %3542 = vmatprep.subr.bf16.mxu0 0
    %3543 = vmatpush1.bf16.msra.mxu0 0
    %3544 = vmatprep.subr.bf16.mxu0 0
    %3545 = vmatpush1.bf16.msra.mxu0 0
    %3546 = vmatprep.subr.bf16.mxu0 0
    %3547 = vmatpush1.bf16.msra.mxu0 0
    %3548 = vmatprep.subr.bf16.mxu0 0
    %3549 = vmatpush1.bf16.msra.mxu0 0
    %3550 = vmatprep.mubr.bf16.mxu0 0
    %3551 = vmatmul.mubr.bf16.gmra.mrb[0].mxu0 %v3475
    %v3552 = vpop.f32.mrb[0].mxu0
    %v3553 = vadd.f32 %v3439, %v3552
    %v3554 = vpop.f32.mrb[0].mxu0
    %v3555 = vadd.f32 %v3441, %v3554
    %v3556 = vpop.f32.mrb[0].mxu0
    %v3557 = vpop.f32.mrb[0].mxu0
    %3558 = vdwg.mxu0
    %v3559 = vadd.f32 %v3512, %v1661
    %v3560 = vadd.f32 %v3514, %v1665
    %v3561 = vadd.f32 %v3553, %v1669
    %v3562 = vadd.f32 %v3555, %v1673
    %v3563 = vxor.u32 %v3559, 2147483648
    %v3564 = vmul.f32 %v3563, 1.442695
    %v3565 = vpow.pop %v3564
    %v3566 = vadd.f32 %v3565, 1.0
    %v3567 = vrcp.pop %v3566
    %v3568 = vmul.f32 1.0, %v3567
    %v3569 = vxor.u32 %v3560, 2147483648
    %v3570 = vmul.f32 %v3569, 1.442695
    %v3571 = vpow.pop %v3570
    %v3572 = vadd.f32 %v3571, 1.0
    %v3573 = vrcp.pop %v3572
    %v3574 = vmul.f32 1.0, %v3573
    %v3575 = vtanh.pop %v3561
    %v3576 = vxor.u32 %v3562, 2147483648
    %v3577 = vmul.f32 %v3576, 1.442695
    %v3578 = vpow.pop %v3577
    %v3579 = vadd.f32 %v3578, 1.0
    %v3580 = vrcp.pop %v3579
    %v3581 = vmul.f32 1.0, %v3580
    %v3582 = vmul.f32 %v3574, %v2957
    %v3583 = vmul.f32 %v3568, %v3575
    %v3584 = vadd.f32 %v3582, %v3583
    %v3585 = vtanh.pop %v3584
    %v3586 = vmul.f32 %v3581, %v3585
    %3587 = vmatprep.subr.bf16.mxu0 %v693
    %3588 = vmatpush1.bf16.msra.mxu0 %v692
    %3589 = vmatprep.subr.bf16.mxu0 %v697
    %3590 = vmatpush1.bf16.msra.mxu0 %v696
    %3591 = vmatprep.subr.bf16.mxu0 %v701
    %3592 = vmatpush1.bf16.msra.mxu0 %v700
    %3593 = vmatprep.subr.bf16.mxu0 %v705
    %3594 = vmatpush1.bf16.msra.mxu0 %v704
    %3595 = vmatprep.subr.bf16.mxu0 %v709
    %3596 = vmatpush1.bf16.msra.mxu0 %v708
    %3597 = vmatprep.subr.bf16.mxu0 %v713
    %3598 = vmatpush1.bf16.msra.mxu0 %v712
    %3599 = vmatprep.subr.bf16.mxu0 %v717
    %3600 = vmatpush1.bf16.msra.mxu0 %v716
    %3601 = vmatprep.subr.bf16.mxu0 %v721
    %3602 = vmatpush1.bf16.msra.mxu0 %v720
    %3603 = vmatprep.subr.bf16.mxu0 0
    %3604 = vmatpush1.bf16.msra.mxu0 0
    %3605 = vmatprep.subr.bf16.mxu0 0
    %3606 = vmatpush1.bf16.msra.mxu0 0
    %3607 = vmatprep.subr.bf16.mxu0 0
    %3608 = vmatpush1.bf16.msra.mxu0 0
    %3609 = vmatprep.subr.bf16.mxu0 0
    %3610 = vmatpush1.bf16.msra.mxu0 0
    %3611 = vmatprep.subr.bf16.mxu0 0
    %3612 = vmatpush1.bf16.msra.mxu0 0
    %3613 = vmatprep.subr.bf16.mxu0 0
    %3614 = vmatpush1.bf16.msra.mxu0 0
    %3615 = vmatprep.subr.bf16.mxu0 0
    %3616 = vmatpush1.bf16.msra.mxu0 0
    %3617 = vmatprep.subr.bf16.mxu0 0
    %3618 = vmatpush1.bf16.msra.mxu0 0
    %3619 = vmatprep.mubr.bf16.mxu0 0
    %3620 = vmatmul.mubr.bf16.gmra.mrb[0].mxu0 %v3475
    %v3621 = vpop.f32.mrb[0].mxu0
    %v3622 = vadd.f32 0.0, %v3621
    %v3623 = vpop.f32.mrb[0].mxu0
    %v3624 = vadd.f32 0.0, %v3623
    %v3625 = vpop.f32.mrb[0].mxu0
    %v3626 = vpop.f32.mrb[0].mxu0
    %3627 = vdwg.mxu0
    %3628 = vmatprep.subr.bf16.mxu0 %v695
    %3629 = vmatpush1.bf16.msra.mxu0 %v694
    %3630 = vmatprep.subr.bf16.mxu0 %v699
    %3631 = vmatpush1.bf16.msra.mxu0 %v698
    %3632 = vmatprep.subr.bf16.mxu0 %v703
    %3633 = vmatpush1.bf16.msra.mxu0 %v702
    %3634 = vmatprep.subr.bf16.mxu0 %v707
    %3635 = vmatpush1.bf16.msra.mxu0 %v706
    %3636 = vmatprep.subr.bf16.mxu0 %v711
    %3637 = vmatpush1.bf16.msra.mxu0 %v710
    %3638 = vmatprep.subr.bf16.mxu0 %v715
    %3639 = vmatpush1.bf16.msra.mxu0 %v714
    %3640 = vmatprep.subr.bf16.mxu0 %v719
    %3641 = vmatpush1.bf16.msra.mxu0 %v718
    %3642 = vmatprep.subr.bf16.mxu0 %v723
    %3643 = vmatpush1.bf16.msra.mxu0 %v722
    %3644 = vmatprep.subr.bf16.mxu0 0
    %3645 = vmatpush1.bf16.msra.mxu0 0
    %3646 = vmatprep.subr.bf16.mxu0 0
    %3647 = vmatpush1.bf16.msra.mxu0 0
    %3648 = vmatprep.subr.bf16.mxu0 0
    %3649 = vmatpush1.bf16.msra.mxu0 0
    %3650 = vmatprep.subr.bf16.mxu0 0
    %3651 = vmatpush1.bf16.msra.mxu0 0
    %3652 = vmatprep.subr.bf16.mxu0 0
    %3653 = vmatpush1.bf16.msra.mxu0 0
    %3654 = vmatprep.subr.bf16.mxu0 0
    %3655 = vmatpush1.bf16.msra.mxu0 0
    %3656 = vmatprep.subr.bf16.mxu0 0
    %3657 = vmatpush1.bf16.msra.mxu0 0
    %3658 = vmatprep.subr.bf16.mxu0 0
    %3659 = vmatpush1.bf16.msra.mxu0 0
    %3660 = vmatprep.mubr.bf16.mxu0 0
    %3661 = vmatmul.mubr.bf16.gmra.mrb[0].mxu0 %v3475
    %v3662 = vpop.f32.mrb[0].mxu0
    %v3663 = vadd.f32 0.0, %v3662
    %v3664 = vpop.f32.mrb[0].mxu0
    %v3665 = vadd.f32 0.0, %v3664
    %v3666 = vpop.f32.mrb[0].mxu0
    %v3667 = vpop.f32.mrb[0].mxu0
    %3668 = vdwg.mxu0
    %v3673 = vrot.slane %v3622, 4
    %v3674 = vrot.slane %v3624, 4
    %v3675 = vrot.slane %v3663, 4
    %v3676 = vrot.slane %v3665, 4
    %v3677 = vrot.slane %v3622, 5
    %v3678 = vrot.slane %v3624, 5
    %v3679 = vrot.slane %v3663, 5
    %v3680 = vrot.slane %v3665, 5
    %v3681 = vrot.slane %v3622, 6
    %v3682 = vrot.slane %v3624, 6
    %v3683 = vrot.slane %v3663, 6
    %v3684 = vrot.slane %v3665, 6
    %v3685 = vrot.slane %v3622, 7
    %v3686 = vrot.slane %v3624, 7
    %v3687 = vrot.slane %v3663, 7
    %v3688 = vrot.slane %v3665, 7
    %v3689 = vrot.slane %v3622, 1
    %v3690 = vrot.slane %v3624, 1
    %v3691 = vrot.slane %v3663, 1
    %v3692 = vrot.slane %v3665, 1
    %v3693 = vrot.slane %v3622, 2
    %v3694 = vrot.slane %v3624, 2
    %v3695 = vrot.slane %v3663, 2
    %v3696 = vrot.slane %v3665, 2
    %v3697 = vrot.slane %v3622, 3
    %v3698 = vrot.slane %v3624, 3
    %v3699 = vrot.slane %v3663, 3
    %v3700 = vrot.slane %v3665, 3
    %v3733 = vadd.f32 %v388, %v3673
    %v3734 = vadd.f32 %v390, %v3674
    %v3735 = vadd.f32 %v461, %v3675
    %v3736 = vadd.f32 %v463, %v3676
    %v3737 = vadd.f32 %v392, %v3677
    %v3738 = vadd.f32 %v394, %v3678
    %v3739 = vadd.f32 %v465, %v3679
    %v3740 = vadd.f32 %v467, %v3680
    %v3741 = vadd.f32 %v398, %v3681
    %v3742 = vadd.f32 %v400, %v3682
    %v3743 = vadd.f32 %v471, %v3683
    %v3744 = vadd.f32 %v473, %v3684
    %v3745 = vadd.f32 %v402, %v3685
    %v3746 = vadd.f32 %v404, %v3686
    %v3747 = vadd.f32 %v475, %v3687
    %v3748 = vadd.f32 %v477, %v3688
    %v3749 = vadd.f32 %v408, %v3622
    %v3750 = vadd.f32 %v410, %v3624
    %v3751 = vadd.f32 %v481, %v3663
    %v3752 = vadd.f32 %v483, %v3665
    %v3753 = vadd.f32 %v412, %v3689
    %v3754 = vadd.f32 %v414, %v3690
    %v3755 = vadd.f32 %v485, %v3691
    %v3756 = vadd.f32 %v487, %v3692
    %v3757 = vadd.f32 %v418, %v3693
    %v3758 = vadd.f32 %v420, %v3694
    %v3759 = vadd.f32 %v491, %v3695
    %v3760 = vadd.f32 %v493, %v3696
    %v3761 = vadd.f32 %v422, %v3697
    %v3762 = vadd.f32 %v424, %v3698
    %v3763 = vadd.f32 %v495, %v3699
    %v3764 = vadd.f32 %v497, %v3700
    %v3765 = vxor.u32 %v3733, 2147483648
    %v3766 = vxor.u32 %v3737, 2147483648
    %v3767 = vxor.u32 %v3741, 2147483648
    %v3768 = vxor.u32 %v3745, 2147483648
    %v3769 = vxor.u32 %v3749, 2147483648
    %v3770 = vxor.u32 %v3753, 2147483648
    %v3771 = vxor.u32 %v3757, 2147483648
    %v3772 = vxor.u32 %v3761, 2147483648
    %v3773 = vmul.f32 %v3765, 1.442695
    %v3774 = vpow.pop %v3773
    %v3775 = vmul.f32 %v3766, 1.442695
    %v3776 = vpow.pop %v3775
    %v3777 = vmul.f32 %v3767, 1.442695
    %v3778 = vpow.pop %v3777
    %v3779 = vmul.f32 %v3768, 1.442695
    %v3780 = vpow.pop %v3779
    %v3781 = vmul.f32 %v3769, 1.442695
    %v3782 = vpow.pop %v3781
    %v3783 = vmul.f32 %v3770, 1.442695
    %v3784 = vpow.pop %v3783
    %v3785 = vmul.f32 %v3771, 1.442695
    %v3786 = vpow.pop %v3785
    %v3787 = vmul.f32 %v3772, 1.442695
    %v3788 = vpow.pop %v3787
    %v3789 = vadd.f32 %v3774, 1.0
    %v3790 = vadd.f32 %v3776, 1.0
    %v3791 = vadd.f32 %v3778, 1.0
    %v3792 = vadd.f32 %v3780, 1.0
    %v3793 = vadd.f32 %v3782, 1.0
    %v3794 = vadd.f32 %v3784, 1.0
    %v3795 = vadd.f32 %v3786, 1.0
    %v3796 = vadd.f32 %v3788, 1.0
    %v3797 = vrcp.pop %v3789
    %v3798 = vmul.f32 1.0, %v3797
    %v3799 = vrcp.pop %v3790
    %v3800 = vmul.f32 1.0, %v3799
    %v3801 = vrcp.pop %v3791
    %v3802 = vmul.f32 1.0, %v3801
    %v3803 = vrcp.pop %v3792
    %v3804 = vmul.f32 1.0, %v3803
    %v3805 = vrcp.pop %v3793
    %v3806 = vmul.f32 1.0, %v3805
    %v3807 = vrcp.pop %v3794
    %v3808 = vmul.f32 1.0, %v3807
    %v3809 = vrcp.pop %v3795
    %v3810 = vmul.f32 1.0, %v3809
    %v3811 = vrcp.pop %v3796
    %v3812 = vmul.f32 1.0, %v3811
    %v3813 = vxor.u32 %v3734, 2147483648
    %v3814 = vxor.u32 %v3738, 2147483648
    %v3815 = vxor.u32 %v3742, 2147483648
    %v3816 = vxor.u32 %v3746, 2147483648
    %v3817 = vxor.u32 %v3750, 2147483648
    %v3818 = vxor.u32 %v3754, 2147483648
    %v3819 = vxor.u32 %v3758, 2147483648
    %v3820 = vxor.u32 %v3762, 2147483648
    %v3821 = vmul.f32 %v3813, 1.442695
    %v3822 = vpow.pop %v3821
    %v3823 = vmul.f32 %v3814, 1.442695
    %v3824 = vpow.pop %v3823
    %v3825 = vmul.f32 %v3815, 1.442695
    %v3826 = vpow.pop %v3825
    %v3827 = vmul.f32 %v3816, 1.442695
    %v3828 = vpow.pop %v3827
    %v3829 = vmul.f32 %v3817, 1.442695
    %v3830 = vpow.pop %v3829
    %v3831 = vmul.f32 %v3818, 1.442695
    %v3832 = vpow.pop %v3831
    %v3833 = vmul.f32 %v3819, 1.442695
    %v3834 = vpow.pop %v3833
    %v3835 = vmul.f32 %v3820, 1.442695
    %v3836 = vpow.pop %v3835
    %v3837 = vadd.f32 %v3822, 1.0
    %v3838 = vadd.f32 %v3824, 1.0
    %v3839 = vadd.f32 %v3826, 1.0
    %v3840 = vadd.f32 %v3828, 1.0
    %v3841 = vadd.f32 %v3830, 1.0
    %v3842 = vadd.f32 %v3832, 1.0
    %v3843 = vadd.f32 %v3834, 1.0
    %v3844 = vadd.f32 %v3836, 1.0
    %v3845 = vrcp.pop %v3837
    %v3846 = vmul.f32 1.0, %v3845
    %v3847 = vrcp.pop %v3838
    %v3848 = vmul.f32 1.0, %v3847
    %v3849 = vrcp.pop %v3839
    %v3850 = vmul.f32 1.0, %v3849
    %v3851 = vrcp.pop %v3840
    %v3852 = vmul.f32 1.0, %v3851
    %v3853 = vrcp.pop %v3841
    %v3854 = vmul.f32 1.0, %v3853
    %v3855 = vrcp.pop %v3842
    %v3856 = vmul.f32 1.0, %v3855
    %v3857 = vrcp.pop %v3843
    %v3858 = vmul.f32 1.0, %v3857
    %v3859 = vrcp.pop %v3844
    %v3860 = vmul.f32 1.0, %v3859
    %v3861 = vtanh.pop %v3735
    %v3862 = vtanh.pop %v3739
    %v3863 = vtanh.pop %v3743
    %v3864 = vtanh.pop %v3747
    %v3865 = vtanh.pop %v3751
    %v3866 = vtanh.pop %v3755
    %v3867 = vtanh.pop %v3759
    %v3868 = vtanh.pop %v3763
    %v3869 = vxor.u32 %v3736, 2147483648
    %v3870 = vxor.u32 %v3740, 2147483648
    %v3871 = vxor.u32 %v3744, 2147483648
    %v3872 = vxor.u32 %v3748, 2147483648
    %v3873 = vxor.u32 %v3752, 2147483648
    %v3874 = vxor.u32 %v3756, 2147483648
    %v3875 = vxor.u32 %v3760, 2147483648
    %v3876 = vxor.u32 %v3764, 2147483648
    %v3877 = vmul.f32 %v3869, 1.442695
    %v3878 = vpow.pop %v3877
    %v3879 = vmul.f32 %v3870, 1.442695
    %v3880 = vpow.pop %v3879
    %v3881 = vmul.f32 %v3871, 1.442695
    %v3882 = vpow.pop %v3881
    %v3883 = vmul.f32 %v3872, 1.442695
    %v3884 = vpow.pop %v3883
    %v3885 = vmul.f32 %v3873, 1.442695
    %v3886 = vpow.pop %v3885
    %v3887 = vmul.f32 %v3874, 1.442695
    %v3888 = vpow.pop %v3887
    %v3889 = vmul.f32 %v3875, 1.442695
    %v3890 = vpow.pop %v3889
    %v3891 = vmul.f32 %v3876, 1.442695
    %v3892 = vpow.pop %v3891
    %v3893 = vadd.f32 %v3878, 1.0
    %v3894 = vadd.f32 %v3880, 1.0
    %v3895 = vadd.f32 %v3882, 1.0
    %v3896 = vadd.f32 %v3884, 1.0
    %v3897 = vadd.f32 %v3886, 1.0
    %v3898 = vadd.f32 %v3888, 1.0
    %v3899 = vadd.f32 %v3890, 1.0
    %v3900 = vadd.f32 %v3892, 1.0
    %v3901 = vrcp.pop %v3893
    %v3902 = vmul.f32 1.0, %v3901
    %v3903 = vrcp.pop %v3894
    %v3904 = vmul.f32 1.0, %v3903
    %v3905 = vrcp.pop %v3895
    %v3906 = vmul.f32 1.0, %v3905
    %v3907 = vrcp.pop %v3896
    %v3908 = vmul.f32 1.0, %v3907
    %v3909 = vrcp.pop %v3897
    %v3910 = vmul.f32 1.0, %v3909
    %v3911 = vrcp.pop %v3898
    %v3912 = vmul.f32 1.0, %v3911
    %v3913 = vrcp.pop %v3899
    %v3914 = vmul.f32 1.0, %v3913
    %v3915 = vrcp.pop %v3900
    %v3916 = vmul.f32 1.0, %v3915
    %v3925 = vrot.slane %v3330, 7
    %v3926 = vrot.slane %v3331, 7
    %v3927 = vrot.slane %v3332, 7
    %v3928 = vrot.slane %v3333, 7
    %v3929 = vrot.slane %v3334, 7
    %v3930 = vrot.slane %v3335, 7
    %v3931 = vrot.slane %v3336, 7
    %v3932 = vrot.slane %v3337, 7
    %v3941 = vmul.f32 %v3846, %v3925
    %v3942 = vmul.f32 %v3848, %v3926
    %v3943 = vmul.f32 %v3850, %v3927
    %v3944 = vmul.f32 %v3852, %v3928
    %v3945 = vmul.f32 %v3854, %v3929
    %v3946 = vmul.f32 %v3856, %v3930
    %v3947 = vmul.f32 %v3858, %v3931
    %v3948 = vmul.f32 %v3860, %v3932
    %v3949 = vmul.f32 %v3798, %v3861
    %v3950 = vmul.f32 %v3800, %v3862
    %v3951 = vmul.f32 %v3802, %v3863
    %v3952 = vmul.f32 %v3804, %v3864
    %v3953 = vmul.f32 %v3806, %v3865
    %v3954 = vmul.f32 %v3808, %v3866
    %v3955 = vmul.f32 %v3810, %v3867
    %v3956 = vmul.f32 %v3812, %v3868
    %v3957 = vadd.f32 %v3941, %v3949
    %v3958 = vadd.f32 %v3942, %v3950
    %v3959 = vadd.f32 %v3943, %v3951
    %v3960 = vadd.f32 %v3944, %v3952
    %v3961 = vadd.f32 %v3945, %v3953
    %v3962 = vadd.f32 %v3946, %v3954
    %v3963 = vadd.f32 %v3947, %v3955
    %v3964 = vadd.f32 %v3948, %v3956
    %v3965 = vtanh.pop %v3957
    %v3966 = vtanh.pop %v3958
    %v3967 = vtanh.pop %v3959
    %v3968 = vtanh.pop %v3960
    %v3969 = vtanh.pop %v3961
    %v3970 = vtanh.pop %v3962
    %v3971 = vtanh.pop %v3963
    %v3972 = vtanh.pop %v3964
    %v3973 = vmul.f32 %v3902, %v3965
    %v3974 = vmul.f32 %v3904, %v3966
    %v3975 = vmul.f32 %v3906, %v3967
    %v3976 = vmul.f32 %v3908, %v3968
    %v3977 = vmul.f32 %v3910, %v3969
    %v3978 = vmul.f32 %v3912, %v3970
    %v3979 = vmul.f32 %v3914, %v3971
    %v3980 = vmul.f32 %v3916, %v3972
    %v3981 = vpack.c.bf16 %v3973, %v3973
    %v3982 = vpack.c.bf16 %v3974, %v3974
    %v3983 = vpack.c.bf16 %v3975, %v3975
    %v3984 = vpack.c.bf16 %v3976, %v3976
    %v3985 = vpack.c.bf16 %v3977, %v3977
    %v3986 = vpack.c.bf16 %v3978, %v3978
    %v3987 = vpack.c.bf16 %v3979, %v3979
    %v3988 = vpack.c.bf16 %v3980, %v3980
    %v3989 = vpack.c.bf16 %v3586, %v3586
    %3990 = vmatprep.subr.bf16.mxu0 %v1231
    %3991 = vmatpush1.bf16.msra.mxu0 %v1230
    %3992 = vmatprep.subr.bf16.mxu0 %v1235
    %3993 = vmatpush1.bf16.msra.mxu0 %v1234
    %3994 = vmatprep.subr.bf16.mxu0 %v1239
    %3995 = vmatpush1.bf16.msra.mxu0 %v1238
    %3996 = vmatprep.subr.bf16.mxu0 %v1243
    %3997 = vmatpush1.bf16.msra.mxu0 %v1242
    %3998 = vmatprep.subr.bf16.mxu0 %v1247
    %3999 = vmatpush1.bf16.msra.mxu0 %v1246
    %4000 = vmatprep.subr.bf16.mxu0 %v1251
    %4001 = vmatpush1.bf16.msra.mxu0 %v1250
    %4002 = vmatprep.subr.bf16.mxu0 %v1255
    %4003 = vmatpush1.bf16.msra.mxu0 %v1254
    %4004 = vmatprep.subr.bf16.mxu0 %v1259
    %4005 = vmatpush1.bf16.msra.mxu0 %v1258
    %4006 = vmatprep.subr.bf16.mxu0 0
    %4007 = vmatpush1.bf16.msra.mxu0 0
    %4008 = vmatprep.subr.bf16.mxu0 0
    %4009 = vmatpush1.bf16.msra.mxu0 0
    %4010 = vmatprep.subr.bf16.mxu0 0
    %4011 = vmatpush1.bf16.msra.mxu0 0
    %4012 = vmatprep.subr.bf16.mxu0 0
    %4013 = vmatpush1.bf16.msra.mxu0 0
    %4014 = vmatprep.subr.bf16.mxu0 0
    %4015 = vmatpush1.bf16.msra.mxu0 0
    %4016 = vmatprep.subr.bf16.mxu0 0
    %4017 = vmatpush1.bf16.msra.mxu0 0
    %4018 = vmatprep.subr.bf16.mxu0 0
    %4019 = vmatpush1.bf16.msra.mxu0 0
    %4020 = vmatprep.subr.bf16.mxu0 0
    %4021 = vmatpush1.bf16.msra.mxu0 0
    %4022 = vmatprep.mubr.bf16.mxu0 0
    %4023 = vmatmul.mubr.bf16.gmra.mrb[0].mxu0 %v3989
    %v4024 = vpop.f32.mrb[0].mxu0
    %v4025 = vadd.f32 0.0, %v4024
    %v4026 = vpop.f32.mrb[0].mxu0
    %v4027 = vadd.f32 0.0, %v4026
    %v4028 = vpop.f32.mrb[0].mxu0
    %v4029 = vpop.f32.mrb[0].mxu0
    %4030 = vdwg.mxu0
    %4031 = vmatprep.subr.bf16.mxu0 %v1233
    %4032 = vmatpush1.bf16.msra.mxu0 %v1232
    %4033 = vmatprep.subr.bf16.mxu0 %v1237
    %4034 = vmatpush1.bf16.msra.mxu0 %v1236
    %4035 = vmatprep.subr.bf16.mxu0 %v1241
    %4036 = vmatpush1.bf16.msra.mxu0 %v1240
    %4037 = vmatprep.subr.bf16.mxu0 %v1245
    %4038 = vmatpush1.bf16.msra.mxu0 %v1244
    %4039 = vmatprep.subr.bf16.mxu0 %v1249
    %4040 = vmatpush1.bf16.msra.mxu0 %v1248
    %4041 = vmatprep.subr.bf16.mxu0 %v1253
    %4042 = vmatpush1.bf16.msra.mxu0 %v1252
    %4043 = vmatprep.subr.bf16.mxu0 %v1257
    %4044 = vmatpush1.bf16.msra.mxu0 %v1256
    %4045 = vmatprep.subr.bf16.mxu0 %v1261
    %4046 = vmatpush1.bf16.msra.mxu0 %v1260
    %4047 = vmatprep.subr.bf16.mxu0 0
    %4048 = vmatpush1.bf16.msra.mxu0 0
    %4049 = vmatprep.subr.bf16.mxu0 0
    %4050 = vmatpush1.bf16.msra.mxu0 0
    %4051 = vmatprep.subr.bf16.mxu0 0
    %4052 = vmatpush1.bf16.msra.mxu0 0
    %4053 = vmatprep.subr.bf16.mxu0 0
    %4054 = vmatpush1.bf16.msra.mxu0 0
    %4055 = vmatprep.subr.bf16.mxu0 0
    %4056 = vmatpush1.bf16.msra.mxu0 0
    %4057 = vmatprep.subr.bf16.mxu0 0
    %4058 = vmatpush1.bf16.msra.mxu0 0
    %4059 = vmatprep.subr.bf16.mxu0 0
    %4060 = vmatpush1.bf16.msra.mxu0 0
    %4061 = vmatprep.subr.bf16.mxu0 0
    %4062 = vmatpush1.bf16.msra.mxu0 0
    %4063 = vmatprep.mubr.bf16.mxu0 0
    %4064 = vmatmul.mubr.bf16.gmra.mrb[0].mxu0 %v3989
    %v4065 = vpop.f32.mrb[0].mxu0
    %v4066 = vadd.f32 0.0, %v4065
    %v4067 = vpop.f32.mrb[0].mxu0
    %v4068 = vadd.f32 0.0, %v4067
    %v4069 = vpop.f32.mrb[0].mxu0
    %v4070 = vpop.f32.mrb[0].mxu0
    %4071 = vdwg.mxu0
    %v4080 = vunpack.c.l.b16 %v3981
    %v4081 = vunpack.c.l.b16 %v3982
    %v4082 = vunpack.c.l.b16 %v3983
    %v4083 = vunpack.c.l.b16 %v3984
    %v4084 = vunpack.c.l.b16 %v3985
    %v4085 = vunpack.c.l.b16 %v3986
    %v4086 = vunpack.c.l.b16 %v3987
    %v4087 = vunpack.c.l.b16 %v3988
    %v4088 = vrot.slane %v4080, 4
    %v4089 = vrot.slane %v4081, 3
    %v4090 = vsel %vm1393, %v4089, %v4088
    %v4091 = vrot.slane %v4082, 2
    %v4092 = vsel %vm1396, %v4091, %v4090
    %v4093 = vrot.slane %v4083, 1
    %v4094 = vsel %vm1399, %v4093, %v4092
    %v4095 = vsel %vm1402, %v4084, %v4094
    %v4096 = vrot.slane %v4085, 7
    %v4097 = vsel %vm1405, %v4096, %v4095
    %v4098 = vrot.slane %v4086, 6
    %v4099 = vsel %vm1408, %v4098, %v4097
    %v4100 = vrot.slane %v4087, 5
    %v4101 = vsel %vm1411, %v4100, %v4099
    %v4102 = vpack.c.b16 %v4101, %v4101
    %4104 = vmatprep.subr.bf16.mxu0 %v1512
    %4105 = vmatpush1.bf16.msra.mxu0 %v1511
    %4106 = vmatprep.subr.bf16.mxu0 %v1516
    %4107 = vmatpush1.bf16.msra.mxu0 %v1515
    %4108 = vmatprep.subr.bf16.mxu0 %v1520
    %4109 = vmatpush1.bf16.msra.mxu0 %v1519
    %4110 = vmatprep.subr.bf16.mxu0 %v1524
    %4111 = vmatpush1.bf16.msra.mxu0 %v1523
    %4112 = vmatprep.subr.bf16.mxu0 %v1528
    %4113 = vmatpush1.bf16.msra.mxu0 %v1527
    %4114 = vmatprep.subr.bf16.mxu0 %v1532
    %4115 = vmatpush1.bf16.msra.mxu0 %v1531
    %4116 = vmatprep.subr.bf16.mxu0 %v1536
    %4117 = vmatpush1.bf16.msra.mxu0 %v1535
    %4118 = vmatprep.subr.bf16.mxu0 %v1540
    %4119 = vmatpush1.bf16.msra.mxu0 %v1539
    %4120 = vmatprep.subr.bf16.mxu0 0
    %4121 = vmatpush1.bf16.msra.mxu0 0
    %4122 = vmatprep.subr.bf16.mxu0 0
    %4123 = vmatpush1.bf16.msra.mxu0 0
    %4124 = vmatprep.subr.bf16.mxu0 0
    %4125 = vmatpush1.bf16.msra.mxu0 0
    %4126 = vmatprep.subr.bf16.mxu0 0
    %4127 = vmatpush1.bf16.msra.mxu0 0
    %4128 = vmatprep.subr.bf16.mxu0 0
    %4129 = vmatpush1.bf16.msra.mxu0 0
    %4130 = vmatprep.subr.bf16.mxu0 0
    %4131 = vmatpush1.bf16.msra.mxu0 0
    %4132 = vmatprep.subr.bf16.mxu0 0
    %4133 = vmatpush1.bf16.msra.mxu0 0
    %4134 = vmatprep.subr.bf16.mxu0 0
    %4135 = vmatpush1.bf16.msra.mxu0 0
    %4136 = vmatprep.mubr.bf16.mxu0 0
    %4137 = vmatmul.mubr.bf16.gmra.mrb[0].mxu0 %v4102
    %v4138 = vpop.f32.mrb[0].mxu0
    %v4139 = vadd.f32 %v4025, %v4138
    %v4140 = vpop.f32.mrb[0].mxu0
    %v4141 = vadd.f32 %v4027, %v4140
    %v4142 = vpop.f32.mrb[0].mxu0
    %v4143 = vpop.f32.mrb[0].mxu0
    %4144 = vdwg.mxu0
    %4145 = vmatprep.subr.bf16.mxu0 %v1514
    %4146 = vmatpush1.bf16.msra.mxu0 %v1513
    %4147 = vmatprep.subr.bf16.mxu0 %v1518
    %4148 = vmatpush1.bf16.msra.mxu0 %v1517
    %4149 = vmatprep.subr.bf16.mxu0 %v1522
    %4150 = vmatpush1.bf16.msra.mxu0 %v1521
    %4151 = vmatprep.subr.bf16.mxu0 %v1526
    %4152 = vmatpush1.bf16.msra.mxu0 %v1525
    %4153 = vmatprep.subr.bf16.mxu0 %v1530
    %4154 = vmatpush1.bf16.msra.mxu0 %v1529
    %4155 = vmatprep.subr.bf16.mxu0 %v1534
    %4156 = vmatpush1.bf16.msra.mxu0 %v1533
    %4157 = vmatprep.subr.bf16.mxu0 %v1538
    %4158 = vmatpush1.bf16.msra.mxu0 %v1537
    %4159 = vmatprep.subr.bf16.mxu0 %v1542
    %4160 = vmatpush1.bf16.msra.mxu0 %v1541
    %4161 = vmatprep.subr.bf16.mxu0 0
    %4162 = vmatpush1.bf16.msra.mxu0 0
    %4163 = vmatprep.subr.bf16.mxu0 0
    %4164 = vmatpush1.bf16.msra.mxu0 0
    %4165 = vmatprep.subr.bf16.mxu0 0
    %4166 = vmatpush1.bf16.msra.mxu0 0
    %4167 = vmatprep.subr.bf16.mxu0 0
    %4168 = vmatpush1.bf16.msra.mxu0 0
    %4169 = vmatprep.subr.bf16.mxu0 0
    %4170 = vmatpush1.bf16.msra.mxu0 0
    %4171 = vmatprep.subr.bf16.mxu0 0
    %4172 = vmatpush1.bf16.msra.mxu0 0
    %4173 = vmatprep.subr.bf16.mxu0 0
    %4174 = vmatpush1.bf16.msra.mxu0 0
    %4175 = vmatprep.subr.bf16.mxu0 0
    %4176 = vmatpush1.bf16.msra.mxu0 0
    %4177 = vmatprep.mubr.bf16.mxu0 0
    %4178 = vmatmul.mubr.bf16.gmra.mrb[0].mxu0 %v4102
    %v4179 = vpop.f32.mrb[0].mxu0
    %v4180 = vadd.f32 %v4066, %v4179
    %v4181 = vpop.f32.mrb[0].mxu0
    %v4182 = vadd.f32 %v4068, %v4181
    %v4183 = vpop.f32.mrb[0].mxu0
    %v4184 = vpop.f32.mrb[0].mxu0
    %4185 = vdwg.mxu0
    %v4186 = vadd.f32 %v4139, %v1661
    %v4187 = vadd.f32 %v4141, %v1665
    %v4188 = vadd.f32 %v4180, %v1669
    %v4189 = vadd.f32 %v4182, %v1673
    %v4190 = vxor.u32 %v4186, 2147483648
    %v4191 = vmul.f32 %v4190, 1.442695
    %v4192 = vpow.pop %v4191
    %v4193 = vadd.f32 %v4192, 1.0
    %v4194 = vrcp.pop %v4193
    %v4195 = vmul.f32 1.0, %v4194
    %v4196 = vxor.u32 %v4187, 2147483648
    %v4197 = vmul.f32 %v4196, 1.442695
    %v4198 = vpow.pop %v4197
    %v4199 = vadd.f32 %v4198, 1.0
    %v4200 = vrcp.pop %v4199
    %v4201 = vmul.f32 1.0, %v4200
    %v4202 = vtanh.pop %v4188
    %v4203 = vxor.u32 %v4189, 2147483648
    %v4204 = vmul.f32 %v4203, 1.442695
    %v4205 = vpow.pop %v4204
    %v4206 = vadd.f32 %v4205, 1.0
    %v4207 = vrcp.pop %v4206
    %v4208 = vmul.f32 1.0, %v4207
    %v4209 = vmul.f32 %v4201, %v3584
    %v4210 = vmul.f32 %v4195, %v4202
    %v4211 = vadd.f32 %v4209, %v4210
    %v4212 = vtanh.pop %v4211
    %v4213 = vmul.f32 %v4208, %v4212
    %4214 = vmatprep.subr.bf16.mxu0 %v693
    %4215 = vmatpush1.bf16.msra.mxu0 %v692
    %4216 = vmatprep.subr.bf16.mxu0 %v697
    %4217 = vmatpush1.bf16.msra.mxu0 %v696
    %4218 = vmatprep.subr.bf16.mxu0 %v701
    %4219 = vmatpush1.bf16.msra.mxu0 %v700
    %4220 = vmatprep.subr.bf16.mxu0 %v705
    %4221 = vmatpush1.bf16.msra.mxu0 %v704
    %4222 = vmatprep.subr.bf16.mxu0 %v709
    %4223 = vmatpush1.bf16.msra.mxu0 %v708
    %4224 = vmatprep.subr.bf16.mxu0 %v713
    %4225 = vmatpush1.bf16.msra.mxu0 %v712
    %4226 = vmatprep.subr.bf16.mxu0 %v717
    %4227 = vmatpush1.bf16.msra.mxu0 %v716
    %4228 = vmatprep.subr.bf16.mxu0 %v721
    %4229 = vmatpush1.bf16.msra.mxu0 %v720
    %4230 = vmatprep.subr.bf16.mxu0 0
    %4231 = vmatpush1.bf16.msra.mxu0 0
    %4232 = vmatprep.subr.bf16.mxu0 0
    %4233 = vmatpush1.bf16.msra.mxu0 0
    %4234 = vmatprep.subr.bf16.mxu0 0
    %4235 = vmatpush1.bf16.msra.mxu0 0
    %4236 = vmatprep.subr.bf16.mxu0 0
    %4237 = vmatpush1.bf16.msra.mxu0 0
    %4238 = vmatprep.subr.bf16.mxu0 0
    %4239 = vmatpush1.bf16.msra.mxu0 0
    %4240 = vmatprep.subr.bf16.mxu0 0
    %4241 = vmatpush1.bf16.msra.mxu0 0
    %4242 = vmatprep.subr.bf16.mxu0 0
    %4243 = vmatpush1.bf16.msra.mxu0 0
    %4244 = vmatprep.subr.bf16.mxu0 0
    %4245 = vmatpush1.bf16.msra.mxu0 0
    %4246 = vmatprep.mubr.bf16.mxu0 0
    %4247 = vmatmul.mubr.bf16.gmra.mrb[0].mxu0 %v4102
    %v4248 = vpop.f32.mrb[0].mxu0
    %v4249 = vadd.f32 0.0, %v4248
    %v4250 = vpop.f32.mrb[0].mxu0
    %v4251 = vadd.f32 0.0, %v4250
    %v4252 = vpop.f32.mrb[0].mxu0
    %v4253 = vpop.f32.mrb[0].mxu0
    %4254 = vdwg.mxu0
    %4255 = vmatprep.subr.bf16.mxu0 %v695
    %4256 = vmatpush1.bf16.msra.mxu0 %v694
    %4257 = vmatprep.subr.bf16.mxu0 %v699
    %4258 = vmatpush1.bf16.msra.mxu0 %v698
    %4259 = vmatprep.subr.bf16.mxu0 %v703
    %4260 = vmatpush1.bf16.msra.mxu0 %v702
    %4261 = vmatprep.subr.bf16.mxu0 %v707
    %4262 = vmatpush1.bf16.msra.mxu0 %v706
    %4263 = vmatprep.subr.bf16.mxu0 %v711
    %4264 = vmatpush1.bf16.msra.mxu0 %v710
    %4265 = vmatprep.subr.bf16.mxu0 %v715
    %4266 = vmatpush1.bf16.msra.mxu0 %v714
    %4267 = vmatprep.subr.bf16.mxu0 %v719
    %4268 = vmatpush1.bf16.msra.mxu0 %v718
    %4269 = vmatprep.subr.bf16.mxu0 %v723
    %4270 = vmatpush1.bf16.msra.mxu0 %v722
    %4271 = vmatprep.subr.bf16.mxu0 0
    %4272 = vmatpush1.bf16.msra.mxu0 0
    %4273 = vmatprep.subr.bf16.mxu0 0
    %4274 = vmatpush1.bf16.msra.mxu0 0
    %4275 = vmatprep.subr.bf16.mxu0 0
    %4276 = vmatpush1.bf16.msra.mxu0 0
    %4277 = vmatprep.subr.bf16.mxu0 0
    %4278 = vmatpush1.bf16.msra.mxu0 0
    %4279 = vmatprep.subr.bf16.mxu0 0
    %4280 = vmatpush1.bf16.msra.mxu0 0
    %4281 = vmatprep.subr.bf16.mxu0 0
    %4282 = vmatpush1.bf16.msra.mxu0 0
    %4283 = vmatprep.subr.bf16.mxu0 0
    %4284 = vmatpush1.bf16.msra.mxu0 0
    %4285 = vmatprep.subr.bf16.mxu0 0
    %4286 = vmatpush1.bf16.msra.mxu0 0
    %4287 = vmatprep.mubr.bf16.mxu0 0
    %4288 = vmatmul.mubr.bf16.gmra.mrb[0].mxu0 %v4102
    %v4289 = vpop.f32.mrb[0].mxu0
    %v4290 = vadd.f32 0.0, %v4289
    %v4291 = vpop.f32.mrb[0].mxu0
    %v4292 = vadd.f32 0.0, %v4291
    %v4293 = vpop.f32.mrb[0].mxu0
    %v4294 = vpop.f32.mrb[0].mxu0
    %4295 = vdwg.mxu0
    %v4300 = vrot.slane %v4249, 3
    %v4301 = vrot.slane %v4251, 3
    %v4302 = vrot.slane %v4290, 3
    %v4303 = vrot.slane %v4292, 3
    %v4304 = vrot.slane %v4249, 4
    %v4305 = vrot.slane %v4251, 4
    %v4306 = vrot.slane %v4290, 4
    %v4307 = vrot.slane %v4292, 4
    %v4308 = vrot.slane %v4249, 5
    %v4309 = vrot.slane %v4251, 5
    %v4310 = vrot.slane %v4290, 5
    %v4311 = vrot.slane %v4292, 5
    %v4312 = vrot.slane %v4249, 6
    %v4313 = vrot.slane %v4251, 6
    %v4314 = vrot.slane %v4290, 6
    %v4315 = vrot.slane %v4292, 6
    %v4316 = vrot.slane %v4249, 7
    %v4317 = vrot.slane %v4251, 7
    %v4318 = vrot.slane %v4290, 7
    %v4319 = vrot.slane %v4292, 7
    %v4320 = vrot.slane %v4249, 1
    %v4321 = vrot.slane %v4251, 1
    %v4322 = vrot.slane %v4290, 1
    %v4323 = vrot.slane %v4292, 1
    %v4324 = vrot.slane %v4249, 2
    %v4325 = vrot.slane %v4251, 2
    %v4326 = vrot.slane %v4290, 2
    %v4327 = vrot.slane %v4292, 2
    %v4360 = vadd.f32 %v388, %v4300
    %v4361 = vadd.f32 %v390, %v4301
    %v4362 = vadd.f32 %v461, %v4302
    %v4363 = vadd.f32 %v463, %v4303
    %v4364 = vadd.f32 %v392, %v4304
    %v4365 = vadd.f32 %v394, %v4305
    %v4366 = vadd.f32 %v465, %v4306
    %v4367 = vadd.f32 %v467, %v4307
    %v4368 = vadd.f32 %v398, %v4308
    %v4369 = vadd.f32 %v400, %v4309
    %v4370 = vadd.f32 %v471, %v4310
    %v4371 = vadd.f32 %v473, %v4311
    %v4372 = vadd.f32 %v402, %v4312
    %v4373 = vadd.f32 %v404, %v4313
    %v4374 = vadd.f32 %v475, %v4314
    %v4375 = vadd.f32 %v477, %v4315
    %v4376 = vadd.f32 %v408, %v4316
    %v4377 = vadd.f32 %v410, %v4317
    %v4378 = vadd.f32 %v481, %v4318
    %v4379 = vadd.f32 %v483, %v4319
    %v4380 = vadd.f32 %v412, %v4249
    %v4381 = vadd.f32 %v414, %v4251
    %v4382 = vadd.f32 %v485, %v4290
    %v4383 = vadd.f32 %v487, %v4292
    %v4384 = vadd.f32 %v418, %v4320
    %v4385 = vadd.f32 %v420, %v4321
    %v4386 = vadd.f32 %v491, %v4322
    %v4387 = vadd.f32 %v493, %v4323
    %v4388 = vadd.f32 %v422, %v4324
    %v4389 = vadd.f32 %v424, %v4325
    %v4390 = vadd.f32 %v495, %v4326
    %v4391 = vadd.f32 %v497, %v4327
    %v4392 = vxor.u32 %v4360, 2147483648
    %v4393 = vxor.u32 %v4364, 2147483648
    %v4394 = vxor.u32 %v4368, 2147483648
    %v4395 = vxor.u32 %v4372, 2147483648
    %v4396 = vxor.u32 %v4376, 2147483648
    %v4397 = vxor.u32 %v4380, 2147483648
    %v4398 = vxor.u32 %v4384, 2147483648
    %v4399 = vxor.u32 %v4388, 2147483648
    %v4400 = vmul.f32 %v4392, 1.442695
    %v4401 = vpow.pop %v4400
    %v4402 = vmul.f32 %v4393, 1.442695
    %v4403 = vpow.pop %v4402
    %v4404 = vmul.f32 %v4394, 1.442695
    %v4405 = vpow.pop %v4404
    %v4406 = vmul.f32 %v4395, 1.442695
    %v4407 = vpow.pop %v4406
    %v4408 = vmul.f32 %v4396, 1.442695
    %v4409 = vpow.pop %v4408
    %v4410 = vmul.f32 %v4397, 1.442695
    %v4411 = vpow.pop %v4410
    %v4412 = vmul.f32 %v4398, 1.442695
    %v4413 = vpow.pop %v4412
    %v4414 = vmul.f32 %v4399, 1.442695
    %v4415 = vpow.pop %v4414
    %v4416 = vadd.f32 %v4401, 1.0
    %v4417 = vadd.f32 %v4403, 1.0
    %v4418 = vadd.f32 %v4405, 1.0
    %v4419 = vadd.f32 %v4407, 1.0
    %v4420 = vadd.f32 %v4409, 1.0
    %v4421 = vadd.f32 %v4411, 1.0
    %v4422 = vadd.f32 %v4413, 1.0
    %v4423 = vadd.f32 %v4415, 1.0
    %v4424 = vrcp.pop %v4416
    %v4425 = vmul.f32 1.0, %v4424
    %v4426 = vrcp.pop %v4417
    %v4427 = vmul.f32 1.0, %v4426
    %v4428 = vrcp.pop %v4418
    %v4429 = vmul.f32 1.0, %v4428
    %v4430 = vrcp.pop %v4419
    %v4431 = vmul.f32 1.0, %v4430
    %v4432 = vrcp.pop %v4420
    %v4433 = vmul.f32 1.0, %v4432
    %v4434 = vrcp.pop %v4421
    %v4435 = vmul.f32 1.0, %v4434
    %v4436 = vrcp.pop %v4422
    %v4437 = vmul.f32 1.0, %v4436
    %v4438 = vrcp.pop %v4423
    %v4439 = vmul.f32 1.0, %v4438
    %v4440 = vxor.u32 %v4361, 2147483648
    %v4441 = vxor.u32 %v4365, 2147483648
    %v4442 = vxor.u32 %v4369, 2147483648
    %v4443 = vxor.u32 %v4373, 2147483648
    %v4444 = vxor.u32 %v4377, 2147483648
    %v4445 = vxor.u32 %v4381, 2147483648
    %v4446 = vxor.u32 %v4385, 2147483648
    %v4447 = vxor.u32 %v4389, 2147483648
    %v4448 = vmul.f32 %v4440, 1.442695
    %v4449 = vpow.pop %v4448
    %v4450 = vmul.f32 %v4441, 1.442695
    %v4451 = vpow.pop %v4450
    %v4452 = vmul.f32 %v4442, 1.442695
    %v4453 = vpow.pop %v4452
    %v4454 = vmul.f32 %v4443, 1.442695
    %v4455 = vpow.pop %v4454
    %v4456 = vmul.f32 %v4444, 1.442695
    %v4457 = vpow.pop %v4456
    %v4458 = vmul.f32 %v4445, 1.442695
    %v4459 = vpow.pop %v4458
    %v4460 = vmul.f32 %v4446, 1.442695
    %v4461 = vpow.pop %v4460
    %v4462 = vmul.f32 %v4447, 1.442695
    %v4463 = vpow.pop %v4462
    %v4464 = vadd.f32 %v4449, 1.0
    %v4465 = vadd.f32 %v4451, 1.0
    %v4466 = vadd.f32 %v4453, 1.0
    %v4467 = vadd.f32 %v4455, 1.0
    %v4468 = vadd.f32 %v4457, 1.0
    %v4469 = vadd.f32 %v4459, 1.0
    %v4470 = vadd.f32 %v4461, 1.0
    %v4471 = vadd.f32 %v4463, 1.0
    %v4472 = vrcp.pop %v4464
    %v4473 = vmul.f32 1.0, %v4472
    %v4474 = vrcp.pop %v4465
    %v4475 = vmul.f32 1.0, %v4474
    %v4476 = vrcp.pop %v4466
    %v4477 = vmul.f32 1.0, %v4476
    %v4478 = vrcp.pop %v4467
    %v4479 = vmul.f32 1.0, %v4478
    %v4480 = vrcp.pop %v4468
    %v4481 = vmul.f32 1.0, %v4480
    %v4482 = vrcp.pop %v4469
    %v4483 = vmul.f32 1.0, %v4482
    %v4484 = vrcp.pop %v4470
    %v4485 = vmul.f32 1.0, %v4484
    %v4486 = vrcp.pop %v4471
    %v4487 = vmul.f32 1.0, %v4486
    %v4488 = vtanh.pop %v4362
    %v4489 = vtanh.pop %v4366
    %v4490 = vtanh.pop %v4370
    %v4491 = vtanh.pop %v4374
    %v4492 = vtanh.pop %v4378
    %v4493 = vtanh.pop %v4382
    %v4494 = vtanh.pop %v4386
    %v4495 = vtanh.pop %v4390
    %v4496 = vxor.u32 %v4363, 2147483648
    %v4497 = vxor.u32 %v4367, 2147483648
    %v4498 = vxor.u32 %v4371, 2147483648
    %v4499 = vxor.u32 %v4375, 2147483648
    %v4500 = vxor.u32 %v4379, 2147483648
    %v4501 = vxor.u32 %v4383, 2147483648
    %v4502 = vxor.u32 %v4387, 2147483648
    %v4503 = vxor.u32 %v4391, 2147483648
    %v4504 = vmul.f32 %v4496, 1.442695
    %v4505 = vpow.pop %v4504
    %v4506 = vmul.f32 %v4497, 1.442695
    %v4507 = vpow.pop %v4506
    %v4508 = vmul.f32 %v4498, 1.442695
    %v4509 = vpow.pop %v4508
    %v4510 = vmul.f32 %v4499, 1.442695
    %v4511 = vpow.pop %v4510
    %v4512 = vmul.f32 %v4500, 1.442695
    %v4513 = vpow.pop %v4512
    %v4514 = vmul.f32 %v4501, 1.442695
    %v4515 = vpow.pop %v4514
    %v4516 = vmul.f32 %v4502, 1.442695
    %v4517 = vpow.pop %v4516
    %v4518 = vmul.f32 %v4503, 1.442695
    %v4519 = vpow.pop %v4518
    %v4520 = vadd.f32 %v4505, 1.0
    %v4521 = vadd.f32 %v4507, 1.0
    %v4522 = vadd.f32 %v4509, 1.0
    %v4523 = vadd.f32 %v4511, 1.0
    %v4524 = vadd.f32 %v4513, 1.0
    %v4525 = vadd.f32 %v4515, 1.0
    %v4526 = vadd.f32 %v4517, 1.0
    %v4527 = vadd.f32 %v4519, 1.0
    %v4528 = vrcp.pop %v4520
    %v4529 = vmul.f32 1.0, %v4528
    %v4530 = vrcp.pop %v4521
    %v4531 = vmul.f32 1.0, %v4530
    %v4532 = vrcp.pop %v4522
    %v4533 = vmul.f32 1.0, %v4532
    %v4534 = vrcp.pop %v4523
    %v4535 = vmul.f32 1.0, %v4534
    %v4536 = vrcp.pop %v4524
    %v4537 = vmul.f32 1.0, %v4536
    %v4538 = vrcp.pop %v4525
    %v4539 = vmul.f32 1.0, %v4538
    %v4540 = vrcp.pop %v4526
    %v4541 = vmul.f32 1.0, %v4540
    %v4542 = vrcp.pop %v4527
    %v4543 = vmul.f32 1.0, %v4542
    %v4552 = vrot.slane %v3957, 7
    %v4553 = vrot.slane %v3958, 7
    %v4554 = vrot.slane %v3959, 7
    %v4555 = vrot.slane %v3960, 7
    %v4556 = vrot.slane %v3961, 7
    %v4557 = vrot.slane %v3962, 7
    %v4558 = vrot.slane %v3963, 7
    %v4559 = vrot.slane %v3964, 7
    %v4568 = vmul.f32 %v4473, %v4552
    %v4569 = vmul.f32 %v4475, %v4553
    %v4570 = vmul.f32 %v4477, %v4554
    %v4571 = vmul.f32 %v4479, %v4555
    %v4572 = vmul.f32 %v4481, %v4556
    %v4573 = vmul.f32 %v4483, %v4557
    %v4574 = vmul.f32 %v4485, %v4558
    %v4575 = vmul.f32 %v4487, %v4559
    %v4576 = vmul.f32 %v4425, %v4488
    %v4577 = vmul.f32 %v4427, %v4489
    %v4578 = vmul.f32 %v4429, %v4490
    %v4579 = vmul.f32 %v4431, %v4491
    %v4580 = vmul.f32 %v4433, %v4492
    %v4581 = vmul.f32 %v4435, %v4493
    %v4582 = vmul.f32 %v4437, %v4494
    %v4583 = vmul.f32 %v4439, %v4495
    %v4584 = vadd.f32 %v4568, %v4576
    %v4585 = vadd.f32 %v4569, %v4577
    %v4586 = vadd.f32 %v4570, %v4578
    %v4587 = vadd.f32 %v4571, %v4579
    %v4588 = vadd.f32 %v4572, %v4580
    %v4589 = vadd.f32 %v4573, %v4581
    %v4590 = vadd.f32 %v4574, %v4582
    %v4591 = vadd.f32 %v4575, %v4583
    %v4592 = vtanh.pop %v4584
    %v4593 = vtanh.pop %v4585
    %v4594 = vtanh.pop %v4586
    %v4595 = vtanh.pop %v4587
    %v4596 = vtanh.pop %v4588
    %v4597 = vtanh.pop %v4589
    %v4598 = vtanh.pop %v4590
    %v4599 = vtanh.pop %v4591
    %v4600 = vmul.f32 %v4529, %v4592
    %v4601 = vmul.f32 %v4531, %v4593
    %v4602 = vmul.f32 %v4533, %v4594
    %v4603 = vmul.f32 %v4535, %v4595
    %v4604 = vmul.f32 %v4537, %v4596
    %v4605 = vmul.f32 %v4539, %v4597
    %v4606 = vmul.f32 %v4541, %v4598
    %v4607 = vmul.f32 %v4543, %v4599
    %v4608 = vpack.c.bf16 %v4600, %v4600
    %v4609 = vpack.c.bf16 %v4601, %v4601
    %v4610 = vpack.c.bf16 %v4602, %v4602
    %v4611 = vpack.c.bf16 %v4603, %v4603
    %v4612 = vpack.c.bf16 %v4604, %v4604
    %v4613 = vpack.c.bf16 %v4605, %v4605
    %v4614 = vpack.c.bf16 %v4606, %v4606
    %v4615 = vpack.c.bf16 %v4607, %v4607
    %v4616 = vpack.c.bf16 %v4213, %v4213
    %4617 = vmatprep.subr.bf16.mxu0 %v1231
    %4618 = vmatpush1.bf16.msra.mxu0 %v1230
    %4619 = vmatprep.subr.bf16.mxu0 %v1235
    %4620 = vmatpush1.bf16.msra.mxu0 %v1234
    %4621 = vmatprep.subr.bf16.mxu0 %v1239
    %4622 = vmatpush1.bf16.msra.mxu0 %v1238
    %4623 = vmatprep.subr.bf16.mxu0 %v1243
    %4624 = vmatpush1.bf16.msra.mxu0 %v1242
    %4625 = vmatprep.subr.bf16.mxu0 %v1247
    %4626 = vmatpush1.bf16.msra.mxu0 %v1246
    %4627 = vmatprep.subr.bf16.mxu0 %v1251
    %4628 = vmatpush1.bf16.msra.mxu0 %v1250
    %4629 = vmatprep.subr.bf16.mxu0 %v1255
    %4630 = vmatpush1.bf16.msra.mxu0 %v1254
    %4631 = vmatprep.subr.bf16.mxu0 %v1259
    %4632 = vmatpush1.bf16.msra.mxu0 %v1258
    %4633 = vmatprep.subr.bf16.mxu0 0
    %4634 = vmatpush1.bf16.msra.mxu0 0
    %4635 = vmatprep.subr.bf16.mxu0 0
    %4636 = vmatpush1.bf16.msra.mxu0 0
    %4637 = vmatprep.subr.bf16.mxu0 0
    %4638 = vmatpush1.bf16.msra.mxu0 0
    %4639 = vmatprep.subr.bf16.mxu0 0
    %4640 = vmatpush1.bf16.msra.mxu0 0
    %4641 = vmatprep.subr.bf16.mxu0 0
    %4642 = vmatpush1.bf16.msra.mxu0 0
    %4643 = vmatprep.subr.bf16.mxu0 0
    %4644 = vmatpush1.bf16.msra.mxu0 0
    %4645 = vmatprep.subr.bf16.mxu0 0
    %4646 = vmatpush1.bf16.msra.mxu0 0
    %4647 = vmatprep.subr.bf16.mxu0 0
    %4648 = vmatpush1.bf16.msra.mxu0 0
    %4649 = vmatprep.mubr.bf16.mxu0 0
    %4650 = vmatmul.mubr.bf16.gmra.mrb[0].mxu0 %v4616
    %v4651 = vpop.f32.mrb[0].mxu0
    %v4652 = vadd.f32 0.0, %v4651
    %v4653 = vpop.f32.mrb[0].mxu0
    %v4654 = vadd.f32 0.0, %v4653
    %v4655 = vpop.f32.mrb[0].mxu0
    %v4656 = vpop.f32.mrb[0].mxu0
    %4657 = vdwg.mxu0
    %4658 = vmatprep.subr.bf16.mxu0 %v1233
    %4659 = vmatpush1.bf16.msra.mxu0 %v1232
    %4660 = vmatprep.subr.bf16.mxu0 %v1237
    %4661 = vmatpush1.bf16.msra.mxu0 %v1236
    %4662 = vmatprep.subr.bf16.mxu0 %v1241
    %4663 = vmatpush1.bf16.msra.mxu0 %v1240
    %4664 = vmatprep.subr.bf16.mxu0 %v1245
    %4665 = vmatpush1.bf16.msra.mxu0 %v1244
    %4666 = vmatprep.subr.bf16.mxu0 %v1249
    %4667 = vmatpush1.bf16.msra.mxu0 %v1248
    %4668 = vmatprep.subr.bf16.mxu0 %v1253
    %4669 = vmatpush1.bf16.msra.mxu0 %v1252
    %4670 = vmatprep.subr.bf16.mxu0 %v1257
    %4671 = vmatpush1.bf16.msra.mxu0 %v1256
    %4672 = vmatprep.subr.bf16.mxu0 %v1261
    %4673 = vmatpush1.bf16.msra.mxu0 %v1260
    %4674 = vmatprep.subr.bf16.mxu0 0
    %4675 = vmatpush1.bf16.msra.mxu0 0
    %4676 = vmatprep.subr.bf16.mxu0 0
    %4677 = vmatpush1.bf16.msra.mxu0 0
    %4678 = vmatprep.subr.bf16.mxu0 0
    %4679 = vmatpush1.bf16.msra.mxu0 0
    %4680 = vmatprep.subr.bf16.mxu0 0
    %4681 = vmatpush1.bf16.msra.mxu0 0
    %4682 = vmatprep.subr.bf16.mxu0 0
    %4683 = vmatpush1.bf16.msra.mxu0 0
    %4684 = vmatprep.subr.bf16.mxu0 0
    %4685 = vmatpush1.bf16.msra.mxu0 0
    %4686 = vmatprep.subr.bf16.mxu0 0
    %4687 = vmatpush1.bf16.msra.mxu0 0
    %4688 = vmatprep.subr.bf16.mxu0 0
    %4689 = vmatpush1.bf16.msra.mxu0 0
    %4690 = vmatprep.mubr.bf16.mxu0 0
    %4691 = vmatmul.mubr.bf16.gmra.mrb[0].mxu0 %v4616
    %v4692 = vpop.f32.mrb[0].mxu0
    %v4693 = vadd.f32 0.0, %v4692
    %v4694 = vpop.f32.mrb[0].mxu0
    %v4695 = vadd.f32 0.0, %v4694
    %v4696 = vpop.f32.mrb[0].mxu0
    %v4697 = vpop.f32.mrb[0].mxu0
    %4698 = vdwg.mxu0
    %v4707 = vunpack.c.l.b16 %v4608
    %v4708 = vunpack.c.l.b16 %v4609
    %v4709 = vunpack.c.l.b16 %v4610
    %v4710 = vunpack.c.l.b16 %v4611
    %v4711 = vunpack.c.l.b16 %v4612
    %v4712 = vunpack.c.l.b16 %v4613
    %v4713 = vunpack.c.l.b16 %v4614
    %v4714 = vunpack.c.l.b16 %v4615
    %v4715 = vrot.slane %v4707, 5
    %v4716 = vrot.slane %v4708, 4
    %v4717 = vsel %vm1393, %v4716, %v4715
    %v4718 = vrot.slane %v4709, 3
    %v4719 = vsel %vm1396, %v4718, %v4717
    %v4720 = vrot.slane %v4710, 2
    %v4721 = vsel %vm1399, %v4720, %v4719
    %v4722 = vrot.slane %v4711, 1
    %v4723 = vsel %vm1402, %v4722, %v4721
    %v4724 = vsel %vm1405, %v4712, %v4723
    %v4725 = vrot.slane %v4713, 7
    %v4726 = vsel %vm1408, %v4725, %v4724
    %v4727 = vrot.slane %v4714, 6
    %v4728 = vsel %vm1411, %v4727, %v4726
    %v4729 = vpack.c.b16 %v4728, %v4728
    %4731 = vmatprep.subr.bf16.mxu0 %v1512
    %4732 = vmatpush1.bf16.msra.mxu0 %v1511
    %4733 = vmatprep.subr.bf16.mxu0 %v1516
    %4734 = vmatpush1.bf16.msra.mxu0 %v1515
    %4735 = vmatprep.subr.bf16.mxu0 %v1520
    %4736 = vmatpush1.bf16.msra.mxu0 %v1519
    %4737 = vmatprep.subr.bf16.mxu0 %v1524
    %4738 = vmatpush1.bf16.msra.mxu0 %v1523
    %4739 = vmatprep.subr.bf16.mxu0 %v1528
    %4740 = vmatpush1.bf16.msra.mxu0 %v1527
    %4741 = vmatprep.subr.bf16.mxu0 %v1532
    %4742 = vmatpush1.bf16.msra.mxu0 %v1531
    %4743 = vmatprep.subr.bf16.mxu0 %v1536
    %4744 = vmatpush1.bf16.msra.mxu0 %v1535
    %4745 = vmatprep.subr.bf16.mxu0 %v1540
    %4746 = vmatpush1.bf16.msra.mxu0 %v1539
    %4747 = vmatprep.subr.bf16.mxu0 0
    %4748 = vmatpush1.bf16.msra.mxu0 0
    %4749 = vmatprep.subr.bf16.mxu0 0
    %4750 = vmatpush1.bf16.msra.mxu0 0
    %4751 = vmatprep.subr.bf16.mxu0 0
    %4752 = vmatpush1.bf16.msra.mxu0 0
    %4753 = vmatprep.subr.bf16.mxu0 0
    %4754 = vmatpush1.bf16.msra.mxu0 0
    %4755 = vmatprep.subr.bf16.mxu0 0
    %4756 = vmatpush1.bf16.msra.mxu0 0
    %4757 = vmatprep.subr.bf16.mxu0 0
    %4758 = vmatpush1.bf16.msra.mxu0 0
    %4759 = vmatprep.subr.bf16.mxu0 0
    %4760 = vmatpush1.bf16.msra.mxu0 0
    %4761 = vmatprep.subr.bf16.mxu0 0
    %4762 = vmatpush1.bf16.msra.mxu0 0
    %4763 = vmatprep.mubr.bf16.mxu0 0
    %4764 = vmatmul.mubr.bf16.gmra.mrb[0].mxu0 %v4729
    %v4765 = vpop.f32.mrb[0].mxu0
    %v4766 = vadd.f32 %v4652, %v4765
    %v4767 = vpop.f32.mrb[0].mxu0
    %v4768 = vadd.f32 %v4654, %v4767
    %v4769 = vpop.f32.mrb[0].mxu0
    %v4770 = vpop.f32.mrb[0].mxu0
    %4771 = vdwg.mxu0
    %4772 = vmatprep.subr.bf16.mxu0 %v1514
    %4773 = vmatpush1.bf16.msra.mxu0 %v1513
    %4774 = vmatprep.subr.bf16.mxu0 %v1518
    %4775 = vmatpush1.bf16.msra.mxu0 %v1517
    %4776 = vmatprep.subr.bf16.mxu0 %v1522
    %4777 = vmatpush1.bf16.msra.mxu0 %v1521
    %4778 = vmatprep.subr.bf16.mxu0 %v1526
    %4779 = vmatpush1.bf16.msra.mxu0 %v1525
    %4780 = vmatprep.subr.bf16.mxu0 %v1530
    %4781 = vmatpush1.bf16.msra.mxu0 %v1529
    %4782 = vmatprep.subr.bf16.mxu0 %v1534
    %4783 = vmatpush1.bf16.msra.mxu0 %v1533
    %4784 = vmatprep.subr.bf16.mxu0 %v1538
    %4785 = vmatpush1.bf16.msra.mxu0 %v1537
    %4786 = vmatprep.subr.bf16.mxu0 %v1542
    %4787 = vmatpush1.bf16.msra.mxu0 %v1541
    %4788 = vmatprep.subr.bf16.mxu0 0
    %4789 = vmatpush1.bf16.msra.mxu0 0
    %4790 = vmatprep.subr.bf16.mxu0 0
    %4791 = vmatpush1.bf16.msra.mxu0 0
    %4792 = vmatprep.subr.bf16.mxu0 0
    %4793 = vmatpush1.bf16.msra.mxu0 0
    %4794 = vmatprep.subr.bf16.mxu0 0
    %4795 = vmatpush1.bf16.msra.mxu0 0
    %4796 = vmatprep.subr.bf16.mxu0 0
    %4797 = vmatpush1.bf16.msra.mxu0 0
    %4798 = vmatprep.subr.bf16.mxu0 0
    %4799 = vmatpush1.bf16.msra.mxu0 0
    %4800 = vmatprep.subr.bf16.mxu0 0
    %4801 = vmatpush1.bf16.msra.mxu0 0
    %4802 = vmatprep.subr.bf16.mxu0 0
    %4803 = vmatpush1.bf16.msra.mxu0 0
    %4804 = vmatprep.mubr.bf16.mxu0 0
    %4805 = vmatmul.mubr.bf16.gmra.mrb[0].mxu0 %v4729
    %v4806 = vpop.f32.mrb[0].mxu0
    %v4807 = vadd.f32 %v4693, %v4806
    %v4808 = vpop.f32.mrb[0].mxu0
    %v4809 = vadd.f32 %v4695, %v4808
    %v4810 = vpop.f32.mrb[0].mxu0
    %v4811 = vpop.f32.mrb[0].mxu0
    %4812 = vdwg.mxu0
    %v4813 = vadd.f32 %v4766, %v1661
    %v4814 = vadd.f32 %v4768, %v1665
    %v4815 = vadd.f32 %v4807, %v1669
    %v4816 = vadd.f32 %v4809, %v1673
    %v4817 = vxor.u32 %v4813, 2147483648
    %v4818 = vmul.f32 %v4817, 1.442695
    %v4819 = vpow.pop %v4818
    %v4820 = vadd.f32 %v4819, 1.0
    %v4821 = vrcp.pop %v4820
    %v4822 = vmul.f32 1.0, %v4821
    %v4823 = vxor.u32 %v4814, 2147483648
    %v4824 = vmul.f32 %v4823, 1.442695
    %v4825 = vpow.pop %v4824
    %v4826 = vadd.f32 %v4825, 1.0
    %v4827 = vrcp.pop %v4826
    %v4828 = vmul.f32 1.0, %v4827
    %v4829 = vtanh.pop %v4815
    %v4830 = vxor.u32 %v4816, 2147483648
    %v4831 = vmul.f32 %v4830, 1.442695
    %v4832 = vpow.pop %v4831
    %v4833 = vadd.f32 %v4832, 1.0
    %v4834 = vrcp.pop %v4833
    %v4835 = vmul.f32 1.0, %v4834
    %v4836 = vmul.f32 %v4828, %v4211
    %v4837 = vmul.f32 %v4822, %v4829
    %v4838 = vadd.f32 %v4836, %v4837
    %v4839 = vtanh.pop %v4838
    %v4840 = vmul.f32 %v4835, %v4839
    %4841 = vmatprep.subr.bf16.mxu0 %v693
    %4842 = vmatpush1.bf16.msra.mxu0 %v692
    %4843 = vmatprep.subr.bf16.mxu0 %v697
    %4844 = vmatpush1.bf16.msra.mxu0 %v696
    %4845 = vmatprep.subr.bf16.mxu0 %v701
    %4846 = vmatpush1.bf16.msra.mxu0 %v700
    %4847 = vmatprep.subr.bf16.mxu0 %v705
    %4848 = vmatpush1.bf16.msra.mxu0 %v704
    %4849 = vmatprep.subr.bf16.mxu0 %v709
    %4850 = vmatpush1.bf16.msra.mxu0 %v708
    %4851 = vmatprep.subr.bf16.mxu0 %v713
    %4852 = vmatpush1.bf16.msra.mxu0 %v712
    %4853 = vmatprep.subr.bf16.mxu0 %v717
    %4854 = vmatpush1.bf16.msra.mxu0 %v716
    %4855 = vmatprep.subr.bf16.mxu0 %v721
    %4856 = vmatpush1.bf16.msra.mxu0 %v720
    %4857 = vmatprep.subr.bf16.mxu0 0
    %4858 = vmatpush1.bf16.msra.mxu0 0
    %4859 = vmatprep.subr.bf16.mxu0 0
    %4860 = vmatpush1.bf16.msra.mxu0 0
    %4861 = vmatprep.subr.bf16.mxu0 0
    %4862 = vmatpush1.bf16.msra.mxu0 0
    %4863 = vmatprep.subr.bf16.mxu0 0
    %4864 = vmatpush1.bf16.msra.mxu0 0
    %4865 = vmatprep.subr.bf16.mxu0 0
    %4866 = vmatpush1.bf16.msra.mxu0 0
    %4867 = vmatprep.subr.bf16.mxu0 0
    %4868 = vmatpush1.bf16.msra.mxu0 0
    %4869 = vmatprep.subr.bf16.mxu0 0
    %4870 = vmatpush1.bf16.msra.mxu0 0
    %4871 = vmatprep.subr.bf16.mxu0 0
    %4872 = vmatpush1.bf16.msra.mxu0 0
    %4873 = vmatprep.mubr.bf16.mxu0 0
    %4874 = vmatmul.mubr.bf16.gmra.mrb[0].mxu0 %v4729
    %v4875 = vpop.f32.mrb[0].mxu0
    %v4876 = vadd.f32 0.0, %v4875
    %v4877 = vpop.f32.mrb[0].mxu0
    %v4878 = vadd.f32 0.0, %v4877
    %v4879 = vpop.f32.mrb[0].mxu0
    %v4880 = vpop.f32.mrb[0].mxu0
    %4881 = vdwg.mxu0
    %4882 = vmatprep.subr.bf16.mxu0 %v695
    %4883 = vmatpush1.bf16.msra.mxu0 %v694
    %4884 = vmatprep.subr.bf16.mxu0 %v699
    %4885 = vmatpush1.bf16.msra.mxu0 %v698
    %4886 = vmatprep.subr.bf16.mxu0 %v703
    %4887 = vmatpush1.bf16.msra.mxu0 %v702
    %4888 = vmatprep.subr.bf16.mxu0 %v707
    %4889 = vmatpush1.bf16.msra.mxu0 %v706
    %4890 = vmatprep.subr.bf16.mxu0 %v711
    %4891 = vmatpush1.bf16.msra.mxu0 %v710
    %4892 = vmatprep.subr.bf16.mxu0 %v715
    %4893 = vmatpush1.bf16.msra.mxu0 %v714
    %4894 = vmatprep.subr.bf16.mxu0 %v719
    %4895 = vmatpush1.bf16.msra.mxu0 %v718
    %4896 = vmatprep.subr.bf16.mxu0 %v723
    %4897 = vmatpush1.bf16.msra.mxu0 %v722
    %4898 = vmatprep.subr.bf16.mxu0 0
    %4899 = vmatpush1.bf16.msra.mxu0 0
    %4900 = vmatprep.subr.bf16.mxu0 0
    %4901 = vmatpush1.bf16.msra.mxu0 0
    %4902 = vmatprep.subr.bf16.mxu0 0
    %4903 = vmatpush1.bf16.msra.mxu0 0
    %4904 = vmatprep.subr.bf16.mxu0 0
    %4905 = vmatpush1.bf16.msra.mxu0 0
    %4906 = vmatprep.subr.bf16.mxu0 0
    %4907 = vmatpush1.bf16.msra.mxu0 0
    %4908 = vmatprep.subr.bf16.mxu0 0
    %4909 = vmatpush1.bf16.msra.mxu0 0
    %4910 = vmatprep.subr.bf16.mxu0 0
    %4911 = vmatpush1.bf16.msra.mxu0 0
    %4912 = vmatprep.subr.bf16.mxu0 0
    %4913 = vmatpush1.bf16.msra.mxu0 0
    %4914 = vmatprep.mubr.bf16.mxu0 0
    %4915 = vmatmul.mubr.bf16.gmra.mrb[0].mxu0 %v4729
    %v4916 = vpop.f32.mrb[0].mxu0
    %v4917 = vadd.f32 0.0, %v4916
    %v4918 = vpop.f32.mrb[0].mxu0
    %v4919 = vadd.f32 0.0, %v4918
    %v4920 = vpop.f32.mrb[0].mxu0
    %v4921 = vpop.f32.mrb[0].mxu0
    %4922 = vdwg.mxu0
    %v4927 = vrot.slane %v4876, 2
    %v4928 = vrot.slane %v4878, 2
    %v4929 = vrot.slane %v4917, 2
    %v4930 = vrot.slane %v4919, 2
    %v4931 = vrot.slane %v4876, 3
    %v4932 = vrot.slane %v4878, 3
    %v4933 = vrot.slane %v4917, 3
    %v4934 = vrot.slane %v4919, 3
    %v4935 = vrot.slane %v4876, 4
    %v4936 = vrot.slane %v4878, 4
    %v4937 = vrot.slane %v4917, 4
    %v4938 = vrot.slane %v4919, 4
    %v4939 = vrot.slane %v4876, 5
    %v4940 = vrot.slane %v4878, 5
    %v4941 = vrot.slane %v4917, 5
    %v4942 = vrot.slane %v4919, 5
    %v4943 = vrot.slane %v4876, 6
    %v4944 = vrot.slane %v4878, 6
    %v4945 = vrot.slane %v4917, 6
    %v4946 = vrot.slane %v4919, 6
    %v4947 = vrot.slane %v4876, 7
    %v4948 = vrot.slane %v4878, 7
    %v4949 = vrot.slane %v4917, 7
    %v4950 = vrot.slane %v4919, 7
    %v4951 = vrot.slane %v4876, 1
    %v4952 = vrot.slane %v4878, 1
    %v4953 = vrot.slane %v4917, 1
    %v4954 = vrot.slane %v4919, 1
    %v4987 = vadd.f32 %v388, %v4927
    %v4988 = vadd.f32 %v390, %v4928
    %v4989 = vadd.f32 %v461, %v4929
    %v4990 = vadd.f32 %v463, %v4930
    %v4991 = vadd.f32 %v392, %v4931
    %v4992 = vadd.f32 %v394, %v4932
    %v4993 = vadd.f32 %v465, %v4933
    %v4994 = vadd.f32 %v467, %v4934
    %v4995 = vadd.f32 %v398, %v4935
    %v4996 = vadd.f32 %v400, %v4936
    %v4997 = vadd.f32 %v471, %v4937
    %v4998 = vadd.f32 %v473, %v4938
    %v4999 = vadd.f32 %v402, %v4939
    %v5000 = vadd.f32 %v404, %v4940
    %v5001 = vadd.f32 %v475, %v4941
    %v5002 = vadd.f32 %v477, %v4942
    %v5003 = vadd.f32 %v408, %v4943
    %v5004 = vadd.f32 %v410, %v4944
    %v5005 = vadd.f32 %v481, %v4945
    %v5006 = vadd.f32 %v483, %v4946
    %v5007 = vadd.f32 %v412, %v4947
    %v5008 = vadd.f32 %v414, %v4948
    %v5009 = vadd.f32 %v485, %v4949
    %v5010 = vadd.f32 %v487, %v4950
    %v5011 = vadd.f32 %v418, %v4876
    %v5012 = vadd.f32 %v420, %v4878
    %v5013 = vadd.f32 %v491, %v4917
    %v5014 = vadd.f32 %v493, %v4919
    %v5015 = vadd.f32 %v422, %v4951
    %v5016 = vadd.f32 %v424, %v4952
    %v5017 = vadd.f32 %v495, %v4953
    %v5018 = vadd.f32 %v497, %v4954
    %v5019 = vxor.u32 %v4987, 2147483648
    %v5020 = vxor.u32 %v4991, 2147483648
    %v5021 = vxor.u32 %v4995, 2147483648
    %v5022 = vxor.u32 %v4999, 2147483648
    %v5023 = vxor.u32 %v5003, 2147483648
    %v5024 = vxor.u32 %v5007, 2147483648
    %v5025 = vxor.u32 %v5011, 2147483648
    %v5026 = vxor.u32 %v5015, 2147483648
    %v5027 = vmul.f32 %v5019, 1.442695
    %v5028 = vpow.pop %v5027
    %v5029 = vmul.f32 %v5020, 1.442695
    %v5030 = vpow.pop %v5029
    %v5031 = vmul.f32 %v5021, 1.442695
    %v5032 = vpow.pop %v5031
    %v5033 = vmul.f32 %v5022, 1.442695
    %v5034 = vpow.pop %v5033
    %v5035 = vmul.f32 %v5023, 1.442695
    %v5036 = vpow.pop %v5035
    %v5037 = vmul.f32 %v5024, 1.442695
    %v5038 = vpow.pop %v5037
    %v5039 = vmul.f32 %v5025, 1.442695
    %v5040 = vpow.pop %v5039
    %v5041 = vmul.f32 %v5026, 1.442695
    %v5042 = vpow.pop %v5041
    %v5043 = vadd.f32 %v5028, 1.0
    %v5044 = vadd.f32 %v5030, 1.0
    %v5045 = vadd.f32 %v5032, 1.0
    %v5046 = vadd.f32 %v5034, 1.0
    %v5047 = vadd.f32 %v5036, 1.0
    %v5048 = vadd.f32 %v5038, 1.0
    %v5049 = vadd.f32 %v5040, 1.0
    %v5050 = vadd.f32 %v5042, 1.0
    %v5051 = vrcp.pop %v5043
    %v5052 = vmul.f32 1.0, %v5051
    %v5053 = vrcp.pop %v5044
    %v5054 = vmul.f32 1.0, %v5053
    %v5055 = vrcp.pop %v5045
    %v5056 = vmul.f32 1.0, %v5055
    %v5057 = vrcp.pop %v5046
    %v5058 = vmul.f32 1.0, %v5057
    %v5059 = vrcp.pop %v5047
    %v5060 = vmul.f32 1.0, %v5059
    %v5061 = vrcp.pop %v5048
    %v5062 = vmul.f32 1.0, %v5061
    %v5063 = vrcp.pop %v5049
    %v5064 = vmul.f32 1.0, %v5063
    %v5065 = vrcp.pop %v5050
    %v5066 = vmul.f32 1.0, %v5065
    %v5067 = vxor.u32 %v4988, 2147483648
    %v5068 = vxor.u32 %v4992, 2147483648
    %v5069 = vxor.u32 %v4996, 2147483648
    %v5070 = vxor.u32 %v5000, 2147483648
    %v5071 = vxor.u32 %v5004, 2147483648
    %v5072 = vxor.u32 %v5008, 2147483648
    %v5073 = vxor.u32 %v5012, 2147483648
    %v5074 = vxor.u32 %v5016, 2147483648
    %v5075 = vmul.f32 %v5067, 1.442695
    %v5076 = vpow.pop %v5075
    %v5077 = vmul.f32 %v5068, 1.442695
    %v5078 = vpow.pop %v5077
    %v5079 = vmul.f32 %v5069, 1.442695
    %v5080 = vpow.pop %v5079
    %v5081 = vmul.f32 %v5070, 1.442695
    %v5082 = vpow.pop %v5081
    %v5083 = vmul.f32 %v5071, 1.442695
    %v5084 = vpow.pop %v5083
    %v5085 = vmul.f32 %v5072, 1.442695
    %v5086 = vpow.pop %v5085
    %v5087 = vmul.f32 %v5073, 1.442695
    %v5088 = vpow.pop %v5087
    %v5089 = vmul.f32 %v5074, 1.442695
    %v5090 = vpow.pop %v5089
    %v5091 = vadd.f32 %v5076, 1.0
    %v5092 = vadd.f32 %v5078, 1.0
    %v5093 = vadd.f32 %v5080, 1.0
    %v5094 = vadd.f32 %v5082, 1.0
    %v5095 = vadd.f32 %v5084, 1.0
    %v5096 = vadd.f32 %v5086, 1.0
    %v5097 = vadd.f32 %v5088, 1.0
    %v5098 = vadd.f32 %v5090, 1.0
    %v5099 = vrcp.pop %v5091
    %v5100 = vmul.f32 1.0, %v5099
    %v5101 = vrcp.pop %v5092
    %v5102 = vmul.f32 1.0, %v5101
    %v5103 = vrcp.pop %v5093
    %v5104 = vmul.f32 1.0, %v5103
    %v5105 = vrcp.pop %v5094
    %v5106 = vmul.f32 1.0, %v5105
    %v5107 = vrcp.pop %v5095
    %v5108 = vmul.f32 1.0, %v5107
    %v5109 = vrcp.pop %v5096
    %v5110 = vmul.f32 1.0, %v5109
    %v5111 = vrcp.pop %v5097
    %v5112 = vmul.f32 1.0, %v5111
    %v5113 = vrcp.pop %v5098
    %v5114 = vmul.f32 1.0, %v5113
    %v5115 = vtanh.pop %v4989
    %v5116 = vtanh.pop %v4993
    %v5117 = vtanh.pop %v4997
    %v5118 = vtanh.pop %v5001
    %v5119 = vtanh.pop %v5005
    %v5120 = vtanh.pop %v5009
    %v5121 = vtanh.pop %v5013
    %v5122 = vtanh.pop %v5017
    %v5123 = vxor.u32 %v4990, 2147483648
    %v5124 = vxor.u32 %v4994, 2147483648
    %v5125 = vxor.u32 %v4998, 2147483648
    %v5126 = vxor.u32 %v5002, 2147483648
    %v5127 = vxor.u32 %v5006, 2147483648
    %v5128 = vxor.u32 %v5010, 2147483648
    %v5129 = vxor.u32 %v5014, 2147483648
    %v5130 = vxor.u32 %v5018, 2147483648
    %v5131 = vmul.f32 %v5123, 1.442695
    %v5132 = vpow.pop %v5131
    %v5133 = vmul.f32 %v5124, 1.442695
    %v5134 = vpow.pop %v5133
    %v5135 = vmul.f32 %v5125, 1.442695
    %v5136 = vpow.pop %v5135
    %v5137 = vmul.f32 %v5126, 1.442695
    %v5138 = vpow.pop %v5137
    %v5139 = vmul.f32 %v5127, 1.442695
    %v5140 = vpow.pop %v5139
    %v5141 = vmul.f32 %v5128, 1.442695
    %v5142 = vpow.pop %v5141
    %v5143 = vmul.f32 %v5129, 1.442695
    %v5144 = vpow.pop %v5143
    %v5145 = vmul.f32 %v5130, 1.442695
    %v5146 = vpow.pop %v5145
    %v5147 = vadd.f32 %v5132, 1.0
    %v5148 = vadd.f32 %v5134, 1.0
    %v5149 = vadd.f32 %v5136, 1.0
    %v5150 = vadd.f32 %v5138, 1.0
    %v5151 = vadd.f32 %v5140, 1.0
    %v5152 = vadd.f32 %v5142, 1.0
    %v5153 = vadd.f32 %v5144, 1.0
    %v5154 = vadd.f32 %v5146, 1.0
    %v5155 = vrcp.pop %v5147
    %v5156 = vmul.f32 1.0, %v5155
    %v5157 = vrcp.pop %v5148
    %v5158 = vmul.f32 1.0, %v5157
    %v5159 = vrcp.pop %v5149
    %v5160 = vmul.f32 1.0, %v5159
    %v5161 = vrcp.pop %v5150
    %v5162 = vmul.f32 1.0, %v5161
    %v5163 = vrcp.pop %v5151
    %v5164 = vmul.f32 1.0, %v5163
    %v5165 = vrcp.pop %v5152
    %v5166 = vmul.f32 1.0, %v5165
    %v5167 = vrcp.pop %v5153
    %v5168 = vmul.f32 1.0, %v5167
    %v5169 = vrcp.pop %v5154
    %v5170 = vmul.f32 1.0, %v5169
    %v5179 = vrot.slane %v4584, 7
    %v5180 = vrot.slane %v4585, 7
    %v5181 = vrot.slane %v4586, 7
    %v5182 = vrot.slane %v4587, 7
    %v5183 = vrot.slane %v4588, 7
    %v5184 = vrot.slane %v4589, 7
    %v5185 = vrot.slane %v4590, 7
    %v5186 = vrot.slane %v4591, 7
    %v5195 = vmul.f32 %v5100, %v5179
    %v5196 = vmul.f32 %v5102, %v5180
    %v5197 = vmul.f32 %v5104, %v5181
    %v5198 = vmul.f32 %v5106, %v5182
    %v5199 = vmul.f32 %v5108, %v5183
    %v5200 = vmul.f32 %v5110, %v5184
    %v5201 = vmul.f32 %v5112, %v5185
    %v5202 = vmul.f32 %v5114, %v5186
    %v5203 = vmul.f32 %v5052, %v5115
    %v5204 = vmul.f32 %v5054, %v5116
    %v5205 = vmul.f32 %v5056, %v5117
    %v5206 = vmul.f32 %v5058, %v5118
    %v5207 = vmul.f32 %v5060, %v5119
    %v5208 = vmul.f32 %v5062, %v5120
    %v5209 = vmul.f32 %v5064, %v5121
    %v5210 = vmul.f32 %v5066, %v5122
    %v5211 = vadd.f32 %v5195, %v5203
    %v5212 = vadd.f32 %v5196, %v5204
    %v5213 = vadd.f32 %v5197, %v5205
    %v5214 = vadd.f32 %v5198, %v5206
    %v5215 = vadd.f32 %v5199, %v5207
    %v5216 = vadd.f32 %v5200, %v5208
    %v5217 = vadd.f32 %v5201, %v5209
    %v5218 = vadd.f32 %v5202, %v5210
    %v5219 = vtanh.pop %v5211
    %v5220 = vtanh.pop %v5212
    %v5221 = vtanh.pop %v5213
    %v5222 = vtanh.pop %v5214
    %v5223 = vtanh.pop %v5215
    %v5224 = vtanh.pop %v5216
    %v5225 = vtanh.pop %v5217
    %v5226 = vtanh.pop %v5218
    %v5227 = vmul.f32 %v5156, %v5219
    %v5228 = vmul.f32 %v5158, %v5220
    %v5229 = vmul.f32 %v5160, %v5221
    %v5230 = vmul.f32 %v5162, %v5222
    %v5231 = vmul.f32 %v5164, %v5223
    %v5232 = vmul.f32 %v5166, %v5224
    %v5233 = vmul.f32 %v5168, %v5225
    %v5234 = vmul.f32 %v5170, %v5226
    %v5235 = vpack.c.bf16 %v5227, %v5227
    %v5236 = vpack.c.bf16 %v5228, %v5228
    %v5237 = vpack.c.bf16 %v5229, %v5229
    %v5238 = vpack.c.bf16 %v5230, %v5230
    %v5239 = vpack.c.bf16 %v5231, %v5231
    %v5240 = vpack.c.bf16 %v5232, %v5232
    %v5241 = vpack.c.bf16 %v5233, %v5233
    %v5242 = vpack.c.bf16 %v5234, %v5234
    %v5243 = vpack.c.bf16 %v4840, %v4840
    %5244 = vmatprep.subr.bf16.mxu0 %v1231
    %5245 = vmatpush1.bf16.msra.mxu0 %v1230
    %5246 = vmatprep.subr.bf16.mxu0 %v1235
    %5247 = vmatpush1.bf16.msra.mxu0 %v1234
    %5248 = vmatprep.subr.bf16.mxu0 %v1239
    %5249 = vmatpush1.bf16.msra.mxu0 %v1238
    %5250 = vmatprep.subr.bf16.mxu0 %v1243
    %5251 = vmatpush1.bf16.msra.mxu0 %v1242
    %5252 = vmatprep.subr.bf16.mxu0 %v1247
    %5253 = vmatpush1.bf16.msra.mxu0 %v1246
    %5254 = vmatprep.subr.bf16.mxu0 %v1251
    %5255 = vmatpush1.bf16.msra.mxu0 %v1250
    %5256 = vmatprep.subr.bf16.mxu0 %v1255
    %5257 = vmatpush1.bf16.msra.mxu0 %v1254
    %5258 = vmatprep.subr.bf16.mxu0 %v1259
    %5259 = vmatpush1.bf16.msra.mxu0 %v1258
    %5260 = vmatprep.subr.bf16.mxu0 0
    %5261 = vmatpush1.bf16.msra.mxu0 0
    %5262 = vmatprep.subr.bf16.mxu0 0
    %5263 = vmatpush1.bf16.msra.mxu0 0
    %5264 = vmatprep.subr.bf16.mxu0 0
    %5265 = vmatpush1.bf16.msra.mxu0 0
    %5266 = vmatprep.subr.bf16.mxu0 0
    %5267 = vmatpush1.bf16.msra.mxu0 0
    %5268 = vmatprep.subr.bf16.mxu0 0
    %5269 = vmatpush1.bf16.msra.mxu0 0
    %5270 = vmatprep.subr.bf16.mxu0 0
    %5271 = vmatpush1.bf16.msra.mxu0 0
    %5272 = vmatprep.subr.bf16.mxu0 0
    %5273 = vmatpush1.bf16.msra.mxu0 0
    %5274 = vmatprep.subr.bf16.mxu0 0
    %5275 = vmatpush1.bf16.msra.mxu0 0
    %5276 = vmatprep.mubr.bf16.mxu0 0
    %5277 = vmatmul.mubr.bf16.gmra.mrb[0].mxu0 %v5243
    %v5278 = vpop.f32.mrb[0].mxu0
    %v5279 = vadd.f32 0.0, %v5278
    %v5280 = vpop.f32.mrb[0].mxu0
    %v5281 = vadd.f32 0.0, %v5280
    %v5282 = vpop.f32.mrb[0].mxu0
    %v5283 = vpop.f32.mrb[0].mxu0
    %5284 = vdwg.mxu0
    %5285 = vmatprep.subr.bf16.mxu0 %v1233
    %5286 = vmatpush1.bf16.msra.mxu0 %v1232
    %5287 = vmatprep.subr.bf16.mxu0 %v1237
    %5288 = vmatpush1.bf16.msra.mxu0 %v1236
    %5289 = vmatprep.subr.bf16.mxu0 %v1241
    %5290 = vmatpush1.bf16.msra.mxu0 %v1240
    %5291 = vmatprep.subr.bf16.mxu0 %v1245
    %5292 = vmatpush1.bf16.msra.mxu0 %v1244
    %5293 = vmatprep.subr.bf16.mxu0 %v1249
    %5294 = vmatpush1.bf16.msra.mxu0 %v1248
    %5295 = vmatprep.subr.bf16.mxu0 %v1253
    %5296 = vmatpush1.bf16.msra.mxu0 %v1252
    %5297 = vmatprep.subr.bf16.mxu0 %v1257
    %5298 = vmatpush1.bf16.msra.mxu0 %v1256
    %5299 = vmatprep.subr.bf16.mxu0 %v1261
    %5300 = vmatpush1.bf16.msra.mxu0 %v1260
    %5301 = vmatprep.subr.bf16.mxu0 0
    %5302 = vmatpush1.bf16.msra.mxu0 0
    %5303 = vmatprep.subr.bf16.mxu0 0
    %5304 = vmatpush1.bf16.msra.mxu0 0
    %5305 = vmatprep.subr.bf16.mxu0 0
    %5306 = vmatpush1.bf16.msra.mxu0 0
    %5307 = vmatprep.subr.bf16.mxu0 0
    %5308 = vmatpush1.bf16.msra.mxu0 0
    %5309 = vmatprep.subr.bf16.mxu0 0
    %5310 = vmatpush1.bf16.msra.mxu0 0
    %5311 = vmatprep.subr.bf16.mxu0 0
    %5312 = vmatpush1.bf16.msra.mxu0 0
    %5313 = vmatprep.subr.bf16.mxu0 0
    %5314 = vmatpush1.bf16.msra.mxu0 0
    %5315 = vmatprep.subr.bf16.mxu0 0
    %5316 = vmatpush1.bf16.msra.mxu0 0
    %5317 = vmatprep.mubr.bf16.mxu0 0
    %5318 = vmatmul.mubr.bf16.gmra.mrb[0].mxu0 %v5243
    %v5319 = vpop.f32.mrb[0].mxu0
    %v5320 = vadd.f32 0.0, %v5319
    %v5321 = vpop.f32.mrb[0].mxu0
    %v5322 = vadd.f32 0.0, %v5321
    %v5323 = vpop.f32.mrb[0].mxu0
    %v5324 = vpop.f32.mrb[0].mxu0
    %5325 = vdwg.mxu0
    %v5334 = vunpack.c.l.b16 %v5235
    %v5335 = vunpack.c.l.b16 %v5236
    %v5336 = vunpack.c.l.b16 %v5237
    %v5337 = vunpack.c.l.b16 %v5238
    %v5338 = vunpack.c.l.b16 %v5239
    %v5339 = vunpack.c.l.b16 %v5240
    %v5340 = vunpack.c.l.b16 %v5241
    %v5341 = vunpack.c.l.b16 %v5242
    %v5342 = vrot.slane %v5334, 6
    %v5343 = vrot.slane %v5335, 5
    %v5344 = vsel %vm1393, %v5343, %v5342
    %v5345 = vrot.slane %v5336, 4
    %v5346 = vsel %vm1396, %v5345, %v5344
    %v5347 = vrot.slane %v5337, 3
    %v5348 = vsel %vm1399, %v5347, %v5346
    %v5349 = vrot.slane %v5338, 2
    %v5350 = vsel %vm1402, %v5349, %v5348
    %v5351 = vrot.slane %v5339, 1
    %v5352 = vsel %vm1405, %v5351, %v5350
    %v5353 = vsel %vm1408, %v5340, %v5352
    %v5354 = vrot.slane %v5341, 7
    %v5355 = vsel %vm1411, %v5354, %v5353
    %v5356 = vpack.c.b16 %v5355, %v5355
    %5358 = vmatprep.subr.bf16.mxu0 %v1512
    %5359 = vmatpush1.bf16.msra.mxu0 %v1511
    %5360 = vmatprep.subr.bf16.mxu0 %v1516
    %5361 = vmatpush1.bf16.msra.mxu0 %v1515
    %5362 = vmatprep.subr.bf16.mxu0 %v1520
    %5363 = vmatpush1.bf16.msra.mxu0 %v1519
    %5364 = vmatprep.subr.bf16.mxu0 %v1524
    %5365 = vmatpush1.bf16.msra.mxu0 %v1523
    %5366 = vmatprep.subr.bf16.mxu0 %v1528
    %5367 = vmatpush1.bf16.msra.mxu0 %v1527
    %5368 = vmatprep.subr.bf16.mxu0 %v1532
    %5369 = vmatpush1.bf16.msra.mxu0 %v1531
    %5370 = vmatprep.subr.bf16.mxu0 %v1536
    %5371 = vmatpush1.bf16.msra.mxu0 %v1535
    %5372 = vmatprep.subr.bf16.mxu0 %v1540
    %5373 = vmatpush1.bf16.msra.mxu0 %v1539
    %5374 = vmatprep.subr.bf16.mxu0 0
    %5375 = vmatpush1.bf16.msra.mxu0 0
    %5376 = vmatprep.subr.bf16.mxu0 0
    %5377 = vmatpush1.bf16.msra.mxu0 0
    %5378 = vmatprep.subr.bf16.mxu0 0
    %5379 = vmatpush1.bf16.msra.mxu0 0
    %5380 = vmatprep.subr.bf16.mxu0 0
    %5381 = vmatpush1.bf16.msra.mxu0 0
    %5382 = vmatprep.subr.bf16.mxu0 0
    %5383 = vmatpush1.bf16.msra.mxu0 0
    %5384 = vmatprep.subr.bf16.mxu0 0
    %5385 = vmatpush1.bf16.msra.mxu0 0
    %5386 = vmatprep.subr.bf16.mxu0 0
    %5387 = vmatpush1.bf16.msra.mxu0 0
    %5388 = vmatprep.subr.bf16.mxu0 0
    %5389 = vmatpush1.bf16.msra.mxu0 0
    %5390 = vmatprep.mubr.bf16.mxu0 0
    %5391 = vmatmul.mubr.bf16.gmra.mrb[0].mxu0 %v5356
    %v5392 = vpop.f32.mrb[0].mxu0
    %v5393 = vadd.f32 %v5279, %v5392
    %v5394 = vpop.f32.mrb[0].mxu0
    %v5395 = vadd.f32 %v5281, %v5394
    %v5396 = vpop.f32.mrb[0].mxu0
    %v5397 = vpop.f32.mrb[0].mxu0
    %5398 = vdwg.mxu0
    %5399 = vmatprep.subr.bf16.mxu0 %v1514
    %5400 = vmatpush1.bf16.msra.mxu0 %v1513
    %5401 = vmatprep.subr.bf16.mxu0 %v1518
    %5402 = vmatpush1.bf16.msra.mxu0 %v1517
    %5403 = vmatprep.subr.bf16.mxu0 %v1522
    %5404 = vmatpush1.bf16.msra.mxu0 %v1521
    %5405 = vmatprep.subr.bf16.mxu0 %v1526
    %5406 = vmatpush1.bf16.msra.mxu0 %v1525
    %5407 = vmatprep.subr.bf16.mxu0 %v1530
    %5408 = vmatpush1.bf16.msra.mxu0 %v1529
    %5409 = vmatprep.subr.bf16.mxu0 %v1534
    %5410 = vmatpush1.bf16.msra.mxu0 %v1533
    %5411 = vmatprep.subr.bf16.mxu0 %v1538
    %5412 = vmatpush1.bf16.msra.mxu0 %v1537
    %5413 = vmatprep.subr.bf16.mxu0 %v1542
    %5414 = vmatpush1.bf16.msra.mxu0 %v1541
    %5415 = vmatprep.subr.bf16.mxu0 0
    %5416 = vmatpush1.bf16.msra.mxu0 0
    %5417 = vmatprep.subr.bf16.mxu0 0
    %5418 = vmatpush1.bf16.msra.mxu0 0
    %5419 = vmatprep.subr.bf16.mxu0 0
    %5420 = vmatpush1.bf16.msra.mxu0 0
    %5421 = vmatprep.subr.bf16.mxu0 0
    %5422 = vmatpush1.bf16.msra.mxu0 0
    %5423 = vmatprep.subr.bf16.mxu0 0
    %5424 = vmatpush1.bf16.msra.mxu0 0
    %5425 = vmatprep.subr.bf16.mxu0 0
    %5426 = vmatpush1.bf16.msra.mxu0 0
    %5427 = vmatprep.subr.bf16.mxu0 0
    %5428 = vmatpush1.bf16.msra.mxu0 0
    %5429 = vmatprep.subr.bf16.mxu0 0
    %5430 = vmatpush1.bf16.msra.mxu0 0
    %5431 = vmatprep.mubr.bf16.mxu0 0
    %5432 = vmatmul.mubr.bf16.gmra.mrb[0].mxu0 %v5356
    %v5433 = vpop.f32.mrb[0].mxu0
    %v5434 = vadd.f32 %v5320, %v5433
    %v5435 = vpop.f32.mrb[0].mxu0
    %v5436 = vadd.f32 %v5322, %v5435
    %v5437 = vpop.f32.mrb[0].mxu0
    %v5438 = vpop.f32.mrb[0].mxu0
    %5439 = vdwg.mxu0
    %v5440 = vadd.f32 %v5393, %v1661
    %v5441 = vadd.f32 %v5395, %v1665
    %v5442 = vadd.f32 %v5434, %v1669
    %v5443 = vadd.f32 %v5436, %v1673
    %v5444 = vxor.u32 %v5440, 2147483648
    %v5445 = vmul.f32 %v5444, 1.442695
    %v5446 = vpow.pop %v5445
    %v5447 = vadd.f32 %v5446, 1.0
    %v5448 = vrcp.pop %v5447
    %v5449 = vmul.f32 1.0, %v5448
    %v5450 = vxor.u32 %v5441, 2147483648
    %v5451 = vmul.f32 %v5450, 1.442695
    %v5452 = vpow.pop %v5451
    %v5453 = vadd.f32 %v5452, 1.0
    %v5454 = vrcp.pop %v5453
    %v5455 = vmul.f32 1.0, %v5454
    %v5456 = vtanh.pop %v5442
    %v5457 = vxor.u32 %v5443, 2147483648
    %v5458 = vmul.f32 %v5457, 1.442695
    %v5459 = vpow.pop %v5458
    %v5460 = vadd.f32 %v5459, 1.0
    %v5461 = vrcp.pop %v5460
    %v5462 = vmul.f32 1.0, %v5461
    %v5463 = vmul.f32 %v5455, %v4838
    %v5464 = vmul.f32 %v5449, %v5456
    %v5465 = vadd.f32 %v5463, %v5464
    %v5466 = vtanh.pop %v5465
    %v5467 = vmul.f32 %v5462, %v5466
    %5468 = vmatprep.subr.bf16.mxu0 %v693
    %5469 = vmatpush1.bf16.msra.mxu0 %v692
    %5470 = vmatprep.subr.bf16.mxu0 %v697
    %5471 = vmatpush1.bf16.msra.mxu0 %v696
    %5472 = vmatprep.subr.bf16.mxu0 %v701
    %5473 = vmatpush1.bf16.msra.mxu0 %v700
    %5474 = vmatprep.subr.bf16.mxu0 %v705
    %5475 = vmatpush1.bf16.msra.mxu0 %v704
    %5476 = vmatprep.subr.bf16.mxu0 %v709
    %5477 = vmatpush1.bf16.msra.mxu0 %v708
    %5478 = vmatprep.subr.bf16.mxu0 %v713
    %5479 = vmatpush1.bf16.msra.mxu0 %v712
    %5480 = vmatprep.subr.bf16.mxu0 %v717
    %5481 = vmatpush1.bf16.msra.mxu0 %v716
    %5482 = vmatprep.subr.bf16.mxu0 %v721
    %5483 = vmatpush1.bf16.msra.mxu0 %v720
    %5484 = vmatprep.subr.bf16.mxu0 0
    %5485 = vmatpush1.bf16.msra.mxu0 0
    %5486 = vmatprep.subr.bf16.mxu0 0
    %5487 = vmatpush1.bf16.msra.mxu0 0
    %5488 = vmatprep.subr.bf16.mxu0 0
    %5489 = vmatpush1.bf16.msra.mxu0 0
    %5490 = vmatprep.subr.bf16.mxu0 0
    %5491 = vmatpush1.bf16.msra.mxu0 0
    %5492 = vmatprep.subr.bf16.mxu0 0
    %5493 = vmatpush1.bf16.msra.mxu0 0
    %5494 = vmatprep.subr.bf16.mxu0 0
    %5495 = vmatpush1.bf16.msra.mxu0 0
    %5496 = vmatprep.subr.bf16.mxu0 0
    %5497 = vmatpush1.bf16.msra.mxu0 0
    %5498 = vmatprep.subr.bf16.mxu0 0
    %5499 = vmatpush1.bf16.msra.mxu0 0
    %5500 = vmatprep.mubr.bf16.mxu0 0
    %5501 = vmatmul.mubr.bf16.gmra.mrb[0].mxu0 %v5356
    %v5502 = vpop.f32.mrb[0].mxu0
    %v5503 = vadd.f32 0.0, %v5502
    %v5504 = vpop.f32.mrb[0].mxu0
    %v5505 = vadd.f32 0.0, %v5504
    %v5506 = vpop.f32.mrb[0].mxu0
    %v5507 = vpop.f32.mrb[0].mxu0
    %5508 = vdwg.mxu0
    %5509 = vmatprep.subr.bf16.mxu0 %v695
    %5510 = vmatpush1.bf16.msra.mxu0 %v694
    %5511 = vmatprep.subr.bf16.mxu0 %v699
    %5512 = vmatpush1.bf16.msra.mxu0 %v698
    %5513 = vmatprep.subr.bf16.mxu0 %v703
    %5514 = vmatpush1.bf16.msra.mxu0 %v702
    %5515 = vmatprep.subr.bf16.mxu0 %v707
    %5516 = vmatpush1.bf16.msra.mxu0 %v706
    %5517 = vmatprep.subr.bf16.mxu0 %v711
    %5518 = vmatpush1.bf16.msra.mxu0 %v710
    %5519 = vmatprep.subr.bf16.mxu0 %v715
    %5520 = vmatpush1.bf16.msra.mxu0 %v714
    %5521 = vmatprep.subr.bf16.mxu0 %v719
    %5522 = vmatpush1.bf16.msra.mxu0 %v718
    %5523 = vmatprep.subr.bf16.mxu0 %v723
    %5524 = vmatpush1.bf16.msra.mxu0 %v722
    %5525 = vmatprep.subr.bf16.mxu0 0
    %5526 = vmatpush1.bf16.msra.mxu0 0
    %5527 = vmatprep.subr.bf16.mxu0 0
    %5528 = vmatpush1.bf16.msra.mxu0 0
    %5529 = vmatprep.subr.bf16.mxu0 0
    %5530 = vmatpush1.bf16.msra.mxu0 0
    %5531 = vmatprep.subr.bf16.mxu0 0
    %5532 = vmatpush1.bf16.msra.mxu0 0
    %5533 = vmatprep.subr.bf16.mxu0 0
    %5534 = vmatpush1.bf16.msra.mxu0 0
    %5535 = vmatprep.subr.bf16.mxu0 0
    %5536 = vmatpush1.bf16.msra.mxu0 0
    %5537 = vmatprep.subr.bf16.mxu0 0
    %5538 = vmatpush1.bf16.msra.mxu0 0
    %5539 = vmatprep.subr.bf16.mxu0 0
    %5540 = vmatpush1.bf16.msra.mxu0 0
    %5541 = vmatprep.mubr.bf16.mxu0 0
    %5542 = vmatmul.mubr.bf16.gmra.mrb[0].mxu0 %v5356
    %v5543 = vpop.f32.mrb[0].mxu0
    %v5544 = vadd.f32 0.0, %v5543
    %v5545 = vpop.f32.mrb[0].mxu0
    %v5546 = vadd.f32 0.0, %v5545
    %v5547 = vpop.f32.mrb[0].mxu0
    %v5548 = vpop.f32.mrb[0].mxu0
    %5549 = vdwg.mxu0
    %v5554 = vrot.slane %v5503, 1
    %v5555 = vrot.slane %v5505, 1
    %v5556 = vrot.slane %v5544, 1
    %v5557 = vrot.slane %v5546, 1
    %v5558 = vrot.slane %v5503, 2
    %v5559 = vrot.slane %v5505, 2
    %v5560 = vrot.slane %v5544, 2
    %v5561 = vrot.slane %v5546, 2
    %v5562 = vrot.slane %v5503, 3
    %v5563 = vrot.slane %v5505, 3
    %v5564 = vrot.slane %v5544, 3
    %v5565 = vrot.slane %v5546, 3
    %v5566 = vrot.slane %v5503, 4
    %v5567 = vrot.slane %v5505, 4
    %v5568 = vrot.slane %v5544, 4
    %v5569 = vrot.slane %v5546, 4
    %v5570 = vrot.slane %v5503, 5
    %v5571 = vrot.slane %v5505, 5
    %v5572 = vrot.slane %v5544, 5
    %v5573 = vrot.slane %v5546, 5
    %v5574 = vrot.slane %v5503, 6
    %v5575 = vrot.slane %v5505, 6
    %v5576 = vrot.slane %v5544, 6
    %v5577 = vrot.slane %v5546, 6
    %v5578 = vrot.slane %v5503, 7
    %v5579 = vrot.slane %v5505, 7
    %v5580 = vrot.slane %v5544, 7
    %v5581 = vrot.slane %v5546, 7
    %v5614 = vadd.f32 %v388, %v5554
    %v5615 = vadd.f32 %v390, %v5555
    %v5616 = vadd.f32 %v461, %v5556
    %v5617 = vadd.f32 %v463, %v5557
    %v5618 = vadd.f32 %v392, %v5558
    %v5619 = vadd.f32 %v394, %v5559
    %v5620 = vadd.f32 %v465, %v5560
    %v5621 = vadd.f32 %v467, %v5561
    %v5622 = vadd.f32 %v398, %v5562
    %v5623 = vadd.f32 %v400, %v5563
    %v5624 = vadd.f32 %v471, %v5564
    %v5625 = vadd.f32 %v473, %v5565
    %v5626 = vadd.f32 %v402, %v5566
    %v5627 = vadd.f32 %v404, %v5567
    %v5628 = vadd.f32 %v475, %v5568
    %v5629 = vadd.f32 %v477, %v5569
    %v5630 = vadd.f32 %v408, %v5570
    %v5631 = vadd.f32 %v410, %v5571
    %v5632 = vadd.f32 %v481, %v5572
    %v5633 = vadd.f32 %v483, %v5573
    %v5634 = vadd.f32 %v412, %v5574
    %v5635 = vadd.f32 %v414, %v5575
    %v5636 = vadd.f32 %v485, %v5576
    %v5637 = vadd.f32 %v487, %v5577
    %v5638 = vadd.f32 %v418, %v5578
    %v5639 = vadd.f32 %v420, %v5579
    %v5640 = vadd.f32 %v491, %v5580
    %v5641 = vadd.f32 %v493, %v5581
    %v5642 = vadd.f32 %v422, %v5503
    %v5643 = vadd.f32 %v424, %v5505
    %v5644 = vadd.f32 %v495, %v5544
    %v5645 = vadd.f32 %v497, %v5546
    %v5646 = vxor.u32 %v5614, 2147483648
    %v5647 = vxor.u32 %v5618, 2147483648
    %v5648 = vxor.u32 %v5622, 2147483648
    %v5649 = vxor.u32 %v5626, 2147483648
    %v5650 = vxor.u32 %v5630, 2147483648
    %v5651 = vxor.u32 %v5634, 2147483648
    %v5652 = vxor.u32 %v5638, 2147483648
    %v5653 = vxor.u32 %v5642, 2147483648
    %v5654 = vmul.f32 %v5646, 1.442695
    %v5655 = vpow.pop %v5654
    %v5656 = vmul.f32 %v5647, 1.442695
    %v5657 = vpow.pop %v5656
    %v5658 = vmul.f32 %v5648, 1.442695
    %v5659 = vpow.pop %v5658
    %v5660 = vmul.f32 %v5649, 1.442695
    %v5661 = vpow.pop %v5660
    %v5662 = vmul.f32 %v5650, 1.442695
    %v5663 = vpow.pop %v5662
    %v5664 = vmul.f32 %v5651, 1.442695
    %v5665 = vpow.pop %v5664
    %v5666 = vmul.f32 %v5652, 1.442695
    %v5667 = vpow.pop %v5666
    %v5668 = vmul.f32 %v5653, 1.442695
    %v5669 = vpow.pop %v5668
    %v5670 = vadd.f32 %v5655, 1.0
    %v5671 = vadd.f32 %v5657, 1.0
    %v5672 = vadd.f32 %v5659, 1.0
    %v5673 = vadd.f32 %v5661, 1.0
    %v5674 = vadd.f32 %v5663, 1.0
    %v5675 = vadd.f32 %v5665, 1.0
    %v5676 = vadd.f32 %v5667, 1.0
    %v5677 = vadd.f32 %v5669, 1.0
    %v5678 = vrcp.pop %v5670
    %v5679 = vmul.f32 1.0, %v5678
    %v5680 = vrcp.pop %v5671
    %v5681 = vmul.f32 1.0, %v5680
    %v5682 = vrcp.pop %v5672
    %v5683 = vmul.f32 1.0, %v5682
    %v5684 = vrcp.pop %v5673
    %v5685 = vmul.f32 1.0, %v5684
    %v5686 = vrcp.pop %v5674
    %v5687 = vmul.f32 1.0, %v5686
    %v5688 = vrcp.pop %v5675
    %v5689 = vmul.f32 1.0, %v5688
    %v5690 = vrcp.pop %v5676
    %v5691 = vmul.f32 1.0, %v5690
    %v5692 = vrcp.pop %v5677
    %v5693 = vmul.f32 1.0, %v5692
    %v5694 = vxor.u32 %v5615, 2147483648
    %v5695 = vxor.u32 %v5619, 2147483648
    %v5696 = vxor.u32 %v5623, 2147483648
    %v5697 = vxor.u32 %v5627, 2147483648
    %v5698 = vxor.u32 %v5631, 2147483648
    %v5699 = vxor.u32 %v5635, 2147483648
    %v5700 = vxor.u32 %v5639, 2147483648
    %v5701 = vxor.u32 %v5643, 2147483648
    %v5702 = vmul.f32 %v5694, 1.442695
    %v5703 = vpow.pop %v5702
    %v5704 = vmul.f32 %v5695, 1.442695
    %v5705 = vpow.pop %v5704
    %v5706 = vmul.f32 %v5696, 1.442695
    %v5707 = vpow.pop %v5706
    %v5708 = vmul.f32 %v5697, 1.442695
    %v5709 = vpow.pop %v5708
    %v5710 = vmul.f32 %v5698, 1.442695
    %v5711 = vpow.pop %v5710
    %v5712 = vmul.f32 %v5699, 1.442695
    %v5713 = vpow.pop %v5712
    %v5714 = vmul.f32 %v5700, 1.442695
    %v5715 = vpow.pop %v5714
    %v5716 = vmul.f32 %v5701, 1.442695
    %v5717 = vpow.pop %v5716
    %v5718 = vadd.f32 %v5703, 1.0
    %v5719 = vadd.f32 %v5705, 1.0
    %v5720 = vadd.f32 %v5707, 1.0
    %v5721 = vadd.f32 %v5709, 1.0
    %v5722 = vadd.f32 %v5711, 1.0
    %v5723 = vadd.f32 %v5713, 1.0
    %v5724 = vadd.f32 %v5715, 1.0
    %v5725 = vadd.f32 %v5717, 1.0
    %v5726 = vrcp.pop %v5718
    %v5727 = vmul.f32 1.0, %v5726
    %v5728 = vrcp.pop %v5719
    %v5729 = vmul.f32 1.0, %v5728
    %v5730 = vrcp.pop %v5720
    %v5731 = vmul.f32 1.0, %v5730
    %v5732 = vrcp.pop %v5721
    %v5733 = vmul.f32 1.0, %v5732
    %v5734 = vrcp.pop %v5722
    %v5735 = vmul.f32 1.0, %v5734
    %v5736 = vrcp.pop %v5723
    %v5737 = vmul.f32 1.0, %v5736
    %v5738 = vrcp.pop %v5724
    %v5739 = vmul.f32 1.0, %v5738
    %v5740 = vrcp.pop %v5725
    %v5741 = vmul.f32 1.0, %v5740
    %v5742 = vtanh.pop %v5616
    %v5743 = vtanh.pop %v5620
    %v5744 = vtanh.pop %v5624
    %v5745 = vtanh.pop %v5628
    %v5746 = vtanh.pop %v5632
    %v5747 = vtanh.pop %v5636
    %v5748 = vtanh.pop %v5640
    %v5749 = vtanh.pop %v5644
    %v5750 = vxor.u32 %v5617, 2147483648
    %v5751 = vxor.u32 %v5621, 2147483648
    %v5752 = vxor.u32 %v5625, 2147483648
    %v5753 = vxor.u32 %v5629, 2147483648
    %v5754 = vxor.u32 %v5633, 2147483648
    %v5755 = vxor.u32 %v5637, 2147483648
    %v5756 = vxor.u32 %v5641, 2147483648
    %v5757 = vxor.u32 %v5645, 2147483648
    %v5758 = vmul.f32 %v5750, 1.442695
    %v5759 = vpow.pop %v5758
    %v5760 = vmul.f32 %v5751, 1.442695
    %v5761 = vpow.pop %v5760
    %v5762 = vmul.f32 %v5752, 1.442695
    %v5763 = vpow.pop %v5762
    %v5764 = vmul.f32 %v5753, 1.442695
    %v5765 = vpow.pop %v5764
    %v5766 = vmul.f32 %v5754, 1.442695
    %v5767 = vpow.pop %v5766
    %v5768 = vmul.f32 %v5755, 1.442695
    %v5769 = vpow.pop %v5768
    %v5770 = vmul.f32 %v5756, 1.442695
    %v5771 = vpow.pop %v5770
    %v5772 = vmul.f32 %v5757, 1.442695
    %v5773 = vpow.pop %v5772
    %v5774 = vadd.f32 %v5759, 1.0
    %v5775 = vadd.f32 %v5761, 1.0
    %v5776 = vadd.f32 %v5763, 1.0
    %v5777 = vadd.f32 %v5765, 1.0
    %v5778 = vadd.f32 %v5767, 1.0
    %v5779 = vadd.f32 %v5769, 1.0
    %v5780 = vadd.f32 %v5771, 1.0
    %v5781 = vadd.f32 %v5773, 1.0
    %v5782 = vrcp.pop %v5774
    %v5783 = vmul.f32 1.0, %v5782
    %v5784 = vrcp.pop %v5775
    %v5785 = vmul.f32 1.0, %v5784
    %v5786 = vrcp.pop %v5776
    %v5787 = vmul.f32 1.0, %v5786
    %v5788 = vrcp.pop %v5777
    %v5789 = vmul.f32 1.0, %v5788
    %v5790 = vrcp.pop %v5778
    %v5791 = vmul.f32 1.0, %v5790
    %v5792 = vrcp.pop %v5779
    %v5793 = vmul.f32 1.0, %v5792
    %v5794 = vrcp.pop %v5780
    %v5795 = vmul.f32 1.0, %v5794
    %v5796 = vrcp.pop %v5781
    %v5797 = vmul.f32 1.0, %v5796
    %v5806 = vrot.slane %v5211, 7
    %v5807 = vrot.slane %v5212, 7
    %v5808 = vrot.slane %v5213, 7
    %v5809 = vrot.slane %v5214, 7
    %v5810 = vrot.slane %v5215, 7
    %v5811 = vrot.slane %v5216, 7
    %v5812 = vrot.slane %v5217, 7
    %v5813 = vrot.slane %v5218, 7
    %v5822 = vmul.f32 %v5727, %v5806
    %v5823 = vmul.f32 %v5729, %v5807
    %v5824 = vmul.f32 %v5731, %v5808
    %v5825 = vmul.f32 %v5733, %v5809
    %v5826 = vmul.f32 %v5735, %v5810
    %v5827 = vmul.f32 %v5737, %v5811
    %v5828 = vmul.f32 %v5739, %v5812
    %v5829 = vmul.f32 %v5741, %v5813
    %v5830 = vmul.f32 %v5679, %v5742
    %v5831 = vmul.f32 %v5681, %v5743
    %v5832 = vmul.f32 %v5683, %v5744
    %v5833 = vmul.f32 %v5685, %v5745
    %v5834 = vmul.f32 %v5687, %v5746
    %v5835 = vmul.f32 %v5689, %v5747
    %v5836 = vmul.f32 %v5691, %v5748
    %v5837 = vmul.f32 %v5693, %v5749
    %v5838 = vadd.f32 %v5822, %v5830
    %v5839 = vadd.f32 %v5823, %v5831
    %v5840 = vadd.f32 %v5824, %v5832
    %v5841 = vadd.f32 %v5825, %v5833
    %v5842 = vadd.f32 %v5826, %v5834
    %v5843 = vadd.f32 %v5827, %v5835
    %v5844 = vadd.f32 %v5828, %v5836
    %v5845 = vadd.f32 %v5829, %v5837
    %v5846 = vtanh.pop %v5838
    %v5847 = vtanh.pop %v5839
    %v5848 = vtanh.pop %v5840
    %v5849 = vtanh.pop %v5841
    %v5850 = vtanh.pop %v5842
    %v5851 = vtanh.pop %v5843
    %v5852 = vtanh.pop %v5844
    %v5853 = vtanh.pop %v5845
    %v5854 = vmul.f32 %v5783, %v5846
    %v5855 = vmul.f32 %v5785, %v5847
    %v5856 = vmul.f32 %v5787, %v5848
    %v5857 = vmul.f32 %v5789, %v5849
    %v5858 = vmul.f32 %v5791, %v5850
    %v5859 = vmul.f32 %v5793, %v5851
    %v5860 = vmul.f32 %v5795, %v5852
    %v5861 = vmul.f32 %v5797, %v5853
    %v5862 = vpack.c.bf16 %v5854, %v5854
    %v5863 = vpack.c.bf16 %v5855, %v5855
    %v5864 = vpack.c.bf16 %v5856, %v5856
    %v5865 = vpack.c.bf16 %v5857, %v5857
    %v5866 = vpack.c.bf16 %v5858, %v5858
    %v5867 = vpack.c.bf16 %v5859, %v5859
    %v5868 = vpack.c.bf16 %v5860, %v5860
    %v5869 = vpack.c.bf16 %v5861, %v5861
    %v5870 = vpack.c.bf16 %v5467, %v5467
    %5871 = vmatprep.subr.bf16.mxu0 %v1231
    %5872 = vmatpush1.bf16.msra.mxu0 %v1230
    %5873 = vmatprep.subr.bf16.mxu0 %v1235
    %5874 = vmatpush1.bf16.msra.mxu0 %v1234
    %5875 = vmatprep.subr.bf16.mxu0 %v1239
    %5876 = vmatpush1.bf16.msra.mxu0 %v1238
    %5877 = vmatprep.subr.bf16.mxu0 %v1243
    %5878 = vmatpush1.bf16.msra.mxu0 %v1242
    %5879 = vmatprep.subr.bf16.mxu0 %v1247
    %5880 = vmatpush1.bf16.msra.mxu0 %v1246
    %5881 = vmatprep.subr.bf16.mxu0 %v1251
    %5882 = vmatpush1.bf16.msra.mxu0 %v1250
    %5883 = vmatprep.subr.bf16.mxu0 %v1255
    %5884 = vmatpush1.bf16.msra.mxu0 %v1254
    %5885 = vmatprep.subr.bf16.mxu0 %v1259
    %5886 = vmatpush1.bf16.msra.mxu0 %v1258
    %5887 = vmatprep.subr.bf16.mxu0 0
    %5888 = vmatpush1.bf16.msra.mxu0 0
    %5889 = vmatprep.subr.bf16.mxu0 0
    %5890 = vmatpush1.bf16.msra.mxu0 0
    %5891 = vmatprep.subr.bf16.mxu0 0
    %5892 = vmatpush1.bf16.msra.mxu0 0
    %5893 = vmatprep.subr.bf16.mxu0 0
    %5894 = vmatpush1.bf16.msra.mxu0 0
    %5895 = vmatprep.subr.bf16.mxu0 0
    %5896 = vmatpush1.bf16.msra.mxu0 0
    %5897 = vmatprep.subr.bf16.mxu0 0
    %5898 = vmatpush1.bf16.msra.mxu0 0
    %5899 = vmatprep.subr.bf16.mxu0 0
    %5900 = vmatpush1.bf16.msra.mxu0 0
    %5901 = vmatprep.subr.bf16.mxu0 0
    %5902 = vmatpush1.bf16.msra.mxu0 0
    %5903 = vmatprep.mubr.bf16.mxu0 0
    %5904 = vmatmul.mubr.bf16.gmra.mrb[0].mxu0 %v5870
    %v5905 = vpop.f32.mrb[0].mxu0
    %v5906 = vadd.f32 0.0, %v5905
    %v5907 = vpop.f32.mrb[0].mxu0
    %v5908 = vadd.f32 0.0, %v5907
    %v5909 = vpop.f32.mrb[0].mxu0
    %v5910 = vpop.f32.mrb[0].mxu0
    %5911 = vdwg.mxu0
    %5912 = vmatprep.subr.bf16.mxu0 %v1233
    %5913 = vmatpush1.bf16.msra.mxu0 %v1232
    %5914 = vmatprep.subr.bf16.mxu0 %v1237
    %5915 = vmatpush1.bf16.msra.mxu0 %v1236
    %5916 = vmatprep.subr.bf16.mxu0 %v1241
    %5917 = vmatpush1.bf16.msra.mxu0 %v1240
    %5918 = vmatprep.subr.bf16.mxu0 %v1245
    %5919 = vmatpush1.bf16.msra.mxu0 %v1244
    %5920 = vmatprep.subr.bf16.mxu0 %v1249
    %5921 = vmatpush1.bf16.msra.mxu0 %v1248
    %5922 = vmatprep.subr.bf16.mxu0 %v1253
    %5923 = vmatpush1.bf16.msra.mxu0 %v1252
    %5924 = vmatprep.subr.bf16.mxu0 %v1257
    %5925 = vmatpush1.bf16.msra.mxu0 %v1256
    %5926 = vmatprep.subr.bf16.mxu0 %v1261
    %5927 = vmatpush1.bf16.msra.mxu0 %v1260
    %5928 = vmatprep.subr.bf16.mxu0 0
    %5929 = vmatpush1.bf16.msra.mxu0 0
    %5930 = vmatprep.subr.bf16.mxu0 0
    %5931 = vmatpush1.bf16.msra.mxu0 0
    %5932 = vmatprep.subr.bf16.mxu0 0
    %5933 = vmatpush1.bf16.msra.mxu0 0
    %5934 = vmatprep.subr.bf16.mxu0 0
    %5935 = vmatpush1.bf16.msra.mxu0 0
    %5936 = vmatprep.subr.bf16.mxu0 0
    %5937 = vmatpush1.bf16.msra.mxu0 0
    %5938 = vmatprep.subr.bf16.mxu0 0
    %5939 = vmatpush1.bf16.msra.mxu0 0
    %5940 = vmatprep.subr.bf16.mxu0 0
    %5941 = vmatpush1.bf16.msra.mxu0 0
    %5942 = vmatprep.subr.bf16.mxu0 0
    %5943 = vmatpush1.bf16.msra.mxu0 0
    %5944 = vmatprep.mubr.bf16.mxu0 0
    %5945 = vmatmul.mubr.bf16.gmra.mrb[0].mxu0 %v5870
    %v5946 = vpop.f32.mrb[0].mxu0
    %v5947 = vadd.f32 0.0, %v5946
    %v5948 = vpop.f32.mrb[0].mxu0
    %v5949 = vadd.f32 0.0, %v5948
    %v5950 = vpop.f32.mrb[0].mxu0
    %v5951 = vpop.f32.mrb[0].mxu0
    %5952 = vdwg.mxu0
    %v5961 = vunpack.c.l.b16 %v5862
    %v5962 = vunpack.c.l.b16 %v5863
    %v5963 = vunpack.c.l.b16 %v5864
    %v5964 = vunpack.c.l.b16 %v5865
    %v5965 = vunpack.c.l.b16 %v5866
    %v5966 = vunpack.c.l.b16 %v5867
    %v5967 = vunpack.c.l.b16 %v5868
    %v5968 = vunpack.c.l.b16 %v5869
    %v5969 = vrot.slane %v5961, 7
    %v5970 = vrot.slane %v5962, 6
    %v5971 = vsel %vm1393, %v5970, %v5969
    %v5972 = vrot.slane %v5963, 5
    %v5973 = vsel %vm1396, %v5972, %v5971
    %v5974 = vrot.slane %v5964, 4
    %v5975 = vsel %vm1399, %v5974, %v5973
    %v5976 = vrot.slane %v5965, 3
    %v5977 = vsel %vm1402, %v5976, %v5975
    %v5978 = vrot.slane %v5966, 2
    %v5979 = vsel %vm1405, %v5978, %v5977
    %v5980 = vrot.slane %v5967, 1
    %v5981 = vsel %vm1408, %v5980, %v5979
    %v5982 = vsel %vm1411, %v5968, %v5981
    %v5983 = vpack.c.b16 %v5982, %v5982
    %5985 = vmatprep.subr.bf16.mxu0 %v1512
    %5986 = vmatpush1.bf16.msra.mxu0 %v1511
    %5987 = vmatprep.subr.bf16.mxu0 %v1516
    %5988 = vmatpush1.bf16.msra.mxu0 %v1515
    %5989 = vmatprep.subr.bf16.mxu0 %v1520
    %5990 = vmatpush1.bf16.msra.mxu0 %v1519
    %5991 = vmatprep.subr.bf16.mxu0 %v1524
    %5992 = vmatpush1.bf16.msra.mxu0 %v1523
    %5993 = vmatprep.subr.bf16.mxu0 %v1528
    %5994 = vmatpush1.bf16.msra.mxu0 %v1527
    %5995 = vmatprep.subr.bf16.mxu0 %v1532
    %5996 = vmatpush1.bf16.msra.mxu0 %v1531
    %5997 = vmatprep.subr.bf16.mxu0 %v1536
    %5998 = vmatpush1.bf16.msra.mxu0 %v1535
    %5999 = vmatprep.subr.bf16.mxu0 %v1540
    %6000 = vmatpush1.bf16.msra.mxu0 %v1539
    %6001 = vmatprep.subr.bf16.mxu0 0
    %6002 = vmatpush1.bf16.msra.mxu0 0
    %6003 = vmatprep.subr.bf16.mxu0 0
    %6004 = vmatpush1.bf16.msra.mxu0 0
    %6005 = vmatprep.subr.bf16.mxu0 0
    %6006 = vmatpush1.bf16.msra.mxu0 0
    %6007 = vmatprep.subr.bf16.mxu0 0
    %6008 = vmatpush1.bf16.msra.mxu0 0
    %6009 = vmatprep.subr.bf16.mxu0 0
    %6010 = vmatpush1.bf16.msra.mxu0 0
    %6011 = vmatprep.subr.bf16.mxu0 0
    %6012 = vmatpush1.bf16.msra.mxu0 0
    %6013 = vmatprep.subr.bf16.mxu0 0
    %6014 = vmatpush1.bf16.msra.mxu0 0
    %6015 = vmatprep.subr.bf16.mxu0 0
    %6016 = vmatpush1.bf16.msra.mxu0 0
    %6017 = vmatprep.mubr.bf16.mxu0 0
    %6018 = vmatmul.mubr.bf16.gmra.mrb[0].mxu0 %v5983
    %v6019 = vpop.f32.mrb[0].mxu0
    %v6020 = vadd.f32 %v5906, %v6019
    %v6021 = vpop.f32.mrb[0].mxu0
    %v6022 = vadd.f32 %v5908, %v6021
    %v6023 = vpop.f32.mrb[0].mxu0
    %v6024 = vpop.f32.mrb[0].mxu0
    %6025 = vdwg.mxu0
    %6026 = vmatprep.subr.bf16.mxu0 %v1514
    %6027 = vmatpush1.bf16.msra.mxu0 %v1513
    %6028 = vmatprep.subr.bf16.mxu0 %v1518
    %6029 = vmatpush1.bf16.msra.mxu0 %v1517
    %6030 = vmatprep.subr.bf16.mxu0 %v1522
    %6031 = vmatpush1.bf16.msra.mxu0 %v1521
    %6032 = vmatprep.subr.bf16.mxu0 %v1526
    %6033 = vmatpush1.bf16.msra.mxu0 %v1525
    %6034 = vmatprep.subr.bf16.mxu0 %v1530
    %6035 = vmatpush1.bf16.msra.mxu0 %v1529
    %6036 = vmatprep.subr.bf16.mxu0 %v1534
    %6037 = vmatpush1.bf16.msra.mxu0 %v1533
    %6038 = vmatprep.subr.bf16.mxu0 %v1538
    %6039 = vmatpush1.bf16.msra.mxu0 %v1537
    %6040 = vmatprep.subr.bf16.mxu0 %v1542
    %6041 = vmatpush1.bf16.msra.mxu0 %v1541
    %6042 = vmatprep.subr.bf16.mxu0 0
    %6043 = vmatpush1.bf16.msra.mxu0 0
    %6044 = vmatprep.subr.bf16.mxu0 0
    %6045 = vmatpush1.bf16.msra.mxu0 0
    %6046 = vmatprep.subr.bf16.mxu0 0
    %6047 = vmatpush1.bf16.msra.mxu0 0
    %6048 = vmatprep.subr.bf16.mxu0 0
    %6049 = vmatpush1.bf16.msra.mxu0 0
    %6050 = vmatprep.subr.bf16.mxu0 0
    %6051 = vmatpush1.bf16.msra.mxu0 0
    %6052 = vmatprep.subr.bf16.mxu0 0
    %6053 = vmatpush1.bf16.msra.mxu0 0
    %6054 = vmatprep.subr.bf16.mxu0 0
    %6055 = vmatpush1.bf16.msra.mxu0 0
    %6056 = vmatprep.subr.bf16.mxu0 0
    %6057 = vmatpush1.bf16.msra.mxu0 0
    %6058 = vmatprep.mubr.bf16.mxu0 0
    %6059 = vmatmul.mubr.bf16.gmra.mrb[0].mxu0 %v5983
    %v6060 = vpop.f32.mrb[0].mxu0
    %v6061 = vadd.f32 %v5947, %v6060
    %v6062 = vpop.f32.mrb[0].mxu0
    %v6063 = vadd.f32 %v5949, %v6062
    %v6064 = vpop.f32.mrb[0].mxu0
    %v6065 = vpop.f32.mrb[0].mxu0
    %6066 = vdwg.mxu0
    %v6067 = vadd.f32 %v6020, %v1661
    %v6068 = vadd.f32 %v6022, %v1665
    %v6069 = vadd.f32 %v6061, %v1669
    %v6070 = vadd.f32 %v6063, %v1673
    %v6071 = vxor.u32 %v6067, 2147483648
    %v6072 = vmul.f32 %v6071, 1.442695
    %v6073 = vpow.pop %v6072
    %v6074 = vadd.f32 %v6073, 1.0
    %v6075 = vrcp.pop %v6074
    %v6076 = vmul.f32 1.0, %v6075
    %v6077 = vxor.u32 %v6068, 2147483648
    %v6078 = vmul.f32 %v6077, 1.442695
    %v6079 = vpow.pop %v6078
    %v6080 = vadd.f32 %v6079, 1.0
    %v6081 = vrcp.pop %v6080
    %v6082 = vmul.f32 1.0, %v6081
    %v6083 = vtanh.pop %v6069
    %v6084 = vxor.u32 %v6070, 2147483648
    %v6085 = vmul.f32 %v6084, 1.442695
    %v6086 = vpow.pop %v6085
    %v6087 = vadd.f32 %v6086, 1.0
    %v6088 = vrcp.pop %v6087
    %v6089 = vmul.f32 1.0, %v6088
    %v6090 = vmul.f32 %v6082, %v5465
    %v6091 = vmul.f32 %v6076, %v6083
    %v6092 = vadd.f32 %v6090, %v6091
    %v6093 = vtanh.pop %v6092
    %v6094 = vmul.f32 %v6089, %v6093
    %v6095 = vld [vmem:[#allocation13] sm:$0xff]
    %v6096 = vld [vmem:[#allocation13 + $0x8] sm:$0xff]
    %v6097 = vld [vmem:[#allocation13 + $0x10] sm:$0xff]
    %v6098 = vld [vmem:[#allocation13 + $0x18] sm:$0xff]
    %v6099 = vld [vmem:[#allocation13 + $0x20] sm:$0xff]
    %v6100 = vld [vmem:[#allocation13 + $0x28] sm:$0xff]
    %v6101 = vld [vmem:[#allocation13 + $0x30] sm:$0xff]
    %v6102 = vld [vmem:[#allocation13 + $0x38] sm:$0xff]
    %v6103 = vld [vmem:[#allocation13 + $0x40] sm:$0xff]
    %v6104 = vld [vmem:[#allocation13 + $0x48] sm:$0xff]
    %v6105 = vld [vmem:[#allocation13 + $0x50] sm:$0xff]
    %v6106 = vld [vmem:[#allocation13 + $0x58] sm:$0xff]
    %v6107 = vld [vmem:[#allocation13 + $0x60] sm:$0xff]
    %v6108 = vld [vmem:[#allocation13 + $0x68] sm:$0xff]
    %v6109 = vld [vmem:[#allocation13 + $0x70] sm:$0xff]
    %v6110 = vld [vmem:[#allocation13 + $0x78] sm:$0xff]
    %v6111 = vld [vmem:[%s8] sm:$0x1]
    %v6113 = vlaneseq
    %v6114 = vshrl.u32 %v6113, 7
    %v6115 = vsub.s32 0, %v6114
    %v6116 = vrot.slane %v6111, %v6115
    %6118 = vmatprep.subr.mxu0 0.0
    %6119 = vmatpush1.msra.mxu0 %v6095
    %6120 = vmatprep.subr.mxu0 0.0
    %6121 = vmatpush1.msra.mxu0 %v6096
    %6122 = vmatprep.subr.mxu0 0.0
    %6123 = vmatpush1.msra.mxu0 %v6097
    %6124 = vmatprep.subr.mxu0 0.0
    %6125 = vmatpush1.msra.mxu0 %v6098
    %6126 = vmatprep.subr.mxu0 0.0
    %6127 = vmatpush1.msra.mxu0 %v6099
    %6128 = vmatprep.subr.mxu0 0.0
    %6129 = vmatpush1.msra.mxu0 %v6100
    %6130 = vmatprep.subr.mxu0 0.0
    %6131 = vmatpush1.msra.mxu0 %v6101
    %6132 = vmatprep.subr.mxu0 0.0
    %6133 = vmatpush1.msra.mxu0 %v6102
    %6134 = vmatprep.subr.mxu0 0.0
    %6135 = vmatpush1.msra.mxu0 %v6103
    %6136 = vmatprep.subr.mxu0 0.0
    %6137 = vmatpush1.msra.mxu0 %v6104
    %6138 = vmatprep.subr.mxu0 0.0
    %6139 = vmatpush1.msra.mxu0 %v6105
    %6140 = vmatprep.subr.mxu0 0.0
    %6141 = vmatpush1.msra.mxu0 %v6106
    %6142 = vmatprep.subr.mxu0 0.0
    %6143 = vmatpush1.msra.mxu0 %v6107
    %6144 = vmatprep.subr.mxu0 0.0
    %6145 = vmatpush1.msra.mxu0 %v6108
    %6146 = vmatprep.subr.mxu0 0.0
    %6147 = vmatpush1.msra.mxu0 %v6109
    %6148 = vmatprep.subr.mxu0 0.0
    %6149 = vmatpush1.msra.mxu0 %v6110
    %6150 = vmatprep.subr.mxu0 0.0
    %6151 = vmatpush1.msra.mxu0 0.0
    %6152 = vmatprep.subr.mxu0 0.0
    %6153 = vmatpush1.msra.mxu0 0.0
    %6154 = vmatprep.subr.mxu0 0.0
    %6155 = vmatpush1.msra.mxu0 0.0
    %6156 = vmatprep.subr.mxu0 0.0
    %6157 = vmatpush1.msra.mxu0 0.0
    %6158 = vmatprep.subr.mxu0 0.0
    %6159 = vmatpush1.msra.mxu0 0.0
    %6160 = vmatprep.subr.mxu0 0.0
    %6161 = vmatpush1.msra.mxu0 0.0
    %6162 = vmatprep.subr.mxu0 0.0
    %6163 = vmatpush1.msra.mxu0 0.0
    %6164 = vmatprep.subr.mxu0 0.0
    %6165 = vmatpush1.msra.mxu0 0.0
    %6166 = vmatprep.subr.mxu0 0.0
    %6167 = vmatpush1.msra.mxu0 0.0
    %6168 = vmatprep.subr.mxu0 0.0
    %6169 = vmatpush1.msra.mxu0 0.0
    %6170 = vmatprep.subr.mxu0 0.0
    %6171 = vmatpush1.msra.mxu0 0.0
    %6172 = vmatprep.subr.mxu0 0.0
    %6173 = vmatpush1.msra.mxu0 0.0
    %6174 = vmatprep.subr.mxu0 0.0
    %6175 = vmatpush1.msra.mxu0 0.0
    %6176 = vmatprep.subr.mxu0 0.0
    %6177 = vmatpush1.msra.mxu0 0.0
    %6178 = vmatprep.subr.mxu0 0.0
    %6179 = vmatpush1.msra.mxu0 0.0
    %6180 = vmatprep.subr.mxu0 0.0
    %6181 = vmatpush1.msra.mxu0 0.0
    %6182 = vmatprep.mubr.f32.mxu0 0.0
    %6183 = vmatmul.mubr.f32.gmra.mrb[0].mxu0 %v6094
    %v6184 = vpop.f32.mrb[0].mxu0
    %v6185 = vadd.f32 %v6116, %v6184
    %v6186 = vpop.f32.mrb[0].mxu0
    %6187 = vdwg.mxu0
    %6188 = vmax.xlane.f32.xlu0 %v6185
    %v6189 = vpop.xlane.xlu0 %6188
    %v6190 = vsub.f32 %v6185, %v6189
    %v6191 = vmul.f32 %v6190, 1.442695
    %v6192 = vpow.pop %v6191
    %6193 = vadd.xlane.f32.xlu0 %v6192
    %v6194 = vpop.xlane.xlu0 %6193
    %v6195 = vrcp.pop %v6194
    %v6196 = vmul.f32 %v6192, %v6195
    %6197 = vst [vmem:[#allocation14] sm:$0xff] %v6196
    // Predicated region
    $region66: #{lstm_classifier_forward.1} parent=1 // pred_check
      _
    $region67: #{lstm_classifier_forward.1} parent=1 // pred_check_branch
      %6199 = sbr.rel (0) target = $region69
    $region68: #{lstm_classifier_forward.1} parent=1 // pred_region
      %s6201 = ssub.s32 128, 128
      %6202 = vsyncadd [#allocation4], %s6201
      %s6204 = sshll.u32 [#allocation14], 4
      %s6205 = int_to_ptr.vmem [resolvable:$true] %s6204
      %6207 = dma.vmem_to_hbm [thread:$0]  %s6205, 128, %s9, [#allocation4]
    $region69: #{lstm_classifier_forward.1} parent=1 // pred_fallthru
      _
    // Predicated region
    $region70: #{lstm_classifier_forward.1} parent=1 // pred_check
      _
    $region71: #{lstm_classifier_forward.1} parent=1 // pred_check_branch
      %6209 = sbr.rel (0) target = $region73
    $region72: #{lstm_classifier_forward.1} parent=1 // pred_region
      %6210 = dma.done [#allocation4], 128
    $region73: #{lstm_classifier_forward.1} parent=1 // pred_fallthru
      _
    %6211 = vsyncpa [#allocation3], 1
    %6212 = vsyncpa [#allocation6], 1
    %6213 = vsyncpa [#allocation9], 1
    %6214 = vsyncpa [#allocation12], 1
    %6215 = vsyncpa [#allocation4], 1

</llo_original>
